<compile_context>
chip_gen: v7x
topology: tpu7x:2x2x1
jax: 0.10.0
libtpu: 0.0.40
codegen_flags: <defaults>
</compile_context>

<pallas_src>
import jax
import jax.numpy as jnp
from jax.experimental import pallas as pl
from jax.experimental.pallas import tpu as pltpu


def _round_up(v, m):
    return ((v + m - 1) // m) * m


# ----------------------------- fused Pallas kernel ---------------------------

def _make_fused_kernel(n, h, w):
    s_len = n * h * w
    pow2 = ((h & (h - 1)) == 0) and ((w & (w - 1)) == 0) and h > 0 and w > 0
    log2w = w.bit_length() - 1

    def kernel(x_ref,
               w1a, s1a, t1a, w1b, s1b, t1b, wsk, bsk,   # block 1 (+ Linear skip)
               w2a, s2a, t2a, w2b, s2b, t2b,             # block 2
               w3a, s3a, t3a, w3b, s3b, t3b,             # block 3
               wh, bh,                                    # 1x1 head
               o_ref):
        # ---- fold (N, Cpad, H*W) -> (Cpad, N*H*W): lane-concat per-image slabs
        #      (replaces the wrapper-side NCHW->NHWC transpose of the old code).
        a = jnp.concatenate([x_ref[i] for i in range(n)], axis=-1)

        # ---- hoisted spatial validity masks for the 9 conv taps (shared by all
        #      six convs); these implement the 1-pixel zero padding in-kernel.
        sidx = jax.lax.broadcasted_iota(jnp.int32, (1, s_len), 1)
        if pow2:
            xx = jnp.bitwise_and(sidx, w - 1)
            yy = jnp.bitwise_and(jnp.right_shift(sidx, log2w), h - 1)
        else:  # fallback (unused for the 16x16 test shape)
            xx = sidx % w
            yy = (sidx // w) % h
        masks = []
        for dy in range(3):
            for dx in range(3):
                oy, ox = dy - 1, dx - 1
                masks.append((yy + oy >= 0) & (yy + oy < h) &
                             (xx + ox >= 0) & (xx + ox < w))

        def conv3x3_bn_relu(act, w_ref, scale_ref, shift_ref):
            # act: (Cin, S).  One im2col matmul: (Cout, 9*Cin) @ (9*Cin, S).
            taps = []
            t = 0
            for dy in range(3):
                for dx in range(3):
                    oy, ox = dy - 1, dx - 1
                    if oy == 0 and ox == 0:
                        taps.append(act)
                    else:
                        delta = oy * w + ox
                        shifted = pltpu.roll(act, (-delta) % s_len, axis=1)
                        taps.append(jnp.where(masks[t], shifted, 0.0))
                    t += 1
            patches = jnp.concatenate(taps, axis=0)                 # (9*Cin, S)
            acc = jnp.dot(w_ref[...], patches,
                          preferred_element_type=jnp.float32)       # (Cout, S)
            # fused (folded) BatchNorm + ReLU epilogue
            return jnp.maximum(acc * scale_ref[...] + shift_ref[...], 0.0)

        # ---- block 1 (3 -> 16): channel-projection (Linear) skip, fused add
        z = conv3x3_bn_relu(a, w1a, s1a, t1a)
        z = conv3x3_bn_relu(z, w1b, s1b, t1b)
        a = z + (jnp.dot(wsk[...], a, preferred_element_type=jnp.float32)
                 + bsk[...])
        # ---- block 2 (16 -> 16): identity skip
        z = conv3x3_bn_relu(a, w2a, s2a, t2a)
        z = conv3x3_bn_relu(z, w2b, s2b, t2b)
        a = z + a
        # ---- block 3 (16 -> 16): identity skip
        z = conv3x3_bn_relu(a, w3a, s3a, t3a)
        z = conv3x3_bn_relu(z, w3b, s3b, t3b)
        a = z + a
        # ---- 1x1 conv head -> lane-dense (1, N*H*W) output
        y = jnp.dot(wh[...], a, preferred_element_type=jnp.float32) + bh[...]
        o_ref[...] = y.astype(o_ref.dtype)

    return kernel


# ------------------------------ JAX wrappers ---------------------------------

def pack_params(params):
    """Flatten canonical (PyTorch-layout) params into the fused-kernel operands.

    Conv weights become (Cout, KH*KW*Cin) matching the kernel's im2col row
    order (tap-major, channel-minor).  Block-1 input channels are zero-padded
    to a sublane-aligned count (3 -> 8) so every tap is an aligned 8-row slab.
    """
    cin = params["blocks"][0]["w1"].shape[1]
    cin_pad = _round_up(cin, 8)

    def pack_conv(wc, pad_to=None):
        cout, ci, kh, kw = wc.shape
        wt = jnp.transpose(wc, (0, 2, 3, 1))            # (Cout, KH, KW, Cin)
        if pad_to is not None and pad_to > ci:
            wt = jnp.pad(wt, ((0, 0), (0, 0), (0, 0), (0, pad_to - ci)))
            ci = pad_to
        return wt.reshape(cout, kh * kw * ci)

    def col(v):
        return v.reshape(-1, 1)

    b1, b2, b3 = params["blocks"]
    flat = [
        pack_conv(b1["w1"], pad_to=cin_pad), col(b1["scale1"]), col(b1["shift1"]),
        pack_conv(b1["w2"]),                 col(b1["scale2"]), col(b1["shift2"]),
        jnp.pad(b1["wskip"], ((0, 0), (0, cin_pad - cin))), col(b1["bskip"]),
    ]
    for b in (b2, b3):
        flat += [
            pack_conv(b["w1"]), col(b["scale1"]), col(b["shift1"]),
            pack_conv(b["w2"]), col(b["scale2"]), col(b["shift2"]),
        ]
    flat += [params["head_w"], col(params["head_b"])]
    return flat


def resnet6_forward(packed_params, x5d):
    # x5d: (N, 1, C, H, W)  (PyTorch layout consumed by ResNet6.forward)
    n, _, cin, h, w = x5d.shape
    cin_pad = _round_up(cin, 8)
    s_len = n * h * w

    x = x5d[:, 0].reshape(n, cin, h * w)
    if cin_pad > cin:                       # sublane-align input channels (3 -> 8)
        x = jnp.pad(x, ((0, 0), (0, cin_pad - cin), (0, 0)))

    vmem = lambda: pl.BlockSpec(memory_space=pltpu.MemorySpace.VMEM)
    out = pl.pallas_call(
        _make_fused_kernel(n, h, w),
        out_shape=jax.ShapeDtypeStruct((1, s_len), jnp.float32),
        in_specs=[vmem() for _ in range(1 + len(packed_params))],
        out_specs=vmem(),
    )(x, *packed_params)

    # (1, N*H*W) lane-dense kernel output -> NCHW (N, 1, H, W)
    return jnp.transpose(out.reshape(1, n, h, w), (1, 0, 2, 3))


# ---------------------------- parameter init ----------------------------------

def init_params(key):
    ks = iter(jax.random.split(key, 24))

    def conv_w(cin, cout, k):
        fan_in = cin * k * k
        return (jax.random.normal(next(ks), (cout, cin, k, k), jnp.float32)
                / jnp.sqrt(fan_in))

    def vec(cout, scale=0.05):
        return jax.random.normal(next(ks), (cout,), jnp.float32) * scale

    def make_block(cin, cout):
        p = {
            "w1": conv_w(cin, cout, 3),
            # BN(eval, default init) folds to scale ~ 1, shift ~ conv-bias/beta
            "scale1": jnp.ones((cout,), jnp.float32),
            "shift1": vec(cout),
            "w2": conv_w(cout, cout, 3),
            "scale2": jnp.ones((cout,), jnp.float32),
            "shift2": vec(cout),
            "wskip": None,
            "bskip": None,
        }
        if cin != cout:
            p["wskip"] = (jax.random.normal(next(ks), (cout, cin), jnp.float32)
                          / jnp.sqrt(cin))
            p["bskip"] = vec(cout)
        return p

    return {
        "blocks": [make_block(3, 16), make_block(16, 16), make_block(16, 16)],
        "head_w": jax.random.normal(next(ks), (1, 16), jnp.float32) / 4.0,
        "head_b": vec(1),
    }


# ---------------------------- pure-JAX reference -------------------------------

def resnet6_reference(params, x5d):
    x = x5d[:, 0]                                            # (N, C, H, W)

    def cnn_block(xc, wc, scale, shift):
        y = jax.lax.conv_general_dilated(
            xc, wc, window_strides=(1, 1), padding="SAME",
            dimension_numbers=("NCHW", "OIHW", "NCHW"),
            precision=jax.lax.Precision.HIGHEST)
        y = y * scale[None, :, None, None] + shift[None, :, None, None]
        return jnp.maximum(y, 0.0)

    for blk in params["blocks"]:
        z = cnn_block(x, blk["w1"], blk["scale1"], blk["shift1"])
        z = cnn_block(z, blk["w2"], blk["scale2"], blk["shift2"])
        if blk["wskip"] is not None:
            skip = (jnp.einsum("oc,nchw->nohw", blk["wskip"], x,
                               precision=jax.lax.Precision.HIGHEST)
                    + blk["bskip"][None, :, None, None])
            x = z + skip
        else:
            x = z + x
    return (jnp.einsum("oc,nchw->nohw", params["head_w"], x,
                       precision=jax.lax.Precision.HIGHEST)
            + params["head_b"][None, :, None, None])


# --------------------------------- main ----------------------------------------

if __name__ == "__main__":
    key = jax.random.PRNGKey(0)
    kx, kp = jax.random.split(key)
    # ResNet6.forward slices X[:, 0, :, :, :], so the input is 5-D.
    x = jax.random.normal(kx, (2, 1, 3, 16, 16), jnp.float32)
    params = init_params(kp)
    packed = pack_params(params)

    fwd = jax.jit(resnet6_forward)
    out = jax.block_until_ready(fwd(packed, x))
    assert out.shape == (2, 1, 16, 16), out.shape
    assert out.dtype == jnp.float32

    # correctness: compare the fused Pallas kernel against the pure-JAX reference
    ref = jax.block_until_ready(resnet6_reference(params, x))
    err = float(jnp.max(jnp.abs(out - ref)))
    assert err < 2e-3, f"kernel/reference mismatch: max abs err = {err}"

    print("KERNEL_OK")
</pallas_src>

<mosaic_0001>
module attributes {stable_mosaic.version = 11 : i64} {
  func.func @kernel(%arg0: memref<2x8x256xf32, #tpu.memory_space<vmem>>, %arg1: memref<16x72xf32, #tpu.memory_space<vmem>>, %arg2: memref<16x1xf32, #tpu.memory_space<vmem>>, %arg3: memref<16x1xf32, #tpu.memory_space<vmem>>, %arg4: memref<16x144xf32, #tpu.memory_space<vmem>>, %arg5: memref<16x1xf32, #tpu.memory_space<vmem>>, %arg6: memref<16x1xf32, #tpu.memory_space<vmem>>, %arg7: memref<16x8xf32, #tpu.memory_space<vmem>>, %arg8: memref<16x1xf32, #tpu.memory_space<vmem>>, %arg9: memref<16x144xf32, #tpu.memory_space<vmem>>, %arg10: memref<16x1xf32, #tpu.memory_space<vmem>>, %arg11: memref<16x1xf32, #tpu.memory_space<vmem>>, %arg12: memref<16x144xf32, #tpu.memory_space<vmem>>, %arg13: memref<16x1xf32, #tpu.memory_space<vmem>>, %arg14: memref<16x1xf32, #tpu.memory_space<vmem>>, %arg15: memref<16x144xf32, #tpu.memory_space<vmem>>, %arg16: memref<16x1xf32, #tpu.memory_space<vmem>>, %arg17: memref<16x1xf32, #tpu.memory_space<vmem>>, %arg18: memref<16x144xf32, #tpu.memory_space<vmem>>, %arg19: memref<16x1xf32, #tpu.memory_space<vmem>>, %arg20: memref<16x1xf32, #tpu.memory_space<vmem>>, %arg21: memref<1x16xf32, #tpu.memory_space<vmem>>, %arg22: memref<1x1xf32, #tpu.memory_space<vmem>>, %arg23: memref<1x512xf32, #tpu.memory_space<vmem>>) attributes {dimension_semantics = [], scalar_prefetch = 0 : i64, scratch_operands = 0 : i64, tpu.core_type = #tpu.core_type<tc>} {
    %c0 = arith.constant 0 : index
    %c0_0 = arith.constant 0 : index
    %c0_1 = arith.constant 0 : index
    %0 = vector.load %arg0[%c0, %c0_0, %c0_1] : memref<2x8x256xf32, #tpu.memory_space<vmem>>, vector<1x8x256xf32>
    %1 = vector.shape_cast %0 : vector<1x8x256xf32> to vector<8x256xf32>
    %c1 = arith.constant 1 : index
    %c0_2 = arith.constant 0 : index
    %c0_3 = arith.constant 0 : index
    %2 = vector.load %arg0[%c1, %c0_2, %c0_3] : memref<2x8x256xf32, #tpu.memory_space<vmem>>, vector<1x8x256xf32>
    %3 = vector.shape_cast %2 : vector<1x8x256xf32> to vector<8x256xf32>
    %4 = tpu.concatenate %1, %3 in 1 : vector<8x256xf32>, vector<8x256xf32> -> vector<8x512xf32>
    %5 = tpu.iota {dimensions = array<i32: 1>} : vector<1x512xi32>
    %c15_i32 = arith.constant 15 : i32
    %6 = vector.broadcast %c15_i32 : i32 to vector<1x512xi32>
    %7 = arith.andi %5, %6 : vector<1x512xi32>
    %c4_i32 = arith.constant 4 : i32
    %8 = vector.broadcast %c4_i32 : i32 to vector<1x512xi32>
    %9 = arith.shrsi %5, %8 : vector<1x512xi32>
    %c15_i32_4 = arith.constant 15 : i32
    %10 = vector.broadcast %c15_i32_4 : i32 to vector<1x512xi32>
    %11 = arith.andi %9, %10 : vector<1x512xi32>
    %c-1_i32 = arith.constant -1 : i32
    %12 = vector.broadcast %c-1_i32 : i32 to vector<1x512xi32>
    %13 = arith.addi %11, %12 : vector<1x512xi32>
    %c0_i32 = arith.constant 0 : i32
    %14 = vector.broadcast %c0_i32 : i32 to vector<1x512xi32>
    %15 = arith.cmpi sge, %13, %14 : vector<1x512xi32>
    %c-1_i32_5 = arith.constant -1 : i32
    %16 = vector.broadcast %c-1_i32_5 : i32 to vector<1x512xi32>
    %17 = arith.addi %11, %16 : vector<1x512xi32>
    %c16_i32 = arith.constant 16 : i32
    %18 = vector.broadcast %c16_i32 : i32 to vector<1x512xi32>
    %19 = arith.cmpi slt, %17, %18 : vector<1x512xi32>
    %20 = arith.andi %15, %19 : vector<1x512xi1>
    %c-1_i32_6 = arith.constant -1 : i32
    %21 = vector.broadcast %c-1_i32_6 : i32 to vector<1x512xi32>
    %22 = arith.addi %7, %21 : vector<1x512xi32>
    %c0_i32_7 = arith.constant 0 : i32
    %23 = vector.broadcast %c0_i32_7 : i32 to vector<1x512xi32>
    %24 = arith.cmpi sge, %22, %23 : vector<1x512xi32>
    %25 = arith.andi %20, %24 : vector<1x512xi1>
    %c-1_i32_8 = arith.constant -1 : i32
    %26 = vector.broadcast %c-1_i32_8 : i32 to vector<1x512xi32>
    %27 = arith.addi %7, %26 : vector<1x512xi32>
    %c16_i32_9 = arith.constant 16 : i32
    %28 = vector.broadcast %c16_i32_9 : i32 to vector<1x512xi32>
    %29 = arith.cmpi slt, %27, %28 : vector<1x512xi32>
    %30 = arith.andi %25, %29 : vector<1x512xi1>
    %c-1_i32_10 = arith.constant -1 : i32
    %31 = vector.broadcast %c-1_i32_10 : i32 to vector<1x512xi32>
    %32 = arith.addi %11, %31 : vector<1x512xi32>
    %c0_i32_11 = arith.constant 0 : i32
    %33 = vector.broadcast %c0_i32_11 : i32 to vector<1x512xi32>
    %34 = arith.cmpi sge, %32, %33 : vector<1x512xi32>
    %c-1_i32_12 = arith.constant -1 : i32
    %35 = vector.broadcast %c-1_i32_12 : i32 to vector<1x512xi32>
    %36 = arith.addi %11, %35 : vector<1x512xi32>
    %c16_i32_13 = arith.constant 16 : i32
    %37 = vector.broadcast %c16_i32_13 : i32 to vector<1x512xi32>
    %38 = arith.cmpi slt, %36, %37 : vector<1x512xi32>
    %39 = arith.andi %34, %38 : vector<1x512xi1>
    %c0_i32_14 = arith.constant 0 : i32
    %40 = vector.broadcast %c0_i32_14 : i32 to vector<1x512xi32>
    %41 = arith.addi %7, %40 : vector<1x512xi32>
    %c0_i32_15 = arith.constant 0 : i32
    %42 = vector.broadcast %c0_i32_15 : i32 to vector<1x512xi32>
    %43 = arith.cmpi sge, %41, %42 : vector<1x512xi32>
    %44 = arith.andi %39, %43 : vector<1x512xi1>
    %c0_i32_16 = arith.constant 0 : i32
    %45 = vector.broadcast %c0_i32_16 : i32 to vector<1x512xi32>
    %46 = arith.addi %7, %45 : vector<1x512xi32>
    %c16_i32_17 = arith.constant 16 : i32
    %47 = vector.broadcast %c16_i32_17 : i32 to vector<1x512xi32>
    %48 = arith.cmpi slt, %46, %47 : vector<1x512xi32>
    %49 = arith.andi %44, %48 : vector<1x512xi1>
    %c-1_i32_18 = arith.constant -1 : i32
    %50 = vector.broadcast %c-1_i32_18 : i32 to vector<1x512xi32>
    %51 = arith.addi %11, %50 : vector<1x512xi32>
    %c0_i32_19 = arith.constant 0 : i32
    %52 = vector.broadcast %c0_i32_19 : i32 to vector<1x512xi32>
    %53 = arith.cmpi sge, %51, %52 : vector<1x512xi32>
    %c-1_i32_20 = arith.constant -1 : i32
    %54 = vector.broadcast %c-1_i32_20 : i32 to vector<1x512xi32>
    %55 = arith.addi %11, %54 : vector<1x512xi32>
    %c16_i32_21 = arith.constant 16 : i32
    %56 = vector.broadcast %c16_i32_21 : i32 to vector<1x512xi32>
    %57 = arith.cmpi slt, %55, %56 : vector<1x512xi32>
    %58 = arith.andi %53, %57 : vector<1x512xi1>
    %c1_i32 = arith.constant 1 : i32
    %59 = vector.broadcast %c1_i32 : i32 to vector<1x512xi32>
    %60 = arith.addi %7, %59 : vector<1x512xi32>
    %c0_i32_22 = arith.constant 0 : i32
    %61 = vector.broadcast %c0_i32_22 : i32 to vector<1x512xi32>
    %62 = arith.cmpi sge, %60, %61 : vector<1x512xi32>
    %63 = arith.andi %58, %62 : vector<1x512xi1>
    %c1_i32_23 = arith.constant 1 : i32
    %64 = vector.broadcast %c1_i32_23 : i32 to vector<1x512xi32>
    %65 = arith.addi %7, %64 : vector<1x512xi32>
    %c16_i32_24 = arith.constant 16 : i32
    %66 = vector.broadcast %c16_i32_24 : i32 to vector<1x512xi32>
    %67 = arith.cmpi slt, %65, %66 : vector<1x512xi32>
    %68 = arith.andi %63, %67 : vector<1x512xi1>
    %c0_i32_25 = arith.constant 0 : i32
    %69 = vector.broadcast %c0_i32_25 : i32 to vector<1x512xi32>
    %70 = arith.addi %11, %69 : vector<1x512xi32>
    %c0_i32_26 = arith.constant 0 : i32
    %71 = vector.broadcast %c0_i32_26 : i32 to vector<1x512xi32>
    %72 = arith.cmpi sge, %70, %71 : vector<1x512xi32>
    %c0_i32_27 = arith.constant 0 : i32
    %73 = vector.broadcast %c0_i32_27 : i32 to vector<1x512xi32>
    %74 = arith.addi %11, %73 : vector<1x512xi32>
    %c16_i32_28 = arith.constant 16 : i32
    %75 = vector.broadcast %c16_i32_28 : i32 to vector<1x512xi32>
    %76 = arith.cmpi slt, %74, %75 : vector<1x512xi32>
    %77 = arith.andi %72, %76 : vector<1x512xi1>
    %c-1_i32_29 = arith.constant -1 : i32
    %78 = vector.broadcast %c-1_i32_29 : i32 to vector<1x512xi32>
    %79 = arith.addi %7, %78 : vector<1x512xi32>
    %c0_i32_30 = arith.constant 0 : i32
    %80 = vector.broadcast %c0_i32_30 : i32 to vector<1x512xi32>
    %81 = arith.cmpi sge, %79, %80 : vector<1x512xi32>
    %82 = arith.andi %77, %81 : vector<1x512xi1>
    %c-1_i32_31 = arith.constant -1 : i32
    %83 = vector.broadcast %c-1_i32_31 : i32 to vector<1x512xi32>
    %84 = arith.addi %7, %83 : vector<1x512xi32>
    %c16_i32_32 = arith.constant 16 : i32
    %85 = vector.broadcast %c16_i32_32 : i32 to vector<1x512xi32>
    %86 = arith.cmpi slt, %84, %85 : vector<1x512xi32>
    %87 = arith.andi %82, %86 : vector<1x512xi1>
    %c0_i32_33 = arith.constant 0 : i32
    %88 = vector.broadcast %c0_i32_33 : i32 to vector<1x512xi32>
    %89 = arith.addi %11, %88 : vector<1x512xi32>
    %c0_i32_34 = arith.constant 0 : i32
    %90 = vector.broadcast %c0_i32_34 : i32 to vector<1x512xi32>
    %91 = arith.cmpi sge, %89, %90 : vector<1x512xi32>
    %c0_i32_35 = arith.constant 0 : i32
    %92 = vector.broadcast %c0_i32_35 : i32 to vector<1x512xi32>
    %93 = arith.addi %11, %92 : vector<1x512xi32>
    %c16_i32_36 = arith.constant 16 : i32
    %94 = vector.broadcast %c16_i32_36 : i32 to vector<1x512xi32>
    %95 = arith.cmpi slt, %93, %94 : vector<1x512xi32>
    %96 = arith.andi %91, %95 : vector<1x512xi1>
    %c1_i32_37 = arith.constant 1 : i32
    %97 = vector.broadcast %c1_i32_37 : i32 to vector<1x512xi32>
    %98 = arith.addi %7, %97 : vector<1x512xi32>
    %c0_i32_38 = arith.constant 0 : i32
    %99 = vector.broadcast %c0_i32_38 : i32 to vector<1x512xi32>
    %100 = arith.cmpi sge, %98, %99 : vector<1x512xi32>
    %101 = arith.andi %96, %100 : vector<1x512xi1>
    %c1_i32_39 = arith.constant 1 : i32
    %102 = vector.broadcast %c1_i32_39 : i32 to vector<1x512xi32>
    %103 = arith.addi %7, %102 : vector<1x512xi32>
    %c16_i32_40 = arith.constant 16 : i32
    %104 = vector.broadcast %c16_i32_40 : i32 to vector<1x512xi32>
    %105 = arith.cmpi slt, %103, %104 : vector<1x512xi32>
    %106 = arith.andi %101, %105 : vector<1x512xi1>
    %c1_i32_41 = arith.constant 1 : i32
    %107 = vector.broadcast %c1_i32_41 : i32 to vector<1x512xi32>
    %108 = arith.addi %11, %107 : vector<1x512xi32>
    %c0_i32_42 = arith.constant 0 : i32
    %109 = vector.broadcast %c0_i32_42 : i32 to vector<1x512xi32>
    %110 = arith.cmpi sge, %108, %109 : vector<1x512xi32>
    %c1_i32_43 = arith.constant 1 : i32
    %111 = vector.broadcast %c1_i32_43 : i32 to vector<1x512xi32>
    %112 = arith.addi %11, %111 : vector<1x512xi32>
    %c16_i32_44 = arith.constant 16 : i32
    %113 = vector.broadcast %c16_i32_44 : i32 to vector<1x512xi32>
    %114 = arith.cmpi slt, %112, %113 : vector<1x512xi32>
    %115 = arith.andi %110, %114 : vector<1x512xi1>
    %c-1_i32_45 = arith.constant -1 : i32
    %116 = vector.broadcast %c-1_i32_45 : i32 to vector<1x512xi32>
    %117 = arith.addi %7, %116 : vector<1x512xi32>
    %c0_i32_46 = arith.constant 0 : i32
    %118 = vector.broadcast %c0_i32_46 : i32 to vector<1x512xi32>
    %119 = arith.cmpi sge, %117, %118 : vector<1x512xi32>
    %120 = arith.andi %115, %119 : vector<1x512xi1>
    %c-1_i32_47 = arith.constant -1 : i32
    %121 = vector.broadcast %c-1_i32_47 : i32 to vector<1x512xi32>
    %122 = arith.addi %7, %121 : vector<1x512xi32>
    %c16_i32_48 = arith.constant 16 : i32
    %123 = vector.broadcast %c16_i32_48 : i32 to vector<1x512xi32>
    %124 = arith.cmpi slt, %122, %123 : vector<1x512xi32>
    %125 = arith.andi %120, %124 : vector<1x512xi1>
    %c1_i32_49 = arith.constant 1 : i32
    %126 = vector.broadcast %c1_i32_49 : i32 to vector<1x512xi32>
    %127 = arith.addi %11, %126 : vector<1x512xi32>
    %c0_i32_50 = arith.constant 0 : i32
    %128 = vector.broadcast %c0_i32_50 : i32 to vector<1x512xi32>
    %129 = arith.cmpi sge, %127, %128 : vector<1x512xi32>
    %c1_i32_51 = arith.constant 1 : i32
    %130 = vector.broadcast %c1_i32_51 : i32 to vector<1x512xi32>
    %131 = arith.addi %11, %130 : vector<1x512xi32>
    %c16_i32_52 = arith.constant 16 : i32
    %132 = vector.broadcast %c16_i32_52 : i32 to vector<1x512xi32>
    %133 = arith.cmpi slt, %131, %132 : vector<1x512xi32>
    %134 = arith.andi %129, %133 : vector<1x512xi1>
    %c0_i32_53 = arith.constant 0 : i32
    %135 = vector.broadcast %c0_i32_53 : i32 to vector<1x512xi32>
    %136 = arith.addi %7, %135 : vector<1x512xi32>
    %c0_i32_54 = arith.constant 0 : i32
    %137 = vector.broadcast %c0_i32_54 : i32 to vector<1x512xi32>
    %138 = arith.cmpi sge, %136, %137 : vector<1x512xi32>
    %139 = arith.andi %134, %138 : vector<1x512xi1>
    %c0_i32_55 = arith.constant 0 : i32
    %140 = vector.broadcast %c0_i32_55 : i32 to vector<1x512xi32>
    %141 = arith.addi %7, %140 : vector<1x512xi32>
    %c16_i32_56 = arith.constant 16 : i32
    %142 = vector.broadcast %c16_i32_56 : i32 to vector<1x512xi32>
    %143 = arith.cmpi slt, %141, %142 : vector<1x512xi32>
    %144 = arith.andi %139, %143 : vector<1x512xi1>
    %c1_i32_57 = arith.constant 1 : i32
    %145 = vector.broadcast %c1_i32_57 : i32 to vector<1x512xi32>
    %146 = arith.addi %11, %145 : vector<1x512xi32>
    %c0_i32_58 = arith.constant 0 : i32
    %147 = vector.broadcast %c0_i32_58 : i32 to vector<1x512xi32>
    %148 = arith.cmpi sge, %146, %147 : vector<1x512xi32>
    %c1_i32_59 = arith.constant 1 : i32
    %149 = vector.broadcast %c1_i32_59 : i32 to vector<1x512xi32>
    %150 = arith.addi %11, %149 : vector<1x512xi32>
    %c16_i32_60 = arith.constant 16 : i32
    %151 = vector.broadcast %c16_i32_60 : i32 to vector<1x512xi32>
    %152 = arith.cmpi slt, %150, %151 : vector<1x512xi32>
    %153 = arith.andi %148, %152 : vector<1x512xi1>
    %c1_i32_61 = arith.constant 1 : i32
    %154 = vector.broadcast %c1_i32_61 : i32 to vector<1x512xi32>
    %155 = arith.addi %7, %154 : vector<1x512xi32>
    %c0_i32_62 = arith.constant 0 : i32
    %156 = vector.broadcast %c0_i32_62 : i32 to vector<1x512xi32>
    %157 = arith.cmpi sge, %155, %156 : vector<1x512xi32>
    %158 = arith.andi %153, %157 : vector<1x512xi1>
    %c1_i32_63 = arith.constant 1 : i32
    %159 = vector.broadcast %c1_i32_63 : i32 to vector<1x512xi32>
    %160 = arith.addi %7, %159 : vector<1x512xi32>
    %c16_i32_64 = arith.constant 16 : i32
    %161 = vector.broadcast %c16_i32_64 : i32 to vector<1x512xi32>
    %162 = arith.cmpi slt, %160, %161 : vector<1x512xi32>
    %163 = arith.andi %158, %162 : vector<1x512xi1>
    %c17_i32 = arith.constant 17 : i32
    %164 = tpu.dynamic_rotate %4 by %c17_i32 dim 1 : vector<8x512xf32>, i32 -> vector<8x512xf32>
    %cst = arith.constant 0.000000e+00 : f32
    %165 = vector.shape_cast %30 : vector<1x512xi1> to vector<1x512xi1>
    %166 = vector.broadcast %165 : vector<1x512xi1> to vector<8x512xi1>
    %167 = vector.broadcast %cst : f32 to vector<8x512xf32>
    %168 = arith.select %166, %164, %167 : vector<8x512xi1>, vector<8x512xf32>
    %c16_i32_65 = arith.constant 16 : i32
    %169 = tpu.dynamic_rotate %4 by %c16_i32_65 dim 1 : vector<8x512xf32>, i32 -> vector<8x512xf32>
    %cst_66 = arith.constant 0.000000e+00 : f32
    %170 = vector.shape_cast %49 : vector<1x512xi1> to vector<1x512xi1>
    %171 = vector.broadcast %170 : vector<1x512xi1> to vector<8x512xi1>
    %172 = vector.broadcast %cst_66 : f32 to vector<8x512xf32>
    %173 = arith.select %171, %169, %172 : vector<8x512xi1>, vector<8x512xf32>
    %c15_i32_67 = arith.constant 15 : i32
    %174 = tpu.dynamic_rotate %4 by %c15_i32_67 dim 1 : vector<8x512xf32>, i32 -> vector<8x512xf32>
    %cst_68 = arith.constant 0.000000e+00 : f32
    %175 = vector.shape_cast %68 : vector<1x512xi1> to vector<1x512xi1>
    %176 = vector.broadcast %175 : vector<1x512xi1> to vector<8x512xi1>
    %177 = vector.broadcast %cst_68 : f32 to vector<8x512xf32>
    %178 = arith.select %176, %174, %177 : vector<8x512xi1>, vector<8x512xf32>
    %c1_i32_69 = arith.constant 1 : i32
    %179 = tpu.dynamic_rotate %4 by %c1_i32_69 dim 1 : vector<8x512xf32>, i32 -> vector<8x512xf32>
    %cst_70 = arith.constant 0.000000e+00 : f32
    %180 = vector.shape_cast %87 : vector<1x512xi1> to vector<1x512xi1>
    %181 = vector.broadcast %180 : vector<1x512xi1> to vector<8x512xi1>
    %182 = vector.broadcast %cst_70 : f32 to vector<8x512xf32>
    %183 = arith.select %181, %179, %182 : vector<8x512xi1>, vector<8x512xf32>
    %c511_i32 = arith.constant 511 : i32
    %184 = tpu.dynamic_rotate %4 by %c511_i32 dim 1 : vector<8x512xf32>, i32 -> vector<8x512xf32>
    %cst_71 = arith.constant 0.000000e+00 : f32
    %185 = vector.shape_cast %106 : vector<1x512xi1> to vector<1x512xi1>
    %186 = vector.broadcast %185 : vector<1x512xi1> to vector<8x512xi1>
    %187 = vector.broadcast %cst_71 : f32 to vector<8x512xf32>
    %188 = arith.select %186, %184, %187 : vector<8x512xi1>, vector<8x512xf32>
    %c497_i32 = arith.constant 497 : i32
    %189 = tpu.dynamic_rotate %4 by %c497_i32 dim 1 : vector<8x512xf32>, i32 -> vector<8x512xf32>
    %cst_72 = arith.constant 0.000000e+00 : f32
    %190 = vector.shape_cast %125 : vector<1x512xi1> to vector<1x512xi1>
    %191 = vector.broadcast %190 : vector<1x512xi1> to vector<8x512xi1>
    %192 = vector.broadcast %cst_72 : f32 to vector<8x512xf32>
    %193 = arith.select %191, %189, %192 : vector<8x512xi1>, vector<8x512xf32>
    %c496_i32 = arith.constant 496 : i32
    %194 = tpu.dynamic_rotate %4 by %c496_i32 dim 1 : vector<8x512xf32>, i32 -> vector<8x512xf32>
    %cst_73 = arith.constant 0.000000e+00 : f32
    %195 = vector.shape_cast %144 : vector<1x512xi1> to vector<1x512xi1>
    %196 = vector.broadcast %195 : vector<1x512xi1> to vector<8x512xi1>
    %197 = vector.broadcast %cst_73 : f32 to vector<8x512xf32>
    %198 = arith.select %196, %194, %197 : vector<8x512xi1>, vector<8x512xf32>
    %c495_i32 = arith.constant 495 : i32
    %199 = tpu.dynamic_rotate %4 by %c495_i32 dim 1 : vector<8x512xf32>, i32 -> vector<8x512xf32>
    %cst_74 = arith.constant 0.000000e+00 : f32
    %200 = vector.shape_cast %163 : vector<1x512xi1> to vector<1x512xi1>
    %201 = vector.broadcast %200 : vector<1x512xi1> to vector<8x512xi1>
    %202 = vector.broadcast %cst_74 : f32 to vector<8x512xf32>
    %203 = arith.select %201, %199, %202 : vector<8x512xi1>, vector<8x512xf32>
    %204 = tpu.concatenate %168, %173, %178, %183, %4, %188, %193, %198, %203 in 0 : vector<8x512xf32>, vector<8x512xf32>, vector<8x512xf32>, vector<8x512xf32>, vector<8x512xf32>, vector<8x512xf32>, vector<8x512xf32>, vector<8x512xf32>, vector<8x512xf32> -> vector<72x512xf32>
    %c0_75 = arith.constant 0 : index
    %c0_76 = arith.constant 0 : index
    %205 = vector.load %arg1[%c0_75, %c0_76] : memref<16x72xf32, #tpu.memory_space<vmem>>, vector<16x72xf32>
    %cst_77 = arith.constant dense<0.000000e+00> : vector<16x512xf32>
    %206 = tpu.matmul %205, %204, %cst_77 {dimension_numbers = #tpu.dot_dimension_numbers<[1], [0], [0], [1], [0, 0, 1, 1], [], []>} : vector<16x72xf32>, vector<72x512xf32>, vector<16x512xf32> -> vector<16x512xf32>
    %c0_78 = arith.constant 0 : index
    %c0_79 = arith.constant 0 : index
    %207 = vector.load %arg2[%c0_78, %c0_79] : memref<16x1xf32, #tpu.memory_space<vmem>>, vector<16x1xf32>
    %208 = vector.broadcast %207 : vector<16x1xf32> to vector<16x512xf32>
    %209 = arith.mulf %206, %208 : vector<16x512xf32>
    %c0_80 = arith.constant 0 : index
    %c0_81 = arith.constant 0 : index
    %210 = vector.load %arg3[%c0_80, %c0_81] : memref<16x1xf32, #tpu.memory_space<vmem>>, vector<16x1xf32>
    %211 = vector.broadcast %210 : vector<16x1xf32> to vector<16x512xf32>
    %212 = arith.addf %209, %211 : vector<16x512xf32>
    %cst_82 = arith.constant 0.000000e+00 : f32
    %213 = vector.broadcast %cst_82 : f32 to vector<16x512xf32>
    %214 = arith.maximumf %212, %213 : vector<16x512xf32>
    %c17_i32_83 = arith.constant 17 : i32
    %215 = tpu.dynamic_rotate %214 by %c17_i32_83 dim 1 : vector<16x512xf32>, i32 -> vector<16x512xf32>
    %cst_84 = arith.constant 0.000000e+00 : f32
    %216 = vector.shape_cast %30 : vector<1x512xi1> to vector<1x512xi1>
    %217 = vector.broadcast %216 : vector<1x512xi1> to vector<16x512xi1>
    %218 = vector.broadcast %cst_84 : f32 to vector<16x512xf32>
    %219 = arith.select %217, %215, %218 : vector<16x512xi1>, vector<16x512xf32>
    %c16_i32_85 = arith.constant 16 : i32
    %220 = tpu.dynamic_rotate %214 by %c16_i32_85 dim 1 : vector<16x512xf32>, i32 -> vector<16x512xf32>
    %cst_86 = arith.constant 0.000000e+00 : f32
    %221 = vector.shape_cast %49 : vector<1x512xi1> to vector<1x512xi1>
    %222 = vector.broadcast %221 : vector<1x512xi1> to vector<16x512xi1>
    %223 = vector.broadcast %cst_86 : f32 to vector<16x512xf32>
    %224 = arith.select %222, %220, %223 : vector<16x512xi1>, vector<16x512xf32>
    %c15_i32_87 = arith.constant 15 : i32
    %225 = tpu.dynamic_rotate %214 by %c15_i32_87 dim 1 : vector<16x512xf32>, i32 -> vector<16x512xf32>
    %cst_88 = arith.constant 0.000000e+00 : f32
    %226 = vector.shape_cast %68 : vector<1x512xi1> to vector<1x512xi1>
    %227 = vector.broadcast %226 : vector<1x512xi1> to vector<16x512xi1>
    %228 = vector.broadcast %cst_88 : f32 to vector<16x512xf32>
    %229 = arith.select %227, %225, %228 : vector<16x512xi1>, vector<16x512xf32>
    %c1_i32_89 = arith.constant 1 : i32
    %230 = tpu.dynamic_rotate %214 by %c1_i32_89 dim 1 : vector<16x512xf32>, i32 -> vector<16x512xf32>
    %cst_90 = arith.constant 0.000000e+00 : f32
    %231 = vector.shape_cast %87 : vector<1x512xi1> to vector<1x512xi1>
    %232 = vector.broadcast %231 : vector<1x512xi1> to vector<16x512xi1>
    %233 = vector.broadcast %cst_90 : f32 to vector<16x512xf32>
    %234 = arith.select %232, %230, %233 : vector<16x512xi1>, vector<16x512xf32>
    %c511_i32_91 = arith.constant 511 : i32
    %235 = tpu.dynamic_rotate %214 by %c511_i32_91 dim 1 : vector<16x512xf32>, i32 -> vector<16x512xf32>
    %cst_92 = arith.constant 0.000000e+00 : f32
    %236 = vector.shape_cast %106 : vector<1x512xi1> to vector<1x512xi1>
    %237 = vector.broadcast %236 : vector<1x512xi1> to vector<16x512xi1>
    %238 = vector.broadcast %cst_92 : f32 to vector<16x512xf32>
    %239 = arith.select %237, %235, %238 : vector<16x512xi1>, vector<16x512xf32>
    %c497_i32_93 = arith.constant 497 : i32
    %240 = tpu.dynamic_rotate %214 by %c497_i32_93 dim 1 : vector<16x512xf32>, i32 -> vector<16x512xf32>
    %cst_94 = arith.constant 0.000000e+00 : f32
    %241 = vector.shape_cast %125 : vector<1x512xi1> to vector<1x512xi1>
    %242 = vector.broadcast %241 : vector<1x512xi1> to vector<16x512xi1>
    %243 = vector.broadcast %cst_94 : f32 to vector<16x512xf32>
    %244 = arith.select %242, %240, %243 : vector<16x512xi1>, vector<16x512xf32>
    %c496_i32_95 = arith.constant 496 : i32
    %245 = tpu.dynamic_rotate %214 by %c496_i32_95 dim 1 : vector<16x512xf32>, i32 -> vector<16x512xf32>
    %cst_96 = arith.constant 0.000000e+00 : f32
    %246 = vector.shape_cast %144 : vector<1x512xi1> to vector<1x512xi1>
    %247 = vector.broadcast %246 : vector<1x512xi1> to vector<16x512xi1>
    %248 = vector.broadcast %cst_96 : f32 to vector<16x512xf32>
    %249 = arith.select %247, %245, %248 : vector<16x512xi1>, vector<16x512xf32>
    %c495_i32_97 = arith.constant 495 : i32
    %250 = tpu.dynamic_rotate %214 by %c495_i32_97 dim 1 : vector<16x512xf32>, i32 -> vector<16x512xf32>
    %cst_98 = arith.constant 0.000000e+00 : f32
    %251 = vector.shape_cast %163 : vector<1x512xi1> to vector<1x512xi1>
    %252 = vector.broadcast %251 : vector<1x512xi1> to vector<16x512xi1>
    %253 = vector.broadcast %cst_98 : f32 to vector<16x512xf32>
    %254 = arith.select %252, %250, %253 : vector<16x512xi1>, vector<16x512xf32>
    %255 = tpu.concatenate %219, %224, %229, %234, %214, %239, %244, %249, %254 in 0 : vector<16x512xf32>, vector<16x512xf32>, vector<16x512xf32>, vector<16x512xf32>, vector<16x512xf32>, vector<16x512xf32>, vector<16x512xf32>, vector<16x512xf32>, vector<16x512xf32> -> vector<144x512xf32>
    %c0_99 = arith.constant 0 : index
    %c0_100 = arith.constant 0 : index
    %256 = vector.load %arg4[%c0_99, %c0_100] : memref<16x144xf32, #tpu.memory_space<vmem>>, vector<16x144xf32>
    %cst_101 = arith.constant dense<0.000000e+00> : vector<16x512xf32>
    %257 = tpu.matmul %256, %255, %cst_101 {dimension_numbers = #tpu.dot_dimension_numbers<[1], [0], [0], [1], [0, 0, 1, 1], [], []>} : vector<16x144xf32>, vector<144x512xf32>, vector<16x512xf32> -> vector<16x512xf32>
    %c0_102 = arith.constant 0 : index
    %c0_103 = arith.constant 0 : index
    %258 = vector.load %arg5[%c0_102, %c0_103] : memref<16x1xf32, #tpu.memory_space<vmem>>, vector<16x1xf32>
    %259 = vector.broadcast %258 : vector<16x1xf32> to vector<16x512xf32>
    %260 = arith.mulf %257, %259 : vector<16x512xf32>
    %c0_104 = arith.constant 0 : index
    %c0_105 = arith.constant 0 : index
    %261 = vector.load %arg6[%c0_104, %c0_105] : memref<16x1xf32, #tpu.memory_space<vmem>>, vector<16x1xf32>
    %262 = vector.broadcast %261 : vector<16x1xf32> to vector<16x512xf32>
    %263 = arith.addf %260, %262 : vector<16x512xf32>
    %cst_106 = arith.constant 0.000000e+00 : f32
    %264 = vector.broadcast %cst_106 : f32 to vector<16x512xf32>
    %265 = arith.maximumf %263, %264 : vector<16x512xf32>
    %c0_107 = arith.constant 0 : index
    %c0_108 = arith.constant 0 : index
    %266 = vector.load %arg7[%c0_107, %c0_108] : memref<16x8xf32, #tpu.memory_space<vmem>>, vector<16x8xf32>
    %cst_109 = arith.constant dense<0.000000e+00> : vector<16x512xf32>
    %267 = tpu.matmul %266, %4, %cst_109 {dimension_numbers = #tpu.dot_dimension_numbers<[1], [0], [0], [1], [0, 0, 1, 1], [], []>} : vector<16x8xf32>, vector<8x512xf32>, vector<16x512xf32> -> vector<16x512xf32>
    %c0_110 = arith.constant 0 : index
    %c0_111 = arith.constant 0 : index
    %268 = vector.load %arg8[%c0_110, %c0_111] : memref<16x1xf32, #tpu.memory_space<vmem>>, vector<16x1xf32>
    %269 = vector.broadcast %268 : vector<16x1xf32> to vector<16x512xf32>
    %270 = arith.addf %267, %269 : vector<16x512xf32>
    %271 = arith.addf %265, %270 : vector<16x512xf32>
    %c17_i32_112 = arith.constant 17 : i32
    %272 = tpu.dynamic_rotate %271 by %c17_i32_112 dim 1 : vector<16x512xf32>, i32 -> vector<16x512xf32>
    %cst_113 = arith.constant 0.000000e+00 : f32
    %273 = vector.shape_cast %30 : vector<1x512xi1> to vector<1x512xi1>
    %274 = vector.broadcast %273 : vector<1x512xi1> to vector<16x512xi1>
    %275 = vector.broadcast %cst_113 : f32 to vector<16x512xf32>
    %276 = arith.select %274, %272, %275 : vector<16x512xi1>, vector<16x512xf32>
    %c16_i32_114 = arith.constant 16 : i32
    %277 = tpu.dynamic_rotate %271 by %c16_i32_114 dim 1 : vector<16x512xf32>, i32 -> vector<16x512xf32>
    %cst_115 = arith.constant 0.000000e+00 : f32
    %278 = vector.shape_cast %49 : vector<1x512xi1> to vector<1x512xi1>
    %279 = vector.broadcast %278 : vector<1x512xi1> to vector<16x512xi1>
    %280 = vector.broadcast %cst_115 : f32 to vector<16x512xf32>
    %281 = arith.select %279, %277, %280 : vector<16x512xi1>, vector<16x512xf32>
    %c15_i32_116 = arith.constant 15 : i32
    %282 = tpu.dynamic_rotate %271 by %c15_i32_116 dim 1 : vector<16x512xf32>, i32 -> vector<16x512xf32>
    %cst_117 = arith.constant 0.000000e+00 : f32
    %283 = vector.shape_cast %68 : vector<1x512xi1> to vector<1x512xi1>
    %284 = vector.broadcast %283 : vector<1x512xi1> to vector<16x512xi1>
    %285 = vector.broadcast %cst_117 : f32 to vector<16x512xf32>
    %286 = arith.select %284, %282, %285 : vector<16x512xi1>, vector<16x512xf32>
    %c1_i32_118 = arith.constant 1 : i32
    %287 = tpu.dynamic_rotate %271 by %c1_i32_118 dim 1 : vector<16x512xf32>, i32 -> vector<16x512xf32>
    %cst_119 = arith.constant 0.000000e+00 : f32
    %288 = vector.shape_cast %87 : vector<1x512xi1> to vector<1x512xi1>
    %289 = vector.broadcast %288 : vector<1x512xi1> to vector<16x512xi1>
    %290 = vector.broadcast %cst_119 : f32 to vector<16x512xf32>
    %291 = arith.select %289, %287, %290 : vector<16x512xi1>, vector<16x512xf32>
    %c511_i32_120 = arith.constant 511 : i32
    %292 = tpu.dynamic_rotate %271 by %c511_i32_120 dim 1 : vector<16x512xf32>, i32 -> vector<16x512xf32>
    %cst_121 = arith.constant 0.000000e+00 : f32
    %293 = vector.shape_cast %106 : vector<1x512xi1> to vector<1x512xi1>
    %294 = vector.broadcast %293 : vector<1x512xi1> to vector<16x512xi1>
    %295 = vector.broadcast %cst_121 : f32 to vector<16x512xf32>
    %296 = arith.select %294, %292, %295 : vector<16x512xi1>, vector<16x512xf32>
    %c497_i32_122 = arith.constant 497 : i32
    %297 = tpu.dynamic_rotate %271 by %c497_i32_122 dim 1 : vector<16x512xf32>, i32 -> vector<16x512xf32>
    %cst_123 = arith.constant 0.000000e+00 : f32
    %298 = vector.shape_cast %125 : vector<1x512xi1> to vector<1x512xi1>
    %299 = vector.broadcast %298 : vector<1x512xi1> to vector<16x512xi1>
    %300 = vector.broadcast %cst_123 : f32 to vector<16x512xf32>
    %301 = arith.select %299, %297, %300 : vector<16x512xi1>, vector<16x512xf32>
    %c496_i32_124 = arith.constant 496 : i32
    %302 = tpu.dynamic_rotate %271 by %c496_i32_124 dim 1 : vector<16x512xf32>, i32 -> vector<16x512xf32>
    %cst_125 = arith.constant 0.000000e+00 : f32
    %303 = vector.shape_cast %144 : vector<1x512xi1> to vector<1x512xi1>
    %304 = vector.broadcast %303 : vector<1x512xi1> to vector<16x512xi1>
    %305 = vector.broadcast %cst_125 : f32 to vector<16x512xf32>
    %306 = arith.select %304, %302, %305 : vector<16x512xi1>, vector<16x512xf32>
    %c495_i32_126 = arith.constant 495 : i32
    %307 = tpu.dynamic_rotate %271 by %c495_i32_126 dim 1 : vector<16x512xf32>, i32 -> vector<16x512xf32>
    %cst_127 = arith.constant 0.000000e+00 : f32
    %308 = vector.shape_cast %163 : vector<1x512xi1> to vector<1x512xi1>
    %309 = vector.broadcast %308 : vector<1x512xi1> to vector<16x512xi1>
    %310 = vector.broadcast %cst_127 : f32 to vector<16x512xf32>
    %311 = arith.select %309, %307, %310 : vector<16x512xi1>, vector<16x512xf32>
    %312 = tpu.concatenate %276, %281, %286, %291, %271, %296, %301, %306, %311 in 0 : vector<16x512xf32>, vector<16x512xf32>, vector<16x512xf32>, vector<16x512xf32>, vector<16x512xf32>, vector<16x512xf32>, vector<16x512xf32>, vector<16x512xf32>, vector<16x512xf32> -> vector<144x512xf32>
    %c0_128 = arith.constant 0 : index
    %c0_129 = arith.constant 0 : index
    %313 = vector.load %arg9[%c0_128, %c0_129] : memref<16x144xf32, #tpu.memory_space<vmem>>, vector<16x144xf32>
    %cst_130 = arith.constant dense<0.000000e+00> : vector<16x512xf32>
    %314 = tpu.matmul %313, %312, %cst_130 {dimension_numbers = #tpu.dot_dimension_numbers<[1], [0], [0], [1], [0, 0, 1, 1], [], []>} : vector<16x144xf32>, vector<144x512xf32>, vector<16x512xf32> -> vector<16x512xf32>
    %c0_131 = arith.constant 0 : index
    %c0_132 = arith.constant 0 : index
    %315 = vector.load %arg10[%c0_131, %c0_132] : memref<16x1xf32, #tpu.memory_space<vmem>>, vector<16x1xf32>
    %316 = vector.broadcast %315 : vector<16x1xf32> to vector<16x512xf32>
    %317 = arith.mulf %314, %316 : vector<16x512xf32>
    %c0_133 = arith.constant 0 : index
    %c0_134 = arith.constant 0 : index
    %318 = vector.load %arg11[%c0_133, %c0_134] : memref<16x1xf32, #tpu.memory_space<vmem>>, vector<16x1xf32>
    %319 = vector.broadcast %318 : vector<16x1xf32> to vector<16x512xf32>
    %320 = arith.addf %317, %319 : vector<16x512xf32>
    %cst_135 = arith.constant 0.000000e+00 : f32
    %321 = vector.broadcast %cst_135 : f32 to vector<16x512xf32>
    %322 = arith.maximumf %320, %321 : vector<16x512xf32>
    %c17_i32_136 = arith.constant 17 : i32
    %323 = tpu.dynamic_rotate %322 by %c17_i32_136 dim 1 : vector<16x512xf32>, i32 -> vector<16x512xf32>
    %cst_137 = arith.constant 0.000000e+00 : f32
    %324 = vector.shape_cast %30 : vector<1x512xi1> to vector<1x512xi1>
    %325 = vector.broadcast %324 : vector<1x512xi1> to vector<16x512xi1>
    %326 = vector.broadcast %cst_137 : f32 to vector<16x512xf32>
    %327 = arith.select %325, %323, %326 : vector<16x512xi1>, vector<16x512xf32>
    %c16_i32_138 = arith.constant 16 : i32
    %328 = tpu.dynamic_rotate %322 by %c16_i32_138 dim 1 : vector<16x512xf32>, i32 -> vector<16x512xf32>
    %cst_139 = arith.constant 0.000000e+00 : f32
    %329 = vector.shape_cast %49 : vector<1x512xi1> to vector<1x512xi1>
    %330 = vector.broadcast %329 : vector<1x512xi1> to vector<16x512xi1>
    %331 = vector.broadcast %cst_139 : f32 to vector<16x512xf32>
    %332 = arith.select %330, %328, %331 : vector<16x512xi1>, vector<16x512xf32>
    %c15_i32_140 = arith.constant 15 : i32
    %333 = tpu.dynamic_rotate %322 by %c15_i32_140 dim 1 : vector<16x512xf32>, i32 -> vector<16x512xf32>
    %cst_141 = arith.constant 0.000000e+00 : f32
    %334 = vector.shape_cast %68 : vector<1x512xi1> to vector<1x512xi1>
    %335 = vector.broadcast %334 : vector<1x512xi1> to vector<16x512xi1>
    %336 = vector.broadcast %cst_141 : f32 to vector<16x512xf32>
    %337 = arith.select %335, %333, %336 : vector<16x512xi1>, vector<16x512xf32>
    %c1_i32_142 = arith.constant 1 : i32
    %338 = tpu.dynamic_rotate %322 by %c1_i32_142 dim 1 : vector<16x512xf32>, i32 -> vector<16x512xf32>
    %cst_143 = arith.constant 0.000000e+00 : f32
    %339 = vector.shape_cast %87 : vector<1x512xi1> to vector<1x512xi1>
    %340 = vector.broadcast %339 : vector<1x512xi1> to vector<16x512xi1>
    %341 = vector.broadcast %cst_143 : f32 to vector<16x512xf32>
    %342 = arith.select %340, %338, %341 : vector<16x512xi1>, vector<16x512xf32>
    %c511_i32_144 = arith.constant 511 : i32
    %343 = tpu.dynamic_rotate %322 by %c511_i32_144 dim 1 : vector<16x512xf32>, i32 -> vector<16x512xf32>
    %cst_145 = arith.constant 0.000000e+00 : f32
    %344 = vector.shape_cast %106 : vector<1x512xi1> to vector<1x512xi1>
    %345 = vector.broadcast %344 : vector<1x512xi1> to vector<16x512xi1>
    %346 = vector.broadcast %cst_145 : f32 to vector<16x512xf32>
    %347 = arith.select %345, %343, %346 : vector<16x512xi1>, vector<16x512xf32>
    %c497_i32_146 = arith.constant 497 : i32
    %348 = tpu.dynamic_rotate %322 by %c497_i32_146 dim 1 : vector<16x512xf32>, i32 -> vector<16x512xf32>
    %cst_147 = arith.constant 0.000000e+00 : f32
    %349 = vector.shape_cast %125 : vector<1x512xi1> to vector<1x512xi1>
    %350 = vector.broadcast %349 : vector<1x512xi1> to vector<16x512xi1>
    %351 = vector.broadcast %cst_147 : f32 to vector<16x512xf32>
    %352 = arith.select %350, %348, %351 : vector<16x512xi1>, vector<16x512xf32>
    %c496_i32_148 = arith.constant 496 : i32
    %353 = tpu.dynamic_rotate %322 by %c496_i32_148 dim 1 : vector<16x512xf32>, i32 -> vector<16x512xf32>
    %cst_149 = arith.constant 0.000000e+00 : f32
    %354 = vector.shape_cast %144 : vector<1x512xi1> to vector<1x512xi1>
    %355 = vector.broadcast %354 : vector<1x512xi1> to vector<16x512xi1>
    %356 = vector.broadcast %cst_149 : f32 to vector<16x512xf32>
    %357 = arith.select %355, %353, %356 : vector<16x512xi1>, vector<16x512xf32>
    %c495_i32_150 = arith.constant 495 : i32
    %358 = tpu.dynamic_rotate %322 by %c495_i32_150 dim 1 : vector<16x512xf32>, i32 -> vector<16x512xf32>
    %cst_151 = arith.constant 0.000000e+00 : f32
    %359 = vector.shape_cast %163 : vector<1x512xi1> to vector<1x512xi1>
    %360 = vector.broadcast %359 : vector<1x512xi1> to vector<16x512xi1>
    %361 = vector.broadcast %cst_151 : f32 to vector<16x512xf32>
    %362 = arith.select %360, %358, %361 : vector<16x512xi1>, vector<16x512xf32>
    %363 = tpu.concatenate %327, %332, %337, %342, %322, %347, %352, %357, %362 in 0 : vector<16x512xf32>, vector<16x512xf32>, vector<16x512xf32>, vector<16x512xf32>, vector<16x512xf32>, vector<16x512xf32>, vector<16x512xf32>, vector<16x512xf32>, vector<16x512xf32> -> vector<144x512xf32>
    %c0_152 = arith.constant 0 : index
    %c0_153 = arith.constant 0 : index
    %364 = vector.load %arg12[%c0_152, %c0_153] : memref<16x144xf32, #tpu.memory_space<vmem>>, vector<16x144xf32>
    %cst_154 = arith.constant dense<0.000000e+00> : vector<16x512xf32>
    %365 = tpu.matmul %364, %363, %cst_154 {dimension_numbers = #tpu.dot_dimension_numbers<[1], [0], [0], [1], [0, 0, 1, 1], [], []>} : vector<16x144xf32>, vector<144x512xf32>, vector<16x512xf32> -> vector<16x512xf32>
    %c0_155 = arith.constant 0 : index
    %c0_156 = arith.constant 0 : index
    %366 = vector.load %arg13[%c0_155, %c0_156] : memref<16x1xf32, #tpu.memory_space<vmem>>, vector<16x1xf32>
    %367 = vector.broadcast %366 : vector<16x1xf32> to vector<16x512xf32>
    %368 = arith.mulf %365, %367 : vector<16x512xf32>
    %c0_157 = arith.constant 0 : index
    %c0_158 = arith.constant 0 : index
    %369 = vector.load %arg14[%c0_157, %c0_158] : memref<16x1xf32, #tpu.memory_space<vmem>>, vector<16x1xf32>
    %370 = vector.broadcast %369 : vector<16x1xf32> to vector<16x512xf32>
    %371 = arith.addf %368, %370 : vector<16x512xf32>
    %cst_159 = arith.constant 0.000000e+00 : f32
    %372 = vector.broadcast %cst_159 : f32 to vector<16x512xf32>
    %373 = arith.maximumf %371, %372 : vector<16x512xf32>
    %374 = arith.addf %373, %271 : vector<16x512xf32>
    %c17_i32_160 = arith.constant 17 : i32
    %375 = tpu.dynamic_rotate %374 by %c17_i32_160 dim 1 : vector<16x512xf32>, i32 -> vector<16x512xf32>
    %cst_161 = arith.constant 0.000000e+00 : f32
    %376 = vector.shape_cast %30 : vector<1x512xi1> to vector<1x512xi1>
    %377 = vector.broadcast %376 : vector<1x512xi1> to vector<16x512xi1>
    %378 = vector.broadcast %cst_161 : f32 to vector<16x512xf32>
    %379 = arith.select %377, %375, %378 : vector<16x512xi1>, vector<16x512xf32>
    %c16_i32_162 = arith.constant 16 : i32
    %380 = tpu.dynamic_rotate %374 by %c16_i32_162 dim 1 : vector<16x512xf32>, i32 -> vector<16x512xf32>
    %cst_163 = arith.constant 0.000000e+00 : f32
    %381 = vector.shape_cast %49 : vector<1x512xi1> to vector<1x512xi1>
    %382 = vector.broadcast %381 : vector<1x512xi1> to vector<16x512xi1>
    %383 = vector.broadcast %cst_163 : f32 to vector<16x512xf32>
    %384 = arith.select %382, %380, %383 : vector<16x512xi1>, vector<16x512xf32>
    %c15_i32_164 = arith.constant 15 : i32
    %385 = tpu.dynamic_rotate %374 by %c15_i32_164 dim 1 : vector<16x512xf32>, i32 -> vector<16x512xf32>
    %cst_165 = arith.constant 0.000000e+00 : f32
    %386 = vector.shape_cast %68 : vector<1x512xi1> to vector<1x512xi1>
    %387 = vector.broadcast %386 : vector<1x512xi1> to vector<16x512xi1>
    %388 = vector.broadcast %cst_165 : f32 to vector<16x512xf32>
    %389 = arith.select %387, %385, %388 : vector<16x512xi1>, vector<16x512xf32>
    %c1_i32_166 = arith.constant 1 : i32
    %390 = tpu.dynamic_rotate %374 by %c1_i32_166 dim 1 : vector<16x512xf32>, i32 -> vector<16x512xf32>
    %cst_167 = arith.constant 0.000000e+00 : f32
    %391 = vector.shape_cast %87 : vector<1x512xi1> to vector<1x512xi1>
    %392 = vector.broadcast %391 : vector<1x512xi1> to vector<16x512xi1>
    %393 = vector.broadcast %cst_167 : f32 to vector<16x512xf32>
    %394 = arith.select %392, %390, %393 : vector<16x512xi1>, vector<16x512xf32>
    %c511_i32_168 = arith.constant 511 : i32
    %395 = tpu.dynamic_rotate %374 by %c511_i32_168 dim 1 : vector<16x512xf32>, i32 -> vector<16x512xf32>
    %cst_169 = arith.constant 0.000000e+00 : f32
    %396 = vector.shape_cast %106 : vector<1x512xi1> to vector<1x512xi1>
    %397 = vector.broadcast %396 : vector<1x512xi1> to vector<16x512xi1>
    %398 = vector.broadcast %cst_169 : f32 to vector<16x512xf32>
    %399 = arith.select %397, %395, %398 : vector<16x512xi1>, vector<16x512xf32>
    %c497_i32_170 = arith.constant 497 : i32
    %400 = tpu.dynamic_rotate %374 by %c497_i32_170 dim 1 : vector<16x512xf32>, i32 -> vector<16x512xf32>
    %cst_171 = arith.constant 0.000000e+00 : f32
    %401 = vector.shape_cast %125 : vector<1x512xi1> to vector<1x512xi1>
    %402 = vector.broadcast %401 : vector<1x512xi1> to vector<16x512xi1>
    %403 = vector.broadcast %cst_171 : f32 to vector<16x512xf32>
    %404 = arith.select %402, %400, %403 : vector<16x512xi1>, vector<16x512xf32>
    %c496_i32_172 = arith.constant 496 : i32
    %405 = tpu.dynamic_rotate %374 by %c496_i32_172 dim 1 : vector<16x512xf32>, i32 -> vector<16x512xf32>
    %cst_173 = arith.constant 0.000000e+00 : f32
    %406 = vector.shape_cast %144 : vector<1x512xi1> to vector<1x512xi1>
    %407 = vector.broadcast %406 : vector<1x512xi1> to vector<16x512xi1>
    %408 = vector.broadcast %cst_173 : f32 to vector<16x512xf32>
    %409 = arith.select %407, %405, %408 : vector<16x512xi1>, vector<16x512xf32>
    %c495_i32_174 = arith.constant 495 : i32
    %410 = tpu.dynamic_rotate %374 by %c495_i32_174 dim 1 : vector<16x512xf32>, i32 -> vector<16x512xf32>
    %cst_175 = arith.constant 0.000000e+00 : f32
    %411 = vector.shape_cast %163 : vector<1x512xi1> to vector<1x512xi1>
    %412 = vector.broadcast %411 : vector<1x512xi1> to vector<16x512xi1>
    %413 = vector.broadcast %cst_175 : f32 to vector<16x512xf32>
    %414 = arith.select %412, %410, %413 : vector<16x512xi1>, vector<16x512xf32>
    %415 = tpu.concatenate %379, %384, %389, %394, %374, %399, %404, %409, %414 in 0 : vector<16x512xf32>, vector<16x512xf32>, vector<16x512xf32>, vector<16x512xf32>, vector<16x512xf32>, vector<16x512xf32>, vector<16x512xf32>, vector<16x512xf32>, vector<16x512xf32> -> vector<144x512xf32>
    %c0_176 = arith.constant 0 : index
    %c0_177 = arith.constant 0 : index
    %416 = vector.load %arg15[%c0_176, %c0_177] : memref<16x144xf32, #tpu.memory_space<vmem>>, vector<16x144xf32>
    %cst_178 = arith.constant dense<0.000000e+00> : vector<16x512xf32>
    %417 = tpu.matmul %416, %415, %cst_178 {dimension_numbers = #tpu.dot_dimension_numbers<[1], [0], [0], [1], [0, 0, 1, 1], [], []>} : vector<16x144xf32>, vector<144x512xf32>, vector<16x512xf32> -> vector<16x512xf32>
    %c0_179 = arith.constant 0 : index
    %c0_180 = arith.constant 0 : index
    %418 = vector.load %arg16[%c0_179, %c0_180] : memref<16x1xf32, #tpu.memory_space<vmem>>, vector<16x1xf32>
    %419 = vector.broadcast %418 : vector<16x1xf32> to vector<16x512xf32>
    %420 = arith.mulf %417, %419 : vector<16x512xf32>
    %c0_181 = arith.constant 0 : index
    %c0_182 = arith.constant 0 : index
    %421 = vector.load %arg17[%c0_181, %c0_182] : memref<16x1xf32, #tpu.memory_space<vmem>>, vector<16x1xf32>
    %422 = vector.broadcast %421 : vector<16x1xf32> to vector<16x512xf32>
    %423 = arith.addf %420, %422 : vector<16x512xf32>
    %cst_183 = arith.constant 0.000000e+00 : f32
    %424 = vector.broadcast %cst_183 : f32 to vector<16x512xf32>
    %425 = arith.maximumf %423, %424 : vector<16x512xf32>
    %c17_i32_184 = arith.constant 17 : i32
    %426 = tpu.dynamic_rotate %425 by %c17_i32_184 dim 1 : vector<16x512xf32>, i32 -> vector<16x512xf32>
    %cst_185 = arith.constant 0.000000e+00 : f32
    %427 = vector.shape_cast %30 : vector<1x512xi1> to vector<1x512xi1>
    %428 = vector.broadcast %427 : vector<1x512xi1> to vector<16x512xi1>
    %429 = vector.broadcast %cst_185 : f32 to vector<16x512xf32>
    %430 = arith.select %428, %426, %429 : vector<16x512xi1>, vector<16x512xf32>
    %c16_i32_186 = arith.constant 16 : i32
    %431 = tpu.dynamic_rotate %425 by %c16_i32_186 dim 1 : vector<16x512xf32>, i32 -> vector<16x512xf32>
    %cst_187 = arith.constant 0.000000e+00 : f32
    %432 = vector.shape_cast %49 : vector<1x512xi1> to vector<1x512xi1>
    %433 = vector.broadcast %432 : vector<1x512xi1> to vector<16x512xi1>
    %434 = vector.broadcast %cst_187 : f32 to vector<16x512xf32>
    %435 = arith.select %433, %431, %434 : vector<16x512xi1>, vector<16x512xf32>
    %c15_i32_188 = arith.constant 15 : i32
    %436 = tpu.dynamic_rotate %425 by %c15_i32_188 dim 1 : vector<16x512xf32>, i32 -> vector<16x512xf32>
    %cst_189 = arith.constant 0.000000e+00 : f32
    %437 = vector.shape_cast %68 : vector<1x512xi1> to vector<1x512xi1>
    %438 = vector.broadcast %437 : vector<1x512xi1> to vector<16x512xi1>
    %439 = vector.broadcast %cst_189 : f32 to vector<16x512xf32>
    %440 = arith.select %438, %436, %439 : vector<16x512xi1>, vector<16x512xf32>
    %c1_i32_190 = arith.constant 1 : i32
    %441 = tpu.dynamic_rotate %425 by %c1_i32_190 dim 1 : vector<16x512xf32>, i32 -> vector<16x512xf32>
    %cst_191 = arith.constant 0.000000e+00 : f32
    %442 = vector.shape_cast %87 : vector<1x512xi1> to vector<1x512xi1>
    %443 = vector.broadcast %442 : vector<1x512xi1> to vector<16x512xi1>
    %444 = vector.broadcast %cst_191 : f32 to vector<16x512xf32>
    %445 = arith.select %443, %441, %444 : vector<16x512xi1>, vector<16x512xf32>
    %c511_i32_192 = arith.constant 511 : i32
    %446 = tpu.dynamic_rotate %425 by %c511_i32_192 dim 1 : vector<16x512xf32>, i32 -> vector<16x512xf32>
    %cst_193 = arith.constant 0.000000e+00 : f32
    %447 = vector.shape_cast %106 : vector<1x512xi1> to vector<1x512xi1>
    %448 = vector.broadcast %447 : vector<1x512xi1> to vector<16x512xi1>
    %449 = vector.broadcast %cst_193 : f32 to vector<16x512xf32>
    %450 = arith.select %448, %446, %449 : vector<16x512xi1>, vector<16x512xf32>
    %c497_i32_194 = arith.constant 497 : i32
    %451 = tpu.dynamic_rotate %425 by %c497_i32_194 dim 1 : vector<16x512xf32>, i32 -> vector<16x512xf32>
    %cst_195 = arith.constant 0.000000e+00 : f32
    %452 = vector.shape_cast %125 : vector<1x512xi1> to vector<1x512xi1>
    %453 = vector.broadcast %452 : vector<1x512xi1> to vector<16x512xi1>
    %454 = vector.broadcast %cst_195 : f32 to vector<16x512xf32>
    %455 = arith.select %453, %451, %454 : vector<16x512xi1>, vector<16x512xf32>
    %c496_i32_196 = arith.constant 496 : i32
    %456 = tpu.dynamic_rotate %425 by %c496_i32_196 dim 1 : vector<16x512xf32>, i32 -> vector<16x512xf32>
    %cst_197 = arith.constant 0.000000e+00 : f32
    %457 = vector.shape_cast %144 : vector<1x512xi1> to vector<1x512xi1>
    %458 = vector.broadcast %457 : vector<1x512xi1> to vector<16x512xi1>
    %459 = vector.broadcast %cst_197 : f32 to vector<16x512xf32>
    %460 = arith.select %458, %456, %459 : vector<16x512xi1>, vector<16x512xf32>
    %c495_i32_198 = arith.constant 495 : i32
    %461 = tpu.dynamic_rotate %425 by %c495_i32_198 dim 1 : vector<16x512xf32>, i32 -> vector<16x512xf32>
    %cst_199 = arith.constant 0.000000e+00 : f32
    %462 = vector.shape_cast %163 : vector<1x512xi1> to vector<1x512xi1>
    %463 = vector.broadcast %462 : vector<1x512xi1> to vector<16x512xi1>
    %464 = vector.broadcast %cst_199 : f32 to vector<16x512xf32>
    %465 = arith.select %463, %461, %464 : vector<16x512xi1>, vector<16x512xf32>
    %466 = tpu.concatenate %430, %435, %440, %445, %425, %450, %455, %460, %465 in 0 : vector<16x512xf32>, vector<16x512xf32>, vector<16x512xf32>, vector<16x512xf32>, vector<16x512xf32>, vector<16x512xf32>, vector<16x512xf32>, vector<16x512xf32>, vector<16x512xf32> -> vector<144x512xf32>
    %c0_200 = arith.constant 0 : index
    %c0_201 = arith.constant 0 : index
    %467 = vector.load %arg18[%c0_200, %c0_201] : memref<16x144xf32, #tpu.memory_space<vmem>>, vector<16x144xf32>
    %cst_202 = arith.constant dense<0.000000e+00> : vector<16x512xf32>
    %468 = tpu.matmul %467, %466, %cst_202 {dimension_numbers = #tpu.dot_dimension_numbers<[1], [0], [0], [1], [0, 0, 1, 1], [], []>} : vector<16x144xf32>, vector<144x512xf32>, vector<16x512xf32> -> vector<16x512xf32>
    %c0_203 = arith.constant 0 : index
    %c0_204 = arith.constant 0 : index
    %469 = vector.load %arg19[%c0_203, %c0_204] : memref<16x1xf32, #tpu.memory_space<vmem>>, vector<16x1xf32>
    %470 = vector.broadcast %469 : vector<16x1xf32> to vector<16x512xf32>
    %471 = arith.mulf %468, %470 : vector<16x512xf32>
    %c0_205 = arith.constant 0 : index
    %c0_206 = arith.constant 0 : index
    %472 = vector.load %arg20[%c0_205, %c0_206] : memref<16x1xf32, #tpu.memory_space<vmem>>, vector<16x1xf32>
    %473 = vector.broadcast %472 : vector<16x1xf32> to vector<16x512xf32>
    %474 = arith.addf %471, %473 : vector<16x512xf32>
    %cst_207 = arith.constant 0.000000e+00 : f32
    %475 = vector.broadcast %cst_207 : f32 to vector<16x512xf32>
    %476 = arith.maximumf %474, %475 : vector<16x512xf32>
    %477 = arith.addf %476, %374 : vector<16x512xf32>
    %c0_208 = arith.constant 0 : index
    %c0_209 = arith.constant 0 : index
    %478 = vector.load %arg21[%c0_208, %c0_209] : memref<1x16xf32, #tpu.memory_space<vmem>>, vector<1x16xf32>
    %cst_210 = arith.constant dense<0.000000e+00> : vector<1x512xf32>
    %479 = tpu.matmul %478, %477, %cst_210 {dimension_numbers = #tpu.dot_dimension_numbers<[1], [0], [0], [1], [0, 0, 1, 1], [], []>} : vector<1x16xf32>, vector<16x512xf32>, vector<1x512xf32> -> vector<1x512xf32>
    %c0_211 = arith.constant 0 : index
    %c0_212 = arith.constant 0 : index
    %480 = vector.load %arg22[%c0_211, %c0_212] : memref<1x1xf32, #tpu.memory_space<vmem>>, vector<1x1xf32>
    %481 = vector.broadcast %480 : vector<1x1xf32> to vector<1x512xf32>
    %482 = arith.addf %479, %481 : vector<1x512xf32>
    %c0_213 = arith.constant 0 : index
    %c0_214 = arith.constant 0 : index
    %483 = vector.load %arg23[%c0_213, %c0_214] : memref<1x512xf32, #tpu.memory_space<vmem>>, vector<1x512xf32>
    tpu.vector_store %arg23[%c0_213, %c0_214], %482 {strides = array<i32>} : memref<1x512xf32, #tpu.memory_space<vmem>>, vector<1x512xf32>,
    return
  }
}

</mosaic_0001>

<llo_original>
// kernel: resnet6_forward.1
$region0: #{resnet6_forward.1}
  #allocation0 [shape = 'u32[]', space=smem, size = 0x4, offset = 0x4, fixed_abs, tag = 'smem constant byte address 0x4 - core index']
  #allocation1 [shape = 'u32[144,128]{1,0:T(1,128)}', space=vmem, size = 0x12000, scoped, tag = 'internal scratch']
  #allocation2 [shape = 'f32[1,1]{1,0:T(1,128)S(1)}', space=vmem, size = 0x200, scoped, tag = 'scoped memory for resnet6_forward.1']
  %s0 = inlined_call_operand.vmem [shape: f32[2,8,256], index: 0, kind: input, shape index: {}]
  %s1 = inlined_call_operand.vmem [shape: f32[16,72], index: 1, kind: input, shape index: {}]
  %s2 = inlined_call_operand.vmem [shape: f32[16,1], index: 2, kind: input, shape index: {}]
  %s3 = inlined_call_operand.vmem [shape: f32[16,1], index: 3, kind: input, shape index: {}]
  %s4 = inlined_call_operand.vmem [shape: f32[16,144], index: 4, kind: input, shape index: {}]
  %s5 = inlined_call_operand.vmem [shape: f32[16,1], index: 5, kind: input, shape index: {}]
  %s6 = inlined_call_operand.vmem [shape: f32[16,1], index: 6, kind: input, shape index: {}]
  %s7 = inlined_call_operand.vmem [shape: f32[16,8], index: 7, kind: input, shape index: {}]
  %s8 = inlined_call_operand.vmem [shape: f32[16,1], index: 8, kind: input, shape index: {}]
  %s9 = inlined_call_operand.vmem [shape: f32[16,144], index: 9, kind: input, shape index: {}]
  %s10 = inlined_call_operand.vmem [shape: f32[16,1], index: 10, kind: input, shape index: {}]
  %s11 = inlined_call_operand.vmem [shape: f32[16,1], index: 11, kind: input, shape index: {}]
  %s12 = inlined_call_operand.vmem [shape: f32[16,144], index: 12, kind: input, shape index: {}]
  %s13 = inlined_call_operand.vmem [shape: f32[16,1], index: 13, kind: input, shape index: {}]
  %s14 = inlined_call_operand.vmem [shape: f32[16,1], index: 14, kind: input, shape index: {}]
  %s15 = inlined_call_operand.vmem [shape: f32[16,144], index: 15, kind: input, shape index: {}]
  %s16 = inlined_call_operand.vmem [shape: f32[16,1], index: 16, kind: input, shape index: {}]
  %s17 = inlined_call_operand.vmem [shape: f32[16,1], index: 17, kind: input, shape index: {}]
  %s18 = inlined_call_operand.vmem [shape: f32[16,144], index: 18, kind: input, shape index: {}]
  %s19 = inlined_call_operand.vmem [shape: f32[16,1], index: 19, kind: input, shape index: {}]
  %s20 = inlined_call_operand.vmem [shape: f32[16,1], index: 20, kind: input, shape index: {}]
  %s21 = inlined_call_operand.vmem [shape: f32[1,16], index: 21, kind: input, shape index: {}]
  %s22 = inlined_call_operand.<no memory space> [shape: f32[1,1], index: 22, kind: input, shape index: {}]
  %s23 = inlined_call_operand.vmem [shape: f32[1,512], index: 23, kind: output, shape index: {}]
  %s24 = sld [smem:[#allocation0]]
  $region102: #{resnet6_forward.1} parent=0
    _
  %s26 = ssub.s32 1, %s24
  %s27 = scalar_select 0, %s26, %s24
  %v28 = vstv %s22
  %29 = vst [vmem:[#allocation2] sm:$0x1] %v28
  // Predicated region
  $region2: #{resnet6_forward.1} parent=0 // pred_check
    _
  $region3: #{resnet6_forward.1} parent=0 // pred_check_branch
    %31 = sbr.rel (0) target = $region5
  $region4: #{resnet6_forward.1} parent=0 // pred_region
    _
  $region5: #{resnet6_forward.1} parent=0 // pred_fallthru
    _
  // Predicated region
  $region6: #{resnet6_forward.1} parent=0 // pred_check
    _
  $region7: #{resnet6_forward.1} parent=0 // pred_check_branch
    %33 = sbr.rel (0) target = $region9
  $region8: #{resnet6_forward.1} parent=0 // pred_region
    _
  $region9: #{resnet6_forward.1} parent=0 // pred_fallthru
    _
  // Predicated region
  $region10: #{resnet6_forward.1} parent=0 // pred_check
    _
  $region11: #{resnet6_forward.1} parent=0 // pred_check_branch
    %35 = sbr.rel (0) target = $region13
  $region12: #{resnet6_forward.1} parent=0 // pred_region
    _
  $region13: #{resnet6_forward.1} parent=0 // pred_fallthru
    _
  // Predicated region
  $region14: #{resnet6_forward.1} parent=0 // pred_check
    _
  $region15: #{resnet6_forward.1} parent=0 // pred_check_branch
    %37 = sbr.rel (0) target = $region17
  $region16: #{resnet6_forward.1} parent=0 // pred_region
    _
  $region17: #{resnet6_forward.1} parent=0 // pred_fallthru
    _
  // Predicated region
  $region18: #{resnet6_forward.1} parent=0 // pred_check
    _
  $region19: #{resnet6_forward.1} parent=0 // pred_check_branch
    %39 = sbr.rel (0) target = $region21
  $region20: #{resnet6_forward.1} parent=0 // pred_region
    _
  $region21: #{resnet6_forward.1} parent=0 // pred_fallthru
    _
  // Predicated region
  $region22: #{resnet6_forward.1} parent=0 // pred_check
    _
  $region23: #{resnet6_forward.1} parent=0 // pred_check_branch
    %41 = sbr.rel (0) target = $region25
  $region24: #{resnet6_forward.1} parent=0 // pred_region
    _
  $region25: #{resnet6_forward.1} parent=0 // pred_fallthru
    _
  // Predicated region
  $region26: #{resnet6_forward.1} parent=0 // pred_check
    _
  $region27: #{resnet6_forward.1} parent=0 // pred_check_branch
    %43 = sbr.rel (0) target = $region29
  $region28: #{resnet6_forward.1} parent=0 // pred_region
    _
  $region29: #{resnet6_forward.1} parent=0 // pred_fallthru
    _
  // Predicated region
  $region30: #{resnet6_forward.1} parent=0 // pred_check
    _
  $region31: #{resnet6_forward.1} parent=0 // pred_check_branch
    %45 = sbr.rel (0) target = $region33
  $region32: #{resnet6_forward.1} parent=0 // pred_region
    _
  $region33: #{resnet6_forward.1} parent=0 // pred_fallthru
    _
  // Predicated region
  $region34: #{resnet6_forward.1} parent=0 // pred_check
    _
  $region35: #{resnet6_forward.1} parent=0 // pred_check_branch
    %47 = sbr.rel (0) target = $region37
  $region36: #{resnet6_forward.1} parent=0 // pred_region
    _
  $region37: #{resnet6_forward.1} parent=0 // pred_fallthru
    _
  // Predicated region
  $region38: #{resnet6_forward.1} parent=0 // pred_check
    _
  $region39: #{resnet6_forward.1} parent=0 // pred_check_branch
    %49 = sbr.rel (0) target = $region41
  $region40: #{resnet6_forward.1} parent=0 // pred_region
    _
  $region41: #{resnet6_forward.1} parent=0 // pred_fallthru
    _
  // Predicated region
  $region42: #{resnet6_forward.1} parent=0 // pred_check
    _
  $region43: #{resnet6_forward.1} parent=0 // pred_check_branch
    %51 = sbr.rel (0) target = $region45
  $region44: #{resnet6_forward.1} parent=0 // pred_region
    _
  $region45: #{resnet6_forward.1} parent=0 // pred_fallthru
    _
  // Predicated region
  $region46: #{resnet6_forward.1} parent=0 // pred_check
    _
  $region47: #{resnet6_forward.1} parent=0 // pred_check_branch
    %53 = sbr.rel (0) target = $region49
  $region48: #{resnet6_forward.1} parent=0 // pred_region
    _
  $region49: #{resnet6_forward.1} parent=0 // pred_fallthru
    _
  // Predicated region
  $region50: #{resnet6_forward.1} parent=0 // pred_check
    _
  $region51: #{resnet6_forward.1} parent=0 // pred_check_branch
    %55 = sbr.rel (0) target = $region53
  $region52: #{resnet6_forward.1} parent=0 // pred_region
    _
  $region53: #{resnet6_forward.1} parent=0 // pred_fallthru
    _
  // Predicated region
  $region54: #{resnet6_forward.1} parent=0 // pred_check
    _
  $region55: #{resnet6_forward.1} parent=0 // pred_check_branch
    %57 = sbr.rel (0) target = $region57
  $region56: #{resnet6_forward.1} parent=0 // pred_region
    _
  $region57: #{resnet6_forward.1} parent=0 // pred_fallthru
    _
  // Predicated region
  $region58: #{resnet6_forward.1} parent=0 // pred_check
    _
  $region59: #{resnet6_forward.1} parent=0 // pred_check_branch
    %59 = sbr.rel (0) target = $region61
  $region60: #{resnet6_forward.1} parent=0 // pred_region
    _
  $region61: #{resnet6_forward.1} parent=0 // pred_fallthru
    _
  // Predicated region
  $region62: #{resnet6_forward.1} parent=0 // pred_check
    _
  $region63: #{resnet6_forward.1} parent=0 // pred_check_branch
    %61 = sbr.rel (0) target = $region65
  $region64: #{resnet6_forward.1} parent=0 // pred_region
    _
  $region65: #{resnet6_forward.1} parent=0 // pred_fallthru
    _
  // Predicated region
  $region66: #{resnet6_forward.1} parent=0 // pred_check
    _
  $region67: #{resnet6_forward.1} parent=0 // pred_check_branch
    %63 = sbr.rel (0) target = $region69
  $region68: #{resnet6_forward.1} parent=0 // pred_region
    _
  $region69: #{resnet6_forward.1} parent=0 // pred_fallthru
    _
  // Predicated region
  $region70: #{resnet6_forward.1} parent=0 // pred_check
    _
  $region71: #{resnet6_forward.1} parent=0 // pred_check_branch
    %65 = sbr.rel (0) target = $region73
  $region72: #{resnet6_forward.1} parent=0 // pred_region
    _
  $region73: #{resnet6_forward.1} parent=0 // pred_fallthru
    _
  // Predicated region
  $region74: #{resnet6_forward.1} parent=0 // pred_check
    _
  $region75: #{resnet6_forward.1} parent=0 // pred_check_branch
    %67 = sbr.rel (0) target = $region77
  $region76: #{resnet6_forward.1} parent=0 // pred_region
    _
  $region77: #{resnet6_forward.1} parent=0 // pred_fallthru
    _
  // Predicated region
  $region78: #{resnet6_forward.1} parent=0 // pred_check
    _
  $region79: #{resnet6_forward.1} parent=0 // pred_check_branch
    %69 = sbr.rel (0) target = $region81
  $region80: #{resnet6_forward.1} parent=0 // pred_region
    _
  $region81: #{resnet6_forward.1} parent=0 // pred_fallthru
    _
  // Predicated region
  $region82: #{resnet6_forward.1} parent=0 // pred_check
    _
  $region83: #{resnet6_forward.1} parent=0 // pred_check_branch
    %71 = sbr.rel (0) target = $region85
  $region84: #{resnet6_forward.1} parent=0 // pred_region
    _
  $region85: #{resnet6_forward.1} parent=0 // pred_fallthru
    _
  // Predicated region
  $region86: #{resnet6_forward.1} parent=0 // pred_check
    _
  $region87: #{resnet6_forward.1} parent=0 // pred_check_branch
    %73 = sbr.rel (0) target = $region89
  $region88: #{resnet6_forward.1} parent=0 // pred_region
    _
  $region89: #{resnet6_forward.1} parent=0 // pred_fallthru
    _
  // Predicated region
  $region90: #{resnet6_forward.1} parent=0 // pred_check
    _
  $region91: #{resnet6_forward.1} parent=0 // pred_check_branch
    %75 = sbr.rel (0) target = $region93
  $region92: #{resnet6_forward.1} parent=0 // pred_region
    _
  $region93: #{resnet6_forward.1} parent=0 // pred_fallthru
    _
  %v76 = vld [vmem:[%s0] sm:$0xff]
  %v77 = vld [vmem:[%s0 + $0x8] sm:$0xff]
  %s78 = scalar_lea.vmem %s0, 16
  %v79 = vld [vmem:[%s78] sm:$0xff]
  %v80 = vld [vmem:[%s78 + $0x8] sm:$0xff]
  %v81 = vlaneseq
  %v82 = vand.u32 %v81, 127
  %v83 = vadd.s32 %v82, 128
  %v84 = vadd.s32 %v82, 256
  %v85 = vadd.s32 %v82, 384
  %v86 = vand.u32 %v82, 15
  %v87 = vand.u32 %v83, 15
  %v88 = vand.u32 %v84, 15
  %v89 = vand.u32 %v85, 15
  %v90 = vshra.s32 %v82, 4
  %v91 = vshra.s32 %v83, 4
  %v92 = vshra.s32 %v84, 4
  %v93 = vshra.s32 %v85, 4
  %v94 = vand.u32 %v90, 15
  %v95 = vand.u32 %v91, 15
  %v96 = vand.u32 %v92, 15
  %v97 = vand.u32 %v93, 15
  %v98 = vadd.s32 %v94, 4294967295
  %v99 = vadd.s32 %v95, 4294967295
  %v100 = vadd.s32 %v96, 4294967295
  %v101 = vadd.s32 %v97, 4294967295
  %vm102 = vcmp.ge.s32.totalorder %v98, 0
  %vm103 = vcmp.ge.s32.totalorder %v99, 0
  %vm104 = vcmp.ge.s32.totalorder %v100, 0
  %vm105 = vcmp.ge.s32.totalorder %v101, 0
  %vm106 = vcmp.lt.s32.totalorder %v98, 16
  %vm107 = vcmp.lt.s32.totalorder %v99, 16
  %vm108 = vcmp.lt.s32.totalorder %v100, 16
  %vm109 = vcmp.lt.s32.totalorder %v101, 16
  %vm110 = vmand %vm102, %vm106
  %vm111 = vmand %vm103, %vm107
  %vm112 = vmand %vm104, %vm108
  %vm113 = vmand %vm105, %vm109
  %v114 = vadd.s32 %v86, 4294967295
  %v115 = vadd.s32 %v87, 4294967295
  %v116 = vadd.s32 %v88, 4294967295
  %v117 = vadd.s32 %v89, 4294967295
  %vm118 = vcmp.ge.s32.totalorder %v114, 0
  %vm119 = vcmp.ge.s32.totalorder %v115, 0
  %vm120 = vcmp.ge.s32.totalorder %v116, 0
  %vm121 = vcmp.ge.s32.totalorder %v117, 0
  %vm122 = vmand %vm110, %vm118
  %vm123 = vmand %vm111, %vm119
  %vm124 = vmand %vm112, %vm120
  %vm125 = vmand %vm113, %vm121
  %vm126 = vcmp.lt.s32.totalorder %v114, 16
  %vm127 = vcmp.lt.s32.totalorder %v115, 16
  %vm128 = vcmp.lt.s32.totalorder %v116, 16
  %vm129 = vcmp.lt.s32.totalorder %v117, 16
  %vm130 = vmand %vm122, %vm126
  %vm131 = vmand %vm123, %vm127
  %vm132 = vmand %vm124, %vm128
  %vm133 = vmand %vm125, %vm129
  %vm134 = vcmp.ge.s32.totalorder %v86, 0
  %vm135 = vcmp.ge.s32.totalorder %v87, 0
  %vm136 = vcmp.ge.s32.totalorder %v88, 0
  %vm137 = vcmp.ge.s32.totalorder %v89, 0
  %vm138 = vmand %vm110, %vm134
  %vm139 = vmand %vm111, %vm135
  %vm140 = vmand %vm112, %vm136
  %vm141 = vmand %vm113, %vm137
  %vm142 = vcmp.lt.s32.totalorder %v86, 16
  %vm143 = vcmp.lt.s32.totalorder %v87, 16
  %vm144 = vcmp.lt.s32.totalorder %v88, 16
  %vm145 = vcmp.lt.s32.totalorder %v89, 16
  %vm146 = vmand %vm138, %vm142
  %vm147 = vmand %vm139, %vm143
  %vm148 = vmand %vm140, %vm144
  %vm149 = vmand %vm141, %vm145
  %v150 = vadd.s32 %v86, 1
  %v151 = vadd.s32 %v87, 1
  %v152 = vadd.s32 %v88, 1
  %v153 = vadd.s32 %v89, 1
  %vm154 = vcmp.ge.s32.totalorder %v150, 0
  %vm155 = vcmp.ge.s32.totalorder %v151, 0
  %vm156 = vcmp.ge.s32.totalorder %v152, 0
  %vm157 = vcmp.ge.s32.totalorder %v153, 0
  %vm158 = vmand %vm110, %vm154
  %vm159 = vmand %vm111, %vm155
  %vm160 = vmand %vm112, %vm156
  %vm161 = vmand %vm113, %vm157
  %vm162 = vcmp.lt.s32.totalorder %v150, 16
  %vm163 = vcmp.lt.s32.totalorder %v151, 16
  %vm164 = vcmp.lt.s32.totalorder %v152, 16
  %vm165 = vcmp.lt.s32.totalorder %v153, 16
  %vm166 = vmand %vm158, %vm162
  %vm167 = vmand %vm159, %vm163
  %vm168 = vmand %vm160, %vm164
  %vm169 = vmand %vm161, %vm165
  %vm170 = vcmp.ge.s32.totalorder %v94, 0
  %vm171 = vcmp.ge.s32.totalorder %v95, 0
  %vm172 = vcmp.ge.s32.totalorder %v96, 0
  %vm173 = vcmp.ge.s32.totalorder %v97, 0
  %vm174 = vcmp.lt.s32.totalorder %v94, 16
  %vm175 = vcmp.lt.s32.totalorder %v95, 16
  %vm176 = vcmp.lt.s32.totalorder %v96, 16
  %vm177 = vcmp.lt.s32.totalorder %v97, 16
  %vm178 = vmand %vm170, %vm174
  %vm179 = vmand %vm171, %vm175
  %vm180 = vmand %vm172, %vm176
  %vm181 = vmand %vm173, %vm177
  %vm182 = vmand %vm178, %vm118
  %vm183 = vmand %vm179, %vm119
  %vm184 = vmand %vm180, %vm120
  %vm185 = vmand %vm181, %vm121
  %vm186 = vmand %vm182, %vm126
  %vm187 = vmand %vm183, %vm127
  %vm188 = vmand %vm184, %vm128
  %vm189 = vmand %vm185, %vm129
  %vm190 = vmand %vm178, %vm154
  %vm191 = vmand %vm179, %vm155
  %vm192 = vmand %vm180, %vm156
  %vm193 = vmand %vm181, %vm157
  %vm194 = vmand %vm190, %vm162
  %vm195 = vmand %vm191, %vm163
  %vm196 = vmand %vm192, %vm164
  %vm197 = vmand %vm193, %vm165
  %v198 = vadd.s32 %v94, 1
  %v199 = vadd.s32 %v95, 1
  %v200 = vadd.s32 %v96, 1
  %v201 = vadd.s32 %v97, 1
  %vm202 = vcmp.ge.s32.totalorder %v198, 0
  %vm203 = vcmp.ge.s32.totalorder %v199, 0
  %vm204 = vcmp.ge.s32.totalorder %v200, 0
  %vm205 = vcmp.ge.s32.totalorder %v201, 0
  %vm206 = vcmp.lt.s32.totalorder %v198, 16
  %vm207 = vcmp.lt.s32.totalorder %v199, 16
  %vm208 = vcmp.lt.s32.totalorder %v200, 16
  %vm209 = vcmp.lt.s32.totalorder %v201, 16
  %vm210 = vmand %vm202, %vm206
  %vm211 = vmand %vm203, %vm207
  %vm212 = vmand %vm204, %vm208
  %vm213 = vmand %vm205, %vm209
  %vm214 = vmand %vm210, %vm118
  %vm215 = vmand %vm211, %vm119
  %vm216 = vmand %vm212, %vm120
  %vm217 = vmand %vm213, %vm121
  %vm218 = vmand %vm214, %vm126
  %vm219 = vmand %vm215, %vm127
  %vm220 = vmand %vm216, %vm128
  %vm221 = vmand %vm217, %vm129
  %vm222 = vmand %vm210, %vm134
  %vm223 = vmand %vm211, %vm135
  %vm224 = vmand %vm212, %vm136
  %vm225 = vmand %vm213, %vm137
  %vm226 = vmand %vm222, %vm142
  %vm227 = vmand %vm223, %vm143
  %vm228 = vmand %vm224, %vm144
  %vm229 = vmand %vm225, %vm145
  %vm230 = vmand %vm210, %vm154
  %vm231 = vmand %vm211, %vm155
  %vm232 = vmand %vm212, %vm156
  %vm233 = vmand %vm213, %vm157
  %vm234 = vmand %vm230, %vm162
  %vm235 = vmand %vm231, %vm163
  %vm236 = vmand %vm232, %vm164
  %vm237 = vmand %vm233, %vm165
  %238 = vrot.lane.b32.xlu0 %v76, 17
  %v239 = vpop.permute.xlu0 %238
  %240 = vrot.lane.b32.xlu0 %v77, 17
  %v241 = vpop.permute.xlu0 %240
  %242 = vrot.lane.b32.xlu0 %v79, 17
  %v243 = vpop.permute.xlu0 %242
  %244 = vrot.lane.b32.xlu0 %v80, 17
  %v245 = vpop.permute.xlu0 %244
  %vm246 = vcmp.lt.s32.totalorder %v82, 17
  %v247 = vsel %vm246, %v243, %v245
  %v248 = vsel %vm246, %v241, %v243
  %v249 = vsel %vm246, %v239, %v241
  %v250 = vsel %vm246, %v245, %v239
  %v251 = vsel %vm130, 1, 0
  %v252 = vsel %vm131, 1, 0
  %v253 = vsel %vm132, 1, 0
  %v254 = vsel %vm133, 1, 0
  %vm255 = vcmp.eq.s32.totalorder %v251, 1
  %vm256 = vcmp.eq.s32.totalorder %v252, 1
  %vm257 = vcmp.eq.s32.totalorder %v253, 1
  %vm258 = vcmp.eq.s32.totalorder %v254, 1
  %v259 = vsel %vm255, %v250, 0.0
  %v260 = vsel %vm256, %v249, 0.0
  %v261 = vsel %vm257, %v248, 0.0
  %v262 = vsel %vm258, %v247, 0.0
  %263 = vrot.lane.b32.xlu0 %v76, 16
  %v264 = vpop.permute.xlu0 %263
  %265 = vrot.lane.b32.xlu0 %v77, 16
  %v266 = vpop.permute.xlu0 %265
  %267 = vrot.lane.b32.xlu0 %v79, 16
  %v268 = vpop.permute.xlu0 %267
  %269 = vrot.lane.b32.xlu0 %v80, 16
  %v270 = vpop.permute.xlu0 %269
  %vm271 = vcmp.lt.s32.totalorder %v82, 16
  %v272 = vsel %vm271, %v268, %v270
  %v273 = vsel %vm271, %v266, %v268
  %v274 = vsel %vm271, %v264, %v266
  %v275 = vsel %vm271, %v270, %v264
  %v276 = vsel %vm146, 1, 0
  %v277 = vsel %vm147, 1, 0
  %v278 = vsel %vm148, 1, 0
  %v279 = vsel %vm149, 1, 0
  %vm280 = vcmp.eq.s32.totalorder %v276, 1
  %vm281 = vcmp.eq.s32.totalorder %v277, 1
  %vm282 = vcmp.eq.s32.totalorder %v278, 1
  %vm283 = vcmp.eq.s32.totalorder %v279, 1
  %v284 = vsel %vm280, %v275, 0.0
  %v285 = vsel %vm281, %v274, 0.0
  %v286 = vsel %vm282, %v273, 0.0
  %v287 = vsel %vm283, %v272, 0.0
  %288 = vrot.lane.b32.xlu0 %v76, 15
  %v289 = vpop.permute.xlu0 %288
  %290 = vrot.lane.b32.xlu0 %v77, 15
  %v291 = vpop.permute.xlu0 %290
  %292 = vrot.lane.b32.xlu0 %v79, 15
  %v293 = vpop.permute.xlu0 %292
  %294 = vrot.lane.b32.xlu0 %v80, 15
  %v295 = vpop.permute.xlu0 %294
  %vm296 = vcmp.lt.s32.totalorder %v82, 15
  %v297 = vsel %vm296, %v293, %v295
  %v298 = vsel %vm296, %v291, %v293
  %v299 = vsel %vm296, %v289, %v291
  %v300 = vsel %vm296, %v295, %v289
  %v301 = vsel %vm166, 1, 0
  %v302 = vsel %vm167, 1, 0
  %v303 = vsel %vm168, 1, 0
  %v304 = vsel %vm169, 1, 0
  %vm305 = vcmp.eq.s32.totalorder %v301, 1
  %vm306 = vcmp.eq.s32.totalorder %v302, 1
  %vm307 = vcmp.eq.s32.totalorder %v303, 1
  %vm308 = vcmp.eq.s32.totalorder %v304, 1
  %v309 = vsel %vm305, %v300, 0.0
  %v310 = vsel %vm306, %v299, 0.0
  %v311 = vsel %vm307, %v298, 0.0
  %v312 = vsel %vm308, %v297, 0.0
  %313 = vrot.lane.b32.xlu0 %v76, 1
  %v314 = vpop.permute.xlu0 %313
  %315 = vrot.lane.b32.xlu0 %v77, 1
  %v316 = vpop.permute.xlu0 %315
  %317 = vrot.lane.b32.xlu0 %v79, 1
  %v318 = vpop.permute.xlu0 %317
  %319 = vrot.lane.b32.xlu0 %v80, 1
  %v320 = vpop.permute.xlu0 %319
  %vm321 = vcmp.lt.s32.totalorder %v82, 1
  %v322 = vsel %vm321, %v318, %v320
  %v323 = vsel %vm321, %v316, %v318
  %v324 = vsel %vm321, %v314, %v316
  %v325 = vsel %vm321, %v320, %v314
  %v326 = vsel %vm186, 1, 0
  %v327 = vsel %vm187, 1, 0
  %v328 = vsel %vm188, 1, 0
  %v329 = vsel %vm189, 1, 0
  %vm330 = vcmp.eq.s32.totalorder %v326, 1
  %vm331 = vcmp.eq.s32.totalorder %v327, 1
  %vm332 = vcmp.eq.s32.totalorder %v328, 1
  %vm333 = vcmp.eq.s32.totalorder %v329, 1
  %v334 = vsel %vm330, %v325, 0.0
  %v335 = vsel %vm331, %v324, 0.0
  %v336 = vsel %vm332, %v323, 0.0
  %v337 = vsel %vm333, %v322, 0.0
  %338 = vrot.lane.b32.xlu0 %v76, 127
  %v339 = vpop.permute.xlu0 %338
  %340 = vrot.lane.b32.xlu0 %v77, 127
  %v341 = vpop.permute.xlu0 %340
  %342 = vrot.lane.b32.xlu0 %v79, 127
  %v343 = vpop.permute.xlu0 %342
  %344 = vrot.lane.b32.xlu0 %v80, 127
  %v345 = vpop.permute.xlu0 %344
  %vm346 = vcmp.lt.s32.totalorder %v82, 127
  %v347 = vsel %vm346, %v343, %v345
  %v348 = vsel %vm346, %v341, %v343
  %v349 = vsel %vm346, %v339, %v341
  %v350 = vsel %vm346, %v345, %v339
  %v351 = vsel %vm194, 1, 0
  %v352 = vsel %vm195, 1, 0
  %v353 = vsel %vm196, 1, 0
  %v354 = vsel %vm197, 1, 0
  %vm355 = vcmp.eq.s32.totalorder %v351, 1
  %vm356 = vcmp.eq.s32.totalorder %v352, 1
  %vm357 = vcmp.eq.s32.totalorder %v353, 1
  %vm358 = vcmp.eq.s32.totalorder %v354, 1
  %v359 = vsel %vm355, %v349, 0.0
  %v360 = vsel %vm356, %v348, 0.0
  %v361 = vsel %vm357, %v347, 0.0
  %v362 = vsel %vm358, %v350, 0.0
  %363 = vrot.lane.b32.xlu0 %v76, 113
  %v364 = vpop.permute.xlu0 %363
  %365 = vrot.lane.b32.xlu0 %v77, 113
  %v366 = vpop.permute.xlu0 %365
  %367 = vrot.lane.b32.xlu0 %v79, 113
  %v368 = vpop.permute.xlu0 %367
  %369 = vrot.lane.b32.xlu0 %v80, 113
  %v370 = vpop.permute.xlu0 %369
  %vm371 = vcmp.lt.s32.totalorder %v82, 113
  %v372 = vsel %vm371, %v368, %v370
  %v373 = vsel %vm371, %v366, %v368
  %v374 = vsel %vm371, %v364, %v366
  %v375 = vsel %vm371, %v370, %v364
  %v376 = vsel %vm218, 1, 0
  %v377 = vsel %vm219, 1, 0
  %v378 = vsel %vm220, 1, 0
  %v379 = vsel %vm221, 1, 0
  %vm380 = vcmp.eq.s32.totalorder %v376, 1
  %vm381 = vcmp.eq.s32.totalorder %v377, 1
  %vm382 = vcmp.eq.s32.totalorder %v378, 1
  %vm383 = vcmp.eq.s32.totalorder %v379, 1
  %v384 = vsel %vm380, %v374, 0.0
  %v385 = vsel %vm381, %v373, 0.0
  %v386 = vsel %vm382, %v372, 0.0
  %v387 = vsel %vm383, %v375, 0.0
  %388 = vrot.lane.b32.xlu0 %v76, 112
  %v389 = vpop.permute.xlu0 %388
  %390 = vrot.lane.b32.xlu0 %v77, 112
  %v391 = vpop.permute.xlu0 %390
  %392 = vrot.lane.b32.xlu0 %v79, 112
  %v393 = vpop.permute.xlu0 %392
  %394 = vrot.lane.b32.xlu0 %v80, 112
  %v395 = vpop.permute.xlu0 %394
  %vm396 = vcmp.lt.s32.totalorder %v82, 112
  %v397 = vsel %vm396, %v393, %v395
  %v398 = vsel %vm396, %v391, %v393
  %v399 = vsel %vm396, %v389, %v391
  %v400 = vsel %vm396, %v395, %v389
  %v401 = vsel %vm226, 1, 0
  %v402 = vsel %vm227, 1, 0
  %v403 = vsel %vm228, 1, 0
  %v404 = vsel %vm229, 1, 0
  %vm405 = vcmp.eq.s32.totalorder %v401, 1
  %vm406 = vcmp.eq.s32.totalorder %v402, 1
  %vm407 = vcmp.eq.s32.totalorder %v403, 1
  %vm408 = vcmp.eq.s32.totalorder %v404, 1
  %v409 = vsel %vm405, %v399, 0.0
  %v410 = vsel %vm406, %v398, 0.0
  %v411 = vsel %vm407, %v397, 0.0
  %v412 = vsel %vm408, %v400, 0.0
  %413 = vrot.lane.b32.xlu0 %v76, 111
  %v414 = vpop.permute.xlu0 %413
  %415 = vrot.lane.b32.xlu0 %v77, 111
  %v416 = vpop.permute.xlu0 %415
  %417 = vrot.lane.b32.xlu0 %v79, 111
  %v418 = vpop.permute.xlu0 %417
  %419 = vrot.lane.b32.xlu0 %v80, 111
  %v420 = vpop.permute.xlu0 %419
  %vm421 = vcmp.lt.s32.totalorder %v82, 111
  %v422 = vsel %vm421, %v418, %v420
  %v423 = vsel %vm421, %v416, %v418
  %v424 = vsel %vm421, %v414, %v416
  %v425 = vsel %vm421, %v420, %v414
  %v426 = vsel %vm234, 1, 0
  %v427 = vsel %vm235, 1, 0
  %v428 = vsel %vm236, 1, 0
  %v429 = vsel %vm237, 1, 0
  %vm430 = vcmp.eq.s32.totalorder %v426, 1
  %vm431 = vcmp.eq.s32.totalorder %v427, 1
  %vm432 = vcmp.eq.s32.totalorder %v428, 1
  %vm433 = vcmp.eq.s32.totalorder %v429, 1
  %v434 = vsel %vm430, %v424, 0.0
  %v435 = vsel %vm431, %v423, 0.0
  %v436 = vsel %vm432, %v422, 0.0
  %v437 = vsel %vm433, %v425, 0.0
  %v438 = vld [vmem:[%s1] sm:$0xff]
  %v439 = vld [vmem:[%s1 + $0x8] sm:$0xff]
  %vm440 = vcmask 588800
  %v442 = vsel %vm440, %v438, 0
  %v445 = vsel %vm440, %v439, 0
  %447 = vmatprep.subr.mxu0 %v260
  %448 = vmatpush1.msra.mxu0 %v259
  %449 = vmatprep.subr.mxu0 %v285
  %450 = vmatpush1.msra.mxu0 %v284
  %451 = vmatprep.subr.mxu0 %v310
  %452 = vmatpush1.msra.mxu0 %v309
  %453 = vmatprep.subr.mxu0 %v335
  %454 = vmatpush1.msra.mxu0 %v334
  %455 = vmatprep.subr.mxu0 %v77
  %456 = vmatpush1.msra.mxu0 %v76
  %457 = vmatprep.subr.mxu0 %v360
  %458 = vmatpush1.msra.mxu0 %v359
  %459 = vmatprep.subr.mxu0 %v385
  %460 = vmatpush1.msra.mxu0 %v384
  %461 = vmatprep.subr.mxu0 %v410
  %462 = vmatpush1.msra.mxu0 %v409
  %463 = vmatprep.subr.mxu0 %v435
  %464 = vmatpush1.msra.mxu0 %v434
  %465 = vmatprep.subr.mxu0 0.0
  %466 = vmatpush1.msra.mxu0 0.0
  %467 = vmatprep.subr.mxu0 0.0
  %468 = vmatpush1.msra.mxu0 0.0
  %469 = vmatprep.subr.mxu0 0.0
  %470 = vmatpush1.msra.mxu0 0.0
  %471 = vmatprep.subr.mxu0 0.0
  %472 = vmatpush1.msra.mxu0 0.0
  %473 = vmatprep.subr.mxu0 0.0
  %474 = vmatpush1.msra.mxu0 0.0
  %475 = vmatprep.subr.mxu0 0.0
  %476 = vmatpush1.msra.mxu0 0.0
  %477 = vmatprep.subr.mxu0 0.0
  %478 = vmatpush1.msra.mxu0 0.0
  %479 = vmatprep.subr.mxu0 0.0
  %480 = vmatpush1.msra.mxu0 0.0
  %481 = vmatprep.subr.mxu0 0.0
  %482 = vmatpush1.msra.mxu0 0.0
  %483 = vmatprep.subr.mxu0 0.0
  %484 = vmatpush1.msra.mxu0 0.0
  %485 = vmatprep.subr.mxu0 0.0
  %486 = vmatpush1.msra.mxu0 0.0
  %487 = vmatprep.subr.mxu0 0.0
  %488 = vmatpush1.msra.mxu0 0.0
  %489 = vmatprep.subr.mxu0 0.0
  %490 = vmatpush1.msra.mxu0 0.0
  %491 = vmatprep.subr.mxu0 0.0
  %492 = vmatpush1.msra.mxu0 0.0
  %493 = vmatprep.subr.mxu0 0.0
  %494 = vmatpush1.msra.mxu0 0.0
  %495 = vmatprep.subr.mxu0 0.0
  %496 = vmatpush1.msra.mxu0 0.0
  %497 = vmatprep.subr.mxu0 0.0
  %498 = vmatpush1.msra.mxu0 0.0
  %499 = vmatprep.subr.mxu0 0.0
  %500 = vmatpush1.msra.mxu0 0.0
  %501 = vmatprep.subr.mxu0 0.0
  %502 = vmatpush1.msra.mxu0 0.0
  %503 = vmatprep.subr.mxu0 0.0
  %504 = vmatpush1.msra.mxu0 0.0
  %505 = vmatprep.subr.mxu0 0.0
  %506 = vmatpush1.msra.mxu0 0.0
  %507 = vmatprep.subr.mxu0 0.0
  %508 = vmatpush1.msra.mxu0 0.0
  %509 = vmatprep.subr.mxu0 0.0
  %510 = vmatpush1.msra.mxu0 0.0
  %511 = vmatprep.mubr.f32.mxu0 0.0
  %512 = vmatmul.mubr.f32.gmra.mrb[0].mxu0 %v442
  %v513 = vpop.f32.mrb[0].mxu0
  %v514 = vadd.f32 0.0, %v513
  %v515 = vpop.f32.mrb[0].mxu0
  %v516 = vadd.f32 0.0, %v515
  %517 = vmatprep.mubr.f32.mxu0 0.0
  %518 = vmatmul.mubr.f32.gmra.mrb[0].mxu0 %v445
  %v519 = vpop.f32.mrb[0].mxu0
  %v520 = vadd.f32 0.0, %v519
  %v521 = vpop.f32.mrb[0].mxu0
  %v522 = vadd.f32 0.0, %v521
  %523 = vdwg.mxu0
  %524 = vmatprep.subr.mxu0 %v262
  %525 = vmatpush1.msra.mxu0 %v261
  %526 = vmatprep.subr.mxu0 %v287
  %527 = vmatpush1.msra.mxu0 %v286
  %528 = vmatprep.subr.mxu0 %v312
  %529 = vmatpush1.msra.mxu0 %v311
  %530 = vmatprep.subr.mxu0 %v337
  %531 = vmatpush1.msra.mxu0 %v336
  %532 = vmatprep.subr.mxu0 %v80
  %533 = vmatpush1.msra.mxu0 %v79
  %534 = vmatprep.subr.mxu0 %v362
  %535 = vmatpush1.msra.mxu0 %v361
  %536 = vmatprep.subr.mxu0 %v387
  %537 = vmatpush1.msra.mxu0 %v386
  %538 = vmatprep.subr.mxu0 %v412
  %539 = vmatpush1.msra.mxu0 %v411
  %540 = vmatprep.subr.mxu0 %v437
  %541 = vmatpush1.msra.mxu0 %v436
  %542 = vmatprep.subr.mxu0 0.0
  %543 = vmatpush1.msra.mxu0 0.0
  %544 = vmatprep.subr.mxu0 0.0
  %545 = vmatpush1.msra.mxu0 0.0
  %546 = vmatprep.subr.mxu0 0.0
  %547 = vmatpush1.msra.mxu0 0.0
  %548 = vmatprep.subr.mxu0 0.0
  %549 = vmatpush1.msra.mxu0 0.0
  %550 = vmatprep.subr.mxu0 0.0
  %551 = vmatpush1.msra.mxu0 0.0
  %552 = vmatprep.subr.mxu0 0.0
  %553 = vmatpush1.msra.mxu0 0.0
  %554 = vmatprep.subr.mxu0 0.0
  %555 = vmatpush1.msra.mxu0 0.0
  %556 = vmatprep.subr.mxu0 0.0
  %557 = vmatpush1.msra.mxu0 0.0
  %558 = vmatprep.subr.mxu0 0.0
  %559 = vmatpush1.msra.mxu0 0.0
  %560 = vmatprep.subr.mxu0 0.0
  %561 = vmatpush1.msra.mxu0 0.0
  %562 = vmatprep.subr.mxu0 0.0
  %563 = vmatpush1.msra.mxu0 0.0
  %564 = vmatprep.subr.mxu0 0.0
  %565 = vmatpush1.msra.mxu0 0.0
  %566 = vmatprep.subr.mxu0 0.0
  %567 = vmatpush1.msra.mxu0 0.0
  %568 = vmatprep.subr.mxu0 0.0
  %569 = vmatpush1.msra.mxu0 0.0
  %570 = vmatprep.subr.mxu0 0.0
  %571 = vmatpush1.msra.mxu0 0.0
  %572 = vmatprep.subr.mxu0 0.0
  %573 = vmatpush1.msra.mxu0 0.0
  %574 = vmatprep.subr.mxu0 0.0
  %575 = vmatpush1.msra.mxu0 0.0
  %576 = vmatprep.subr.mxu0 0.0
  %577 = vmatpush1.msra.mxu0 0.0
  %578 = vmatprep.subr.mxu0 0.0
  %579 = vmatpush1.msra.mxu0 0.0
  %580 = vmatprep.subr.mxu0 0.0
  %581 = vmatpush1.msra.mxu0 0.0
  %582 = vmatprep.subr.mxu0 0.0
  %583 = vmatpush1.msra.mxu0 0.0
  %584 = vmatprep.subr.mxu0 0.0
  %585 = vmatpush1.msra.mxu0 0.0
  %586 = vmatprep.subr.mxu0 0.0
  %587 = vmatpush1.msra.mxu0 0.0
  %588 = vmatprep.mubr.f32.mxu0 0.0
  %589 = vmatmul.mubr.f32.gmra.mrb[0].mxu0 %v442
  %v590 = vpop.f32.mrb[0].mxu0
  %v591 = vadd.f32 0.0, %v590
  %v592 = vpop.f32.mrb[0].mxu0
  %v593 = vadd.f32 0.0, %v592
  %594 = vmatprep.mubr.f32.mxu0 0.0
  %595 = vmatmul.mubr.f32.gmra.mrb[0].mxu0 %v445
  %v596 = vpop.f32.mrb[0].mxu0
  %v597 = vadd.f32 0.0, %v596
  %v598 = vpop.f32.mrb[0].mxu0
  %v599 = vadd.f32 0.0, %v598
  %600 = vdwg.mxu0
  %v601 = vld [vmem:[%s2] sm:$0xff]
  %v602 = vld [vmem:[%s2 + $0x8] sm:$0xff]
  %604 = vset.pattern.permute.xlu0 0
  %605 = vperm.xlu0 %604, %v601
  %v606 = vpop.permute.xlu0 %605
  %609 = vset.pattern.permute.xlu0 0
  %610 = vperm.xlu0 %609, %v602
  %v611 = vpop.permute.xlu0 %610
  %v613 = vmul.f32 %v514, %v606
  %v614 = vmul.f32 %v516, %v606
  %v615 = vmul.f32 %v591, %v606
  %v616 = vmul.f32 %v593, %v606
  %v617 = vmul.f32 %v520, %v611
  %v618 = vmul.f32 %v522, %v611
  %v619 = vmul.f32 %v597, %v611
  %v620 = vmul.f32 %v599, %v611
  %v621 = vld [vmem:[%s3] sm:$0xff]
  %v622 = vld [vmem:[%s3 + $0x8] sm:$0xff]
  %624 = vset.pattern.permute.xlu0 0
  %625 = vperm.xlu0 %624, %v621
  %v626 = vpop.permute.xlu0 %625
  %629 = vset.pattern.permute.xlu0 0
  %630 = vperm.xlu0 %629, %v622
  %v631 = vpop.permute.xlu0 %630
  %v633 = vadd.f32 %v613, %v626
  %v634 = vadd.f32 %v614, %v626
  %v635 = vadd.f32 %v615, %v626
  %v636 = vadd.f32 %v616, %v626
  %v637 = vadd.f32 %v617, %v631
  %v638 = vadd.f32 %v618, %v631
  %v639 = vadd.f32 %v619, %v631
  %v640 = vadd.f32 %v620, %v631
  %v641 = vmax.f32 %v633, 0.0
  %v642 = vmax.f32 %v634, 0.0
  %v643 = vmax.f32 %v635, 0.0
  %v644 = vmax.f32 %v636, 0.0
  %v645 = vmax.f32 %v637, 0.0
  %v646 = vmax.f32 %v638, 0.0
  %v647 = vmax.f32 %v639, 0.0
  %v648 = vmax.f32 %v640, 0.0
  %649 = vrot.lane.b32.xlu0 %v641, 17
  %v650 = vpop.permute.xlu0 %649
  %651 = vrot.lane.b32.xlu0 %v645, 17
  %v652 = vpop.permute.xlu0 %651
  %653 = vrot.lane.b32.xlu0 %v642, 17
  %v654 = vpop.permute.xlu0 %653
  %655 = vrot.lane.b32.xlu0 %v646, 17
  %v656 = vpop.permute.xlu0 %655
  %657 = vrot.lane.b32.xlu0 %v643, 17
  %v658 = vpop.permute.xlu0 %657
  %659 = vrot.lane.b32.xlu0 %v647, 17
  %v660 = vpop.permute.xlu0 %659
  %661 = vrot.lane.b32.xlu0 %v644, 17
  %v662 = vpop.permute.xlu0 %661
  %663 = vrot.lane.b32.xlu0 %v648, 17
  %v664 = vpop.permute.xlu0 %663
  %v665 = vsel %vm246, %v658, %v662
  %v666 = vsel %vm246, %v660, %v664
  %v667 = vsel %vm246, %v654, %v658
  %v668 = vsel %vm246, %v656, %v660
  %v669 = vsel %vm246, %v650, %v654
  %v670 = vsel %vm246, %v652, %v656
  %v671 = vsel %vm246, %v662, %v650
  %v672 = vsel %vm246, %v664, %v652
  %v673 = vsel %vm255, %v671, 0.0
  %v674 = vsel %vm256, %v669, 0.0
  %v675 = vsel %vm257, %v667, 0.0
  %v676 = vsel %vm258, %v665, 0.0
  %v677 = vsel %vm255, %v672, 0.0
  %v678 = vsel %vm256, %v670, 0.0
  %v679 = vsel %vm257, %v668, 0.0
  %v680 = vsel %vm258, %v666, 0.0
  %681 = vrot.lane.b32.xlu0 %v641, 16
  %v682 = vpop.permute.xlu0 %681
  %683 = vrot.lane.b32.xlu0 %v645, 16
  %v684 = vpop.permute.xlu0 %683
  %685 = vrot.lane.b32.xlu0 %v642, 16
  %v686 = vpop.permute.xlu0 %685
  %687 = vrot.lane.b32.xlu0 %v646, 16
  %v688 = vpop.permute.xlu0 %687
  %689 = vrot.lane.b32.xlu0 %v643, 16
  %v690 = vpop.permute.xlu0 %689
  %691 = vrot.lane.b32.xlu0 %v647, 16
  %v692 = vpop.permute.xlu0 %691
  %693 = vrot.lane.b32.xlu0 %v644, 16
  %v694 = vpop.permute.xlu0 %693
  %695 = vrot.lane.b32.xlu0 %v648, 16
  %v696 = vpop.permute.xlu0 %695
  %v697 = vsel %vm271, %v690, %v694
  %v698 = vsel %vm271, %v692, %v696
  %v699 = vsel %vm271, %v686, %v690
  %v700 = vsel %vm271, %v688, %v692
  %v701 = vsel %vm271, %v682, %v686
  %v702 = vsel %vm271, %v684, %v688
  %v703 = vsel %vm271, %v694, %v682
  %v704 = vsel %vm271, %v696, %v684
  %v705 = vsel %vm280, %v703, 0.0
  %v706 = vsel %vm281, %v701, 0.0
  %v707 = vsel %vm282, %v699, 0.0
  %v708 = vsel %vm283, %v697, 0.0
  %v709 = vsel %vm280, %v704, 0.0
  %v710 = vsel %vm281, %v702, 0.0
  %v711 = vsel %vm282, %v700, 0.0
  %v712 = vsel %vm283, %v698, 0.0
  %713 = vrot.lane.b32.xlu0 %v641, 15
  %v714 = vpop.permute.xlu0 %713
  %715 = vrot.lane.b32.xlu0 %v645, 15
  %v716 = vpop.permute.xlu0 %715
  %717 = vrot.lane.b32.xlu0 %v642, 15
  %v718 = vpop.permute.xlu0 %717
  %719 = vrot.lane.b32.xlu0 %v646, 15
  %v720 = vpop.permute.xlu0 %719
  %721 = vrot.lane.b32.xlu0 %v643, 15
  %v722 = vpop.permute.xlu0 %721
  %723 = vrot.lane.b32.xlu0 %v647, 15
  %v724 = vpop.permute.xlu0 %723
  %725 = vrot.lane.b32.xlu0 %v644, 15
  %v726 = vpop.permute.xlu0 %725
  %727 = vrot.lane.b32.xlu0 %v648, 15
  %v728 = vpop.permute.xlu0 %727
  %v729 = vsel %vm296, %v722, %v726
  %v730 = vsel %vm296, %v724, %v728
  %v731 = vsel %vm296, %v718, %v722
  %v732 = vsel %vm296, %v720, %v724
  %v733 = vsel %vm296, %v714, %v718
  %v734 = vsel %vm296, %v716, %v720
  %v735 = vsel %vm296, %v726, %v714
  %v736 = vsel %vm296, %v728, %v716
  %v737 = vsel %vm305, %v735, 0.0
  %v738 = vsel %vm306, %v733, 0.0
  %v739 = vsel %vm307, %v731, 0.0
  %v740 = vsel %vm308, %v729, 0.0
  %v741 = vsel %vm305, %v736, 0.0
  %v742 = vsel %vm306, %v734, 0.0
  %v743 = vsel %vm307, %v732, 0.0
  %v744 = vsel %vm308, %v730, 0.0
  %745 = vrot.lane.b32.xlu0 %v641, 1
  %v746 = vpop.permute.xlu0 %745
  %747 = vrot.lane.b32.xlu0 %v645, 1
  %v748 = vpop.permute.xlu0 %747
  %749 = vrot.lane.b32.xlu0 %v642, 1
  %v750 = vpop.permute.xlu0 %749
  %751 = vrot.lane.b32.xlu0 %v646, 1
  %v752 = vpop.permute.xlu0 %751
  %753 = vrot.lane.b32.xlu0 %v643, 1
  %v754 = vpop.permute.xlu0 %753
  %755 = vrot.lane.b32.xlu0 %v647, 1
  %v756 = vpop.permute.xlu0 %755
  %757 = vrot.lane.b32.xlu0 %v644, 1
  %v758 = vpop.permute.xlu0 %757
  %759 = vrot.lane.b32.xlu0 %v648, 1
  %v760 = vpop.permute.xlu0 %759
  %v761 = vsel %vm321, %v754, %v758
  %v762 = vsel %vm321, %v756, %v760
  %v763 = vsel %vm321, %v750, %v754
  %v764 = vsel %vm321, %v752, %v756
  %v765 = vsel %vm321, %v746, %v750
  %v766 = vsel %vm321, %v748, %v752
  %v767 = vsel %vm321, %v758, %v746
  %v768 = vsel %vm321, %v760, %v748
  %v769 = vsel %vm330, %v767, 0.0
  %v770 = vsel %vm331, %v765, 0.0
  %v771 = vsel %vm332, %v763, 0.0
  %v772 = vsel %vm333, %v761, 0.0
  %v773 = vsel %vm330, %v768, 0.0
  %v774 = vsel %vm331, %v766, 0.0
  %v775 = vsel %vm332, %v764, 0.0
  %v776 = vsel %vm333, %v762, 0.0
  %777 = vrot.lane.b32.xlu0 %v641, 127
  %v778 = vpop.permute.xlu0 %777
  %779 = vrot.lane.b32.xlu0 %v645, 127
  %v780 = vpop.permute.xlu0 %779
  %781 = vrot.lane.b32.xlu0 %v642, 127
  %v782 = vpop.permute.xlu0 %781
  %783 = vrot.lane.b32.xlu0 %v646, 127
  %v784 = vpop.permute.xlu0 %783
  %785 = vrot.lane.b32.xlu0 %v643, 127
  %v786 = vpop.permute.xlu0 %785
  %787 = vrot.lane.b32.xlu0 %v647, 127
  %v788 = vpop.permute.xlu0 %787
  %789 = vrot.lane.b32.xlu0 %v644, 127
  %v790 = vpop.permute.xlu0 %789
  %791 = vrot.lane.b32.xlu0 %v648, 127
  %v792 = vpop.permute.xlu0 %791
  %v793 = vsel %vm346, %v786, %v790
  %v794 = vsel %vm346, %v788, %v792
  %v795 = vsel %vm346, %v782, %v786
  %v796 = vsel %vm346, %v784, %v788
  %v797 = vsel %vm346, %v778, %v782
  %v798 = vsel %vm346, %v780, %v784
  %v799 = vsel %vm346, %v790, %v778
  %v800 = vsel %vm346, %v792, %v780
  %v801 = vsel %vm355, %v797, 0.0
  %v802 = vsel %vm356, %v795, 0.0
  %v803 = vsel %vm357, %v793, 0.0
  %v804 = vsel %vm358, %v799, 0.0
  %v805 = vsel %vm355, %v798, 0.0
  %v806 = vsel %vm356, %v796, 0.0
  %v807 = vsel %vm357, %v794, 0.0
  %v808 = vsel %vm358, %v800, 0.0
  %809 = vrot.lane.b32.xlu0 %v641, 113
  %v810 = vpop.permute.xlu0 %809
  %811 = vrot.lane.b32.xlu0 %v645, 113
  %v812 = vpop.permute.xlu0 %811
  %813 = vrot.lane.b32.xlu0 %v642, 113
  %v814 = vpop.permute.xlu0 %813
  %815 = vrot.lane.b32.xlu0 %v646, 113
  %v816 = vpop.permute.xlu0 %815
  %817 = vrot.lane.b32.xlu0 %v643, 113
  %v818 = vpop.permute.xlu0 %817
  %819 = vrot.lane.b32.xlu0 %v647, 113
  %v820 = vpop.permute.xlu0 %819
  %821 = vrot.lane.b32.xlu0 %v644, 113
  %v822 = vpop.permute.xlu0 %821
  %823 = vrot.lane.b32.xlu0 %v648, 113
  %v824 = vpop.permute.xlu0 %823
  %v825 = vsel %vm371, %v818, %v822
  %v826 = vsel %vm371, %v820, %v824
  %v827 = vsel %vm371, %v814, %v818
  %v828 = vsel %vm371, %v816, %v820
  %v829 = vsel %vm371, %v810, %v814
  %v830 = vsel %vm371, %v812, %v816
  %v831 = vsel %vm371, %v822, %v810
  %v832 = vsel %vm371, %v824, %v812
  %v833 = vsel %vm380, %v829, 0.0
  %v834 = vsel %vm381, %v827, 0.0
  %v835 = vsel %vm382, %v825, 0.0
  %v836 = vsel %vm383, %v831, 0.0
  %v837 = vsel %vm380, %v830, 0.0
  %v838 = vsel %vm381, %v828, 0.0
  %v839 = vsel %vm382, %v826, 0.0
  %v840 = vsel %vm383, %v832, 0.0
  %841 = vrot.lane.b32.xlu0 %v641, 112
  %v842 = vpop.permute.xlu0 %841
  %843 = vrot.lane.b32.xlu0 %v645, 112
  %v844 = vpop.permute.xlu0 %843
  %845 = vrot.lane.b32.xlu0 %v642, 112
  %v846 = vpop.permute.xlu0 %845
  %847 = vrot.lane.b32.xlu0 %v646, 112
  %v848 = vpop.permute.xlu0 %847
  %849 = vrot.lane.b32.xlu0 %v643, 112
  %v850 = vpop.permute.xlu0 %849
  %851 = vrot.lane.b32.xlu0 %v647, 112
  %v852 = vpop.permute.xlu0 %851
  %853 = vrot.lane.b32.xlu0 %v644, 112
  %v854 = vpop.permute.xlu0 %853
  %855 = vrot.lane.b32.xlu0 %v648, 112
  %v856 = vpop.permute.xlu0 %855
  %v857 = vsel %vm396, %v850, %v854
  %v858 = vsel %vm396, %v852, %v856
  %v859 = vsel %vm396, %v846, %v850
  %v860 = vsel %vm396, %v848, %v852
  %v861 = vsel %vm396, %v842, %v846
  %v862 = vsel %vm396, %v844, %v848
  %v863 = vsel %vm396, %v854, %v842
  %v864 = vsel %vm396, %v856, %v844
  %v865 = vsel %vm405, %v861, 0.0
  %v866 = vsel %vm406, %v859, 0.0
  %v867 = vsel %vm407, %v857, 0.0
  %v868 = vsel %vm408, %v863, 0.0
  %v869 = vsel %vm405, %v862, 0.0
  %v870 = vsel %vm406, %v860, 0.0
  %v871 = vsel %vm407, %v858, 0.0
  %v872 = vsel %vm408, %v864, 0.0
  %873 = vrot.lane.b32.xlu0 %v641, 111
  %v874 = vpop.permute.xlu0 %873
  %875 = vrot.lane.b32.xlu0 %v645, 111
  %v876 = vpop.permute.xlu0 %875
  %877 = vrot.lane.b32.xlu0 %v642, 111
  %v878 = vpop.permute.xlu0 %877
  %879 = vrot.lane.b32.xlu0 %v646, 111
  %v880 = vpop.permute.xlu0 %879
  %881 = vrot.lane.b32.xlu0 %v643, 111
  %v882 = vpop.permute.xlu0 %881
  %883 = vrot.lane.b32.xlu0 %v647, 111
  %v884 = vpop.permute.xlu0 %883
  %885 = vrot.lane.b32.xlu0 %v644, 111
  %v886 = vpop.permute.xlu0 %885
  %887 = vrot.lane.b32.xlu0 %v648, 111
  %v888 = vpop.permute.xlu0 %887
  %v889 = vsel %vm421, %v882, %v886
  %v890 = vsel %vm421, %v884, %v888
  %v891 = vsel %vm421, %v878, %v882
  %v892 = vsel %vm421, %v880, %v884
  %v893 = vsel %vm421, %v874, %v878
  %v894 = vsel %vm421, %v876, %v880
  %v895 = vsel %vm421, %v886, %v874
  %v896 = vsel %vm421, %v888, %v876
  %v897 = vsel %vm430, %v893, 0.0
  %v898 = vsel %vm431, %v891, 0.0
  %v899 = vsel %vm432, %v889, 0.0
  %v900 = vsel %vm433, %v895, 0.0
  %v901 = vsel %vm430, %v894, 0.0
  %v902 = vsel %vm431, %v892, 0.0
  %v903 = vsel %vm432, %v890, 0.0
  %v904 = vsel %vm433, %v896, 0.0
  %v905 = vld [vmem:[%s4] sm:$0xff]
  %v906 = vld [vmem:[%s4 + $0x8] sm:$0xff]
  %v907 = vld [vmem:[%s4 + $0x10] sm:$0xff]
  %v908 = vld [vmem:[%s4 + $0x18] sm:$0xff]
  %vm909 = vcmask 130048
  %v911 = vsel %vm909, %v906, 0
  %v914 = vsel %vm909, %v908, 0
  %916 = vmatprep.subr.mxu0 %v674
  %917 = vmatpush1.msra.mxu0 %v673
  %918 = vmatprep.subr.mxu0 %v678
  %919 = vmatpush1.msra.mxu0 %v677
  %920 = vmatprep.subr.mxu0 %v706
  %921 = vmatpush1.msra.mxu0 %v705
  %922 = vmatprep.subr.mxu0 %v710
  %923 = vmatpush1.msra.mxu0 %v709
  %924 = vmatprep.subr.mxu0 %v738
  %925 = vmatpush1.msra.mxu0 %v737
  %926 = vmatprep.subr.mxu0 %v742
  %927 = vmatpush1.msra.mxu0 %v741
  %928 = vmatprep.subr.mxu0 %v770
  %929 = vmatpush1.msra.mxu0 %v769
  %930 = vmatprep.subr.mxu0 %v774
  %931 = vmatpush1.msra.mxu0 %v773
  %932 = vmatprep.subr.mxu0 %v642
  %933 = vmatpush1.msra.mxu0 %v641
  %934 = vmatprep.subr.mxu0 %v646
  %935 = vmatpush1.msra.mxu0 %v645
  %936 = vmatprep.subr.mxu0 %v802
  %937 = vmatpush1.msra.mxu0 %v801
  %938 = vmatprep.subr.mxu0 %v806
  %939 = vmatpush1.msra.mxu0 %v805
  %940 = vmatprep.subr.mxu0 %v834
  %941 = vmatpush1.msra.mxu0 %v833
  %942 = vmatprep.subr.mxu0 %v838
  %943 = vmatpush1.msra.mxu0 %v837
  %944 = vmatprep.subr.mxu0 %v866
  %945 = vmatpush1.msra.mxu0 %v865
  %946 = vmatprep.subr.mxu0 %v870
  %947 = vmatpush1.msra.mxu0 %v869
  %948 = vmatprep.subr.mxu0 %v898
  %949 = vmatpush1.msra.mxu0 %v897
  %950 = vmatprep.subr.mxu0 %v902
  %951 = vmatpush1.msra.mxu0 %v901
  %952 = vmatprep.subr.mxu0 0.0
  %953 = vmatpush1.msra.mxu0 0.0
  %954 = vmatprep.subr.mxu0 0.0
  %955 = vmatpush1.msra.mxu0 0.0
  %956 = vmatprep.subr.mxu0 0.0
  %957 = vmatpush1.msra.mxu0 0.0
  %958 = vmatprep.subr.mxu0 0.0
  %959 = vmatpush1.msra.mxu0 0.0
  %960 = vmatprep.subr.mxu0 0.0
  %961 = vmatpush1.msra.mxu0 0.0
  %962 = vmatprep.subr.mxu0 0.0
  %963 = vmatpush1.msra.mxu0 0.0
  %964 = vmatprep.subr.mxu0 0.0
  %965 = vmatpush1.msra.mxu0 0.0
  %966 = vmatprep.subr.mxu0 0.0
  %967 = vmatpush1.msra.mxu0 0.0
  %968 = vmatprep.subr.mxu0 0.0
  %969 = vmatpush1.msra.mxu0 0.0
  %970 = vmatprep.subr.mxu0 0.0
  %971 = vmatpush1.msra.mxu0 0.0
  %972 = vmatprep.subr.mxu0 0.0
  %973 = vmatpush1.msra.mxu0 0.0
  %974 = vmatprep.subr.mxu0 0.0
  %975 = vmatpush1.msra.mxu0 0.0
  %976 = vmatprep.subr.mxu0 0.0
  %977 = vmatpush1.msra.mxu0 0.0
  %978 = vmatprep.subr.mxu0 0.0
  %979 = vmatpush1.msra.mxu0 0.0
  %980 = vmatprep.mubr.f32.mxu0 %v911
  %981 = vmatmul.mubr.f32.gmra.mrb[0].mxu0 %v905
  %v982 = vpop.f32.mrb[0].mxu0
  %v983 = vadd.f32 0.0, %v982
  %v984 = vpop.f32.mrb[0].mxu0
  %v985 = vadd.f32 0.0, %v984
  %986 = vmatprep.mubr.f32.mxu0 %v914
  %987 = vmatmul.mubr.f32.gmra.mrb[0].mxu0 %v907
  %v988 = vpop.f32.mrb[0].mxu0
  %v989 = vadd.f32 0.0, %v988
  %v990 = vpop.f32.mrb[0].mxu0
  %v991 = vadd.f32 0.0, %v990
  %992 = vdwg.mxu0
  %993 = vmatprep.subr.mxu0 %v676
  %994 = vmatpush1.msra.mxu0 %v675
  %995 = vmatprep.subr.mxu0 %v680
  %996 = vmatpush1.msra.mxu0 %v679
  %997 = vmatprep.subr.mxu0 %v708
  %998 = vmatpush1.msra.mxu0 %v707
  %999 = vmatprep.subr.mxu0 %v712
  %1000 = vmatpush1.msra.mxu0 %v711
  %1001 = vmatprep.subr.mxu0 %v740
  %1002 = vmatpush1.msra.mxu0 %v739
  %1003 = vmatprep.subr.mxu0 %v744
  %1004 = vmatpush1.msra.mxu0 %v743
  %1005 = vmatprep.subr.mxu0 %v772
  %1006 = vmatpush1.msra.mxu0 %v771
  %1007 = vmatprep.subr.mxu0 %v776
  %1008 = vmatpush1.msra.mxu0 %v775
  %1009 = vmatprep.subr.mxu0 %v644
  %1010 = vmatpush1.msra.mxu0 %v643
  %1011 = vmatprep.subr.mxu0 %v648
  %1012 = vmatpush1.msra.mxu0 %v647
  %1013 = vmatprep.subr.mxu0 %v804
  %1014 = vmatpush1.msra.mxu0 %v803
  %1015 = vmatprep.subr.mxu0 %v808
  %1016 = vmatpush1.msra.mxu0 %v807
  %1017 = vmatprep.subr.mxu0 %v836
  %1018 = vmatpush1.msra.mxu0 %v835
  %1019 = vmatprep.subr.mxu0 %v840
  %1020 = vmatpush1.msra.mxu0 %v839
  %1021 = vmatprep.subr.mxu0 %v868
  %1022 = vmatpush1.msra.mxu0 %v867
  %1023 = vmatprep.subr.mxu0 %v872
  %1024 = vmatpush1.msra.mxu0 %v871
  %1025 = vmatprep.subr.mxu0 %v900
  %1026 = vmatpush1.msra.mxu0 %v899
  %1027 = vmatprep.subr.mxu0 %v904
  %1028 = vmatpush1.msra.mxu0 %v903
  %1029 = vmatprep.subr.mxu0 0.0
  %1030 = vmatpush1.msra.mxu0 0.0
  %1031 = vmatprep.subr.mxu0 0.0
  %1032 = vmatpush1.msra.mxu0 0.0
  %1033 = vmatprep.subr.mxu0 0.0
  %1034 = vmatpush1.msra.mxu0 0.0
  %1035 = vmatprep.subr.mxu0 0.0
  %1036 = vmatpush1.msra.mxu0 0.0
  %1037 = vmatprep.subr.mxu0 0.0
  %1038 = vmatpush1.msra.mxu0 0.0
  %1039 = vmatprep.subr.mxu0 0.0
  %1040 = vmatpush1.msra.mxu0 0.0
  %1041 = vmatprep.subr.mxu0 0.0
  %1042 = vmatpush1.msra.mxu0 0.0
  %1043 = vmatprep.subr.mxu0 0.0
  %1044 = vmatpush1.msra.mxu0 0.0
  %1045 = vmatprep.subr.mxu0 0.0
  %1046 = vmatpush1.msra.mxu0 0.0
  %1047 = vmatprep.subr.mxu0 0.0
  %1048 = vmatpush1.msra.mxu0 0.0
  %1049 = vmatprep.subr.mxu0 0.0
  %1050 = vmatpush1.msra.mxu0 0.0
  %1051 = vmatprep.subr.mxu0 0.0
  %1052 = vmatpush1.msra.mxu0 0.0
  %1053 = vmatprep.subr.mxu0 0.0
  %1054 = vmatpush1.msra.mxu0 0.0
  %1055 = vmatprep.subr.mxu0 0.0
  %1056 = vmatpush1.msra.mxu0 0.0
  %1057 = vmatprep.mubr.f32.mxu0 %v911
  %1058 = vmatmul.mubr.f32.gmra.mrb[0].mxu0 %v905
  %v1059 = vpop.f32.mrb[0].mxu0
  %v1060 = vadd.f32 0.0, %v1059
  %v1061 = vpop.f32.mrb[0].mxu0
  %v1062 = vadd.f32 0.0, %v1061
  %1063 = vmatprep.mubr.f32.mxu0 %v914
  %1064 = vmatmul.mubr.f32.gmra.mrb[0].mxu0 %v907
  %v1065 = vpop.f32.mrb[0].mxu0
  %v1066 = vadd.f32 0.0, %v1065
  %v1067 = vpop.f32.mrb[0].mxu0
  %v1068 = vadd.f32 0.0, %v1067
  %1069 = vdwg.mxu0
  %v1070 = vld [vmem:[%s5] sm:$0xff]
  %v1071 = vld [vmem:[%s5 + $0x8] sm:$0xff]
  %1073 = vset.pattern.permute.xlu0 0
  %1074 = vperm.xlu0 %1073, %v1070
  %v1075 = vpop.permute.xlu0 %1074
  %1078 = vset.pattern.permute.xlu0 0
  %1079 = vperm.xlu0 %1078, %v1071
  %v1080 = vpop.permute.xlu0 %1079
  %v1082 = vmul.f32 %v983, %v1075
  %v1083 = vmul.f32 %v985, %v1075
  %v1084 = vmul.f32 %v1060, %v1075
  %v1085 = vmul.f32 %v1062, %v1075
  %v1086 = vmul.f32 %v989, %v1080
  %v1087 = vmul.f32 %v991, %v1080
  %v1088 = vmul.f32 %v1066, %v1080
  %v1089 = vmul.f32 %v1068, %v1080
  %v1090 = vld [vmem:[%s6] sm:$0xff]
  %v1091 = vld [vmem:[%s6 + $0x8] sm:$0xff]
  %1093 = vset.pattern.permute.xlu0 0
  %1094 = vperm.xlu0 %1093, %v1090
  %v1095 = vpop.permute.xlu0 %1094
  %1098 = vset.pattern.permute.xlu0 0
  %1099 = vperm.xlu0 %1098, %v1091
  %v1100 = vpop.permute.xlu0 %1099
  %v1102 = vadd.f32 %v1082, %v1095
  %v1103 = vadd.f32 %v1083, %v1095
  %v1104 = vadd.f32 %v1084, %v1095
  %v1105 = vadd.f32 %v1085, %v1095
  %v1106 = vadd.f32 %v1086, %v1100
  %v1107 = vadd.f32 %v1087, %v1100
  %v1108 = vadd.f32 %v1088, %v1100
  %v1109 = vadd.f32 %v1089, %v1100
  %v1110 = vmax.f32 %v1102, 0.0
  %v1111 = vmax.f32 %v1103, 0.0
  %v1112 = vmax.f32 %v1104, 0.0
  %v1113 = vmax.f32 %v1105, 0.0
  %v1114 = vmax.f32 %v1106, 0.0
  %v1115 = vmax.f32 %v1107, 0.0
  %v1116 = vmax.f32 %v1108, 0.0
  %v1117 = vmax.f32 %v1109, 0.0
  %v1118 = vld [vmem:[%s7] sm:$0xff]
  %v1119 = vld [vmem:[%s7 + $0x8] sm:$0xff]
  %v1120 = vld [vmem:[%s8] sm:$0xff]
  %v1121 = vld [vmem:[%s8 + $0x8] sm:$0xff]
  %1123 = vset.pattern.permute.xlu0 0
  %1124 = vperm.xlu0 %1123, %v1120
  %v1125 = vpop.permute.xlu0 %1124
  %1128 = vset.pattern.permute.xlu0 0
  %1129 = vperm.xlu0 %1128, %v1121
  %v1130 = vpop.permute.xlu0 %1129
  %vm1132 = vcmask 64512
  %v1134 = vsel %vm1132, %v1118, 0
  %v1137 = vsel %vm1132, %v1119, 0
  %1139 = vmatprep.subr.mxu0 %v77
  %1140 = vmatpush1.msra.mxu0 %v76
  %1141 = vmatprep.subr.mxu0 0.0
  %1142 = vmatpush1.msra.mxu0 0.0
  %1143 = vmatprep.subr.mxu0 0.0
  %1144 = vmatpush1.msra.mxu0 0.0
  %1145 = vmatprep.subr.mxu0 0.0
  %1146 = vmatpush1.msra.mxu0 0.0
  %1147 = vmatprep.subr.mxu0 0.0
  %1148 = vmatpush1.msra.mxu0 0.0
  %1149 = vmatprep.subr.mxu0 0.0
  %1150 = vmatpush1.msra.mxu0 0.0
  %1151 = vmatprep.subr.mxu0 0.0
  %1152 = vmatpush1.msra.mxu0 0.0
  %1153 = vmatprep.subr.mxu0 0.0
  %1154 = vmatpush1.msra.mxu0 0.0
  %1155 = vmatprep.subr.mxu0 0.0
  %1156 = vmatpush1.msra.mxu0 0.0
  %1157 = vmatprep.subr.mxu0 0.0
  %1158 = vmatpush1.msra.mxu0 0.0
  %1159 = vmatprep.subr.mxu0 0.0
  %1160 = vmatpush1.msra.mxu0 0.0
  %1161 = vmatprep.subr.mxu0 0.0
  %1162 = vmatpush1.msra.mxu0 0.0
  %1163 = vmatprep.subr.mxu0 0.0
  %1164 = vmatpush1.msra.mxu0 0.0
  %1165 = vmatprep.subr.mxu0 0.0
  %1166 = vmatpush1.msra.mxu0 0.0
  %1167 = vmatprep.subr.mxu0 0.0
  %1168 = vmatpush1.msra.mxu0 0.0
  %1169 = vmatprep.subr.mxu0 0.0
  %1170 = vmatpush1.msra.mxu0 0.0
  %1171 = vmatprep.subr.mxu0 0.0
  %1172 = vmatpush1.msra.mxu0 0.0
  %1173 = vmatprep.subr.mxu0 0.0
  %1174 = vmatpush1.msra.mxu0 0.0
  %1175 = vmatprep.subr.mxu0 0.0
  %1176 = vmatpush1.msra.mxu0 0.0
  %1177 = vmatprep.subr.mxu0 0.0
  %1178 = vmatpush1.msra.mxu0 0.0
  %1179 = vmatprep.subr.mxu0 0.0
  %1180 = vmatpush1.msra.mxu0 0.0
  %1181 = vmatprep.subr.mxu0 0.0
  %1182 = vmatpush1.msra.mxu0 0.0
  %1183 = vmatprep.subr.mxu0 0.0
  %1184 = vmatpush1.msra.mxu0 0.0
  %1185 = vmatprep.subr.mxu0 0.0
  %1186 = vmatpush1.msra.mxu0 0.0
  %1187 = vmatprep.subr.mxu0 0.0
  %1188 = vmatpush1.msra.mxu0 0.0
  %1189 = vmatprep.subr.mxu0 0.0
  %1190 = vmatpush1.msra.mxu0 0.0
  %1191 = vmatprep.subr.mxu0 0.0
  %1192 = vmatpush1.msra.mxu0 0.0
  %1193 = vmatprep.subr.mxu0 0.0
  %1194 = vmatpush1.msra.mxu0 0.0
  %1195 = vmatprep.subr.mxu0 0.0
  %1196 = vmatpush1.msra.mxu0 0.0
  %1197 = vmatprep.subr.mxu0 0.0
  %1198 = vmatpush1.msra.mxu0 0.0
  %1199 = vmatprep.subr.mxu0 0.0
  %1200 = vmatpush1.msra.mxu0 0.0
  %1201 = vmatprep.subr.mxu0 0.0
  %1202 = vmatpush1.msra.mxu0 0.0
  %1203 = vmatprep.mubr.f32.mxu0 0.0
  %1204 = vmatmul.mubr.f32.gmra.mrb[0].mxu0 %v1134
  %v1205 = vpop.f32.mrb[0].mxu0
  %v1206 = vadd.f32 %v1125, %v1205
  %v1207 = vpop.f32.mrb[0].mxu0
  %v1208 = vadd.f32 %v1125, %v1207
  %1209 = vmatprep.mubr.f32.mxu0 0.0
  %1210 = vmatmul.mubr.f32.gmra.mrb[0].mxu0 %v1137
  %v1211 = vpop.f32.mrb[0].mxu0
  %v1212 = vadd.f32 %v1130, %v1211
  %v1213 = vpop.f32.mrb[0].mxu0
  %v1214 = vadd.f32 %v1130, %v1213
  %1215 = vdwg.mxu0
  %1216 = vmatprep.subr.mxu0 %v80
  %1217 = vmatpush1.msra.mxu0 %v79
  %1218 = vmatprep.subr.mxu0 0.0
  %1219 = vmatpush1.msra.mxu0 0.0
  %1220 = vmatprep.subr.mxu0 0.0
  %1221 = vmatpush1.msra.mxu0 0.0
  %1222 = vmatprep.subr.mxu0 0.0
  %1223 = vmatpush1.msra.mxu0 0.0
  %1224 = vmatprep.subr.mxu0 0.0
  %1225 = vmatpush1.msra.mxu0 0.0
  %1226 = vmatprep.subr.mxu0 0.0
  %1227 = vmatpush1.msra.mxu0 0.0
  %1228 = vmatprep.subr.mxu0 0.0
  %1229 = vmatpush1.msra.mxu0 0.0
  %1230 = vmatprep.subr.mxu0 0.0
  %1231 = vmatpush1.msra.mxu0 0.0
  %1232 = vmatprep.subr.mxu0 0.0
  %1233 = vmatpush1.msra.mxu0 0.0
  %1234 = vmatprep.subr.mxu0 0.0
  %1235 = vmatpush1.msra.mxu0 0.0
  %1236 = vmatprep.subr.mxu0 0.0
  %1237 = vmatpush1.msra.mxu0 0.0
  %1238 = vmatprep.subr.mxu0 0.0
  %1239 = vmatpush1.msra.mxu0 0.0
  %1240 = vmatprep.subr.mxu0 0.0
  %1241 = vmatpush1.msra.mxu0 0.0
  %1242 = vmatprep.subr.mxu0 0.0
  %1243 = vmatpush1.msra.mxu0 0.0
  %1244 = vmatprep.subr.mxu0 0.0
  %1245 = vmatpush1.msra.mxu0 0.0
  %1246 = vmatprep.subr.mxu0 0.0
  %1247 = vmatpush1.msra.mxu0 0.0
  %1248 = vmatprep.subr.mxu0 0.0
  %1249 = vmatpush1.msra.mxu0 0.0
  %1250 = vmatprep.subr.mxu0 0.0
  %1251 = vmatpush1.msra.mxu0 0.0
  %1252 = vmatprep.subr.mxu0 0.0
  %1253 = vmatpush1.msra.mxu0 0.0
  %1254 = vmatprep.subr.mxu0 0.0
  %1255 = vmatpush1.msra.mxu0 0.0
  %1256 = vmatprep.subr.mxu0 0.0
  %1257 = vmatpush1.msra.mxu0 0.0
  %1258 = vmatprep.subr.mxu0 0.0
  %1259 = vmatpush1.msra.mxu0 0.0
  %1260 = vmatprep.subr.mxu0 0.0
  %1261 = vmatpush1.msra.mxu0 0.0
  %1262 = vmatprep.subr.mxu0 0.0
  %1263 = vmatpush1.msra.mxu0 0.0
  %1264 = vmatprep.subr.mxu0 0.0
  %1265 = vmatpush1.msra.mxu0 0.0
  %1266 = vmatprep.subr.mxu0 0.0
  %1267 = vmatpush1.msra.mxu0 0.0
  %1268 = vmatprep.subr.mxu0 0.0
  %1269 = vmatpush1.msra.mxu0 0.0
  %1270 = vmatprep.subr.mxu0 0.0
  %1271 = vmatpush1.msra.mxu0 0.0
  %1272 = vmatprep.subr.mxu0 0.0
  %1273 = vmatpush1.msra.mxu0 0.0
  %1274 = vmatprep.subr.mxu0 0.0
  %1275 = vmatpush1.msra.mxu0 0.0
  %1276 = vmatprep.subr.mxu0 0.0
  %1277 = vmatpush1.msra.mxu0 0.0
  %1278 = vmatprep.subr.mxu0 0.0
  %1279 = vmatpush1.msra.mxu0 0.0
  %1280 = vmatprep.mubr.f32.mxu0 0.0
  %1281 = vmatmul.mubr.f32.gmra.mrb[0].mxu0 %v1134
  %v1282 = vpop.f32.mrb[0].mxu0
  %v1283 = vadd.f32 %v1125, %v1282
  %v1284 = vpop.f32.mrb[0].mxu0
  %v1285 = vadd.f32 %v1125, %v1284
  %1286 = vmatprep.mubr.f32.mxu0 0.0
  %1287 = vmatmul.mubr.f32.gmra.mrb[0].mxu0 %v1137
  %v1288 = vpop.f32.mrb[0].mxu0
  %v1289 = vadd.f32 %v1130, %v1288
  %v1290 = vpop.f32.mrb[0].mxu0
  %v1291 = vadd.f32 %v1130, %v1290
  %1292 = vdwg.mxu0
  %v1293 = vadd.f32 %v1110, %v1206
  %v1294 = vadd.f32 %v1111, %v1208
  %v1295 = vadd.f32 %v1112, %v1283
  %v1296 = vadd.f32 %v1113, %v1285
  %v1297 = vadd.f32 %v1114, %v1212
  %v1298 = vadd.f32 %v1115, %v1214
  %v1299 = vadd.f32 %v1116, %v1289
  %v1300 = vadd.f32 %v1117, %v1291
  %1301 = vrot.lane.b32.xlu0 %v1293, 17
  %v1302 = vpop.permute.xlu0 %1301
  %1303 = vrot.lane.b32.xlu0 %v1297, 17
  %v1304 = vpop.permute.xlu0 %1303
  %1305 = vrot.lane.b32.xlu0 %v1294, 17
  %v1306 = vpop.permute.xlu0 %1305
  %1307 = vrot.lane.b32.xlu0 %v1298, 17
  %v1308 = vpop.permute.xlu0 %1307
  %1309 = vrot.lane.b32.xlu0 %v1295, 17
  %v1310 = vpop.permute.xlu0 %1309
  %1311 = vrot.lane.b32.xlu0 %v1299, 17
  %v1312 = vpop.permute.xlu0 %1311
  %1313 = vrot.lane.b32.xlu0 %v1296, 17
  %v1314 = vpop.permute.xlu0 %1313
  %1315 = vrot.lane.b32.xlu0 %v1300, 17
  %v1316 = vpop.permute.xlu0 %1315
  %v1317 = vsel %vm246, %v1310, %v1314
  %v1318 = vsel %vm246, %v1312, %v1316
  %v1319 = vsel %vm246, %v1306, %v1310
  %v1320 = vsel %vm246, %v1308, %v1312
  %v1321 = vsel %vm246, %v1302, %v1306
  %v1322 = vsel %vm246, %v1304, %v1308
  %v1323 = vsel %vm246, %v1314, %v1302
  %v1324 = vsel %vm246, %v1316, %v1304
  %v1325 = vsel %vm255, %v1323, 0.0
  %v1326 = vsel %vm256, %v1321, 0.0
  %v1327 = vsel %vm257, %v1319, 0.0
  %v1328 = vsel %vm258, %v1317, 0.0
  %v1329 = vsel %vm255, %v1324, 0.0
  %v1330 = vsel %vm256, %v1322, 0.0
  %v1331 = vsel %vm257, %v1320, 0.0
  %v1332 = vsel %vm258, %v1318, 0.0
  %1333 = vrot.lane.b32.xlu0 %v1293, 16
  %v1334 = vpop.permute.xlu0 %1333
  %1335 = vrot.lane.b32.xlu0 %v1297, 16
  %v1336 = vpop.permute.xlu0 %1335
  %1337 = vrot.lane.b32.xlu0 %v1294, 16
  %v1338 = vpop.permute.xlu0 %1337
  %1339 = vrot.lane.b32.xlu0 %v1298, 16
  %v1340 = vpop.permute.xlu0 %1339
  %1341 = vrot.lane.b32.xlu0 %v1295, 16
  %v1342 = vpop.permute.xlu0 %1341
  %1343 = vrot.lane.b32.xlu0 %v1299, 16
  %v1344 = vpop.permute.xlu0 %1343
  %1345 = vrot.lane.b32.xlu0 %v1296, 16
  %v1346 = vpop.permute.xlu0 %1345
  %1347 = vrot.lane.b32.xlu0 %v1300, 16
  %v1348 = vpop.permute.xlu0 %1347
  %v1349 = vsel %vm271, %v1342, %v1346
  %v1350 = vsel %vm271, %v1344, %v1348
  %v1351 = vsel %vm271, %v1338, %v1342
  %v1352 = vsel %vm271, %v1340, %v1344
  %v1353 = vsel %vm271, %v1334, %v1338
  %v1354 = vsel %vm271, %v1336, %v1340
  %v1355 = vsel %vm271, %v1346, %v1334
  %v1356 = vsel %vm271, %v1348, %v1336
  %v1357 = vsel %vm280, %v1355, 0.0
  %v1358 = vsel %vm281, %v1353, 0.0
  %v1359 = vsel %vm282, %v1351, 0.0
  %v1360 = vsel %vm283, %v1349, 0.0
  %v1361 = vsel %vm280, %v1356, 0.0
  %v1362 = vsel %vm281, %v1354, 0.0
  %v1363 = vsel %vm282, %v1352, 0.0
  %v1364 = vsel %vm283, %v1350, 0.0
  %1365 = vrot.lane.b32.xlu0 %v1293, 15
  %v1366 = vpop.permute.xlu0 %1365
  %1367 = vrot.lane.b32.xlu0 %v1297, 15
  %v1368 = vpop.permute.xlu0 %1367
  %1369 = vrot.lane.b32.xlu0 %v1294, 15
  %v1370 = vpop.permute.xlu0 %1369
  %1371 = vrot.lane.b32.xlu0 %v1298, 15
  %v1372 = vpop.permute.xlu0 %1371
  %1373 = vrot.lane.b32.xlu0 %v1295, 15
  %v1374 = vpop.permute.xlu0 %1373
  %1375 = vrot.lane.b32.xlu0 %v1299, 15
  %v1376 = vpop.permute.xlu0 %1375
  %1377 = vrot.lane.b32.xlu0 %v1296, 15
  %v1378 = vpop.permute.xlu0 %1377
  %1379 = vrot.lane.b32.xlu0 %v1300, 15
  %v1380 = vpop.permute.xlu0 %1379
  %v1381 = vsel %vm296, %v1374, %v1378
  %v1382 = vsel %vm296, %v1376, %v1380
  %v1383 = vsel %vm296, %v1370, %v1374
  %v1384 = vsel %vm296, %v1372, %v1376
  %v1385 = vsel %vm296, %v1366, %v1370
  %v1386 = vsel %vm296, %v1368, %v1372
  %v1387 = vsel %vm296, %v1378, %v1366
  %v1388 = vsel %vm296, %v1380, %v1368
  %v1389 = vsel %vm305, %v1387, 0.0
  %v1390 = vsel %vm306, %v1385, 0.0
  %v1391 = vsel %vm307, %v1383, 0.0
  %v1392 = vsel %vm308, %v1381, 0.0
  %v1393 = vsel %vm305, %v1388, 0.0
  %v1394 = vsel %vm306, %v1386, 0.0
  %v1395 = vsel %vm307, %v1384, 0.0
  %v1396 = vsel %vm308, %v1382, 0.0
  %1397 = vrot.lane.b32.xlu0 %v1293, 1
  %v1398 = vpop.permute.xlu0 %1397
  %1399 = vrot.lane.b32.xlu0 %v1297, 1
  %v1400 = vpop.permute.xlu0 %1399
  %1401 = vrot.lane.b32.xlu0 %v1294, 1
  %v1402 = vpop.permute.xlu0 %1401
  %1403 = vrot.lane.b32.xlu0 %v1298, 1
  %v1404 = vpop.permute.xlu0 %1403
  %1405 = vrot.lane.b32.xlu0 %v1295, 1
  %v1406 = vpop.permute.xlu0 %1405
  %1407 = vrot.lane.b32.xlu0 %v1299, 1
  %v1408 = vpop.permute.xlu0 %1407
  %1409 = vrot.lane.b32.xlu0 %v1296, 1
  %v1410 = vpop.permute.xlu0 %1409
  %1411 = vrot.lane.b32.xlu0 %v1300, 1
  %v1412 = vpop.permute.xlu0 %1411
  %v1413 = vsel %vm321, %v1406, %v1410
  %v1414 = vsel %vm321, %v1408, %v1412
  %v1415 = vsel %vm321, %v1402, %v1406
  %v1416 = vsel %vm321, %v1404, %v1408
  %v1417 = vsel %vm321, %v1398, %v1402
  %v1418 = vsel %vm321, %v1400, %v1404
  %v1419 = vsel %vm321, %v1410, %v1398
  %v1420 = vsel %vm321, %v1412, %v1400
  %v1421 = vsel %vm330, %v1419, 0.0
  %v1422 = vsel %vm331, %v1417, 0.0
  %v1423 = vsel %vm332, %v1415, 0.0
  %v1424 = vsel %vm333, %v1413, 0.0
  %v1425 = vsel %vm330, %v1420, 0.0
  %v1426 = vsel %vm331, %v1418, 0.0
  %v1427 = vsel %vm332, %v1416, 0.0
  %v1428 = vsel %vm333, %v1414, 0.0
  %1429 = vrot.lane.b32.xlu0 %v1293, 127
  %v1430 = vpop.permute.xlu0 %1429
  %1431 = vrot.lane.b32.xlu0 %v1297, 127
  %v1432 = vpop.permute.xlu0 %1431
  %1433 = vrot.lane.b32.xlu0 %v1294, 127
  %v1434 = vpop.permute.xlu0 %1433
  %1435 = vrot.lane.b32.xlu0 %v1298, 127
  %v1436 = vpop.permute.xlu0 %1435
  %1437 = vrot.lane.b32.xlu0 %v1295, 127
  %v1438 = vpop.permute.xlu0 %1437
  %1439 = vrot.lane.b32.xlu0 %v1299, 127
  %v1440 = vpop.permute.xlu0 %1439
  %1441 = vrot.lane.b32.xlu0 %v1296, 127
  %v1442 = vpop.permute.xlu0 %1441
  %1443 = vrot.lane.b32.xlu0 %v1300, 127
  %v1444 = vpop.permute.xlu0 %1443
  %v1445 = vsel %vm346, %v1438, %v1442
  %v1446 = vsel %vm346, %v1440, %v1444
  %v1447 = vsel %vm346, %v1434, %v1438
  %v1448 = vsel %vm346, %v1436, %v1440
  %v1449 = vsel %vm346, %v1430, %v1434
  %v1450 = vsel %vm346, %v1432, %v1436
  %v1451 = vsel %vm346, %v1442, %v1430
  %v1452 = vsel %vm346, %v1444, %v1432
  %v1453 = vsel %vm355, %v1449, 0.0
  %v1454 = vsel %vm356, %v1447, 0.0
  %v1455 = vsel %vm357, %v1445, 0.0
  %v1456 = vsel %vm358, %v1451, 0.0
  %v1457 = vsel %vm355, %v1450, 0.0
  %v1458 = vsel %vm356, %v1448, 0.0
  %v1459 = vsel %vm357, %v1446, 0.0
  %v1460 = vsel %vm358, %v1452, 0.0
  %1461 = vrot.lane.b32.xlu0 %v1293, 113
  %v1462 = vpop.permute.xlu0 %1461
  %1463 = vrot.lane.b32.xlu0 %v1297, 113
  %v1464 = vpop.permute.xlu0 %1463
  %1465 = vrot.lane.b32.xlu0 %v1294, 113
  %v1466 = vpop.permute.xlu0 %1465
  %1467 = vrot.lane.b32.xlu0 %v1298, 113
  %v1468 = vpop.permute.xlu0 %1467
  %1469 = vrot.lane.b32.xlu0 %v1295, 113
  %v1470 = vpop.permute.xlu0 %1469
  %1471 = vrot.lane.b32.xlu0 %v1299, 113
  %v1472 = vpop.permute.xlu0 %1471
  %1473 = vrot.lane.b32.xlu0 %v1296, 113
  %v1474 = vpop.permute.xlu0 %1473
  %1475 = vrot.lane.b32.xlu0 %v1300, 113
  %v1476 = vpop.permute.xlu0 %1475
  %v1477 = vsel %vm371, %v1470, %v1474
  %v1478 = vsel %vm371, %v1472, %v1476
  %v1479 = vsel %vm371, %v1466, %v1470
  %v1480 = vsel %vm371, %v1468, %v1472
  %v1481 = vsel %vm371, %v1462, %v1466
  %v1482 = vsel %vm371, %v1464, %v1468
  %v1483 = vsel %vm371, %v1474, %v1462
  %v1484 = vsel %vm371, %v1476, %v1464
  %v1485 = vsel %vm380, %v1481, 0.0
  %v1486 = vsel %vm381, %v1479, 0.0
  %v1487 = vsel %vm382, %v1477, 0.0
  %v1488 = vsel %vm383, %v1483, 0.0
  %v1489 = vsel %vm380, %v1482, 0.0
  %v1490 = vsel %vm381, %v1480, 0.0
  %v1491 = vsel %vm382, %v1478, 0.0
  %v1492 = vsel %vm383, %v1484, 0.0
  %1493 = vrot.lane.b32.xlu0 %v1293, 112
  %v1494 = vpop.permute.xlu0 %1493
  %1495 = vrot.lane.b32.xlu0 %v1297, 112
  %v1496 = vpop.permute.xlu0 %1495
  %1497 = vrot.lane.b32.xlu0 %v1294, 112
  %v1498 = vpop.permute.xlu0 %1497
  %1499 = vrot.lane.b32.xlu0 %v1298, 112
  %v1500 = vpop.permute.xlu0 %1499
  %1501 = vrot.lane.b32.xlu0 %v1295, 112
  %v1502 = vpop.permute.xlu0 %1501
  %1503 = vrot.lane.b32.xlu0 %v1299, 112
  %v1504 = vpop.permute.xlu0 %1503
  %1505 = vrot.lane.b32.xlu0 %v1296, 112
  %v1506 = vpop.permute.xlu0 %1505
  %1507 = vrot.lane.b32.xlu0 %v1300, 112
  %v1508 = vpop.permute.xlu0 %1507
  %v1509 = vsel %vm396, %v1502, %v1506
  %v1510 = vsel %vm396, %v1504, %v1508
  %v1511 = vsel %vm396, %v1498, %v1502
  %v1512 = vsel %vm396, %v1500, %v1504
  %v1513 = vsel %vm396, %v1494, %v1498
  %v1514 = vsel %vm396, %v1496, %v1500
  %v1515 = vsel %vm396, %v1506, %v1494
  %v1516 = vsel %vm396, %v1508, %v1496
  %v1517 = vsel %vm405, %v1513, 0.0
  %v1518 = vsel %vm406, %v1511, 0.0
  %v1519 = vsel %vm407, %v1509, 0.0
  %v1520 = vsel %vm408, %v1515, 0.0
  %v1521 = vsel %vm405, %v1514, 0.0
  %v1522 = vsel %vm406, %v1512, 0.0
  %v1523 = vsel %vm407, %v1510, 0.0
  %v1524 = vsel %vm408, %v1516, 0.0
  %1525 = vrot.lane.b32.xlu0 %v1293, 111
  %v1526 = vpop.permute.xlu0 %1525
  %1527 = vrot.lane.b32.xlu0 %v1297, 111
  %v1528 = vpop.permute.xlu0 %1527
  %1529 = vrot.lane.b32.xlu0 %v1294, 111
  %v1530 = vpop.permute.xlu0 %1529
  %1531 = vrot.lane.b32.xlu0 %v1298, 111
  %v1532 = vpop.permute.xlu0 %1531
  %1533 = vrot.lane.b32.xlu0 %v1295, 111
  %v1534 = vpop.permute.xlu0 %1533
  %1535 = vrot.lane.b32.xlu0 %v1299, 111
  %v1536 = vpop.permute.xlu0 %1535
  %1537 = vrot.lane.b32.xlu0 %v1296, 111
  %v1538 = vpop.permute.xlu0 %1537
  %1539 = vrot.lane.b32.xlu0 %v1300, 111
  %v1540 = vpop.permute.xlu0 %1539
  %v1541 = vsel %vm421, %v1534, %v1538
  %v1542 = vsel %vm421, %v1536, %v1540
  %v1543 = vsel %vm421, %v1530, %v1534
  %v1544 = vsel %vm421, %v1532, %v1536
  %v1545 = vsel %vm421, %v1526, %v1530
  %v1546 = vsel %vm421, %v1528, %v1532
  %v1547 = vsel %vm421, %v1538, %v1526
  %v1548 = vsel %vm421, %v1540, %v1528
  %v1549 = vsel %vm430, %v1545, 0.0
  %v1550 = vsel %vm431, %v1543, 0.0
  %v1551 = vsel %vm432, %v1541, 0.0
  %v1552 = vsel %vm433, %v1547, 0.0
  %v1553 = vsel %vm430, %v1546, 0.0
  %v1554 = vsel %vm431, %v1544, 0.0
  %v1555 = vsel %vm432, %v1542, 0.0
  %v1556 = vsel %vm433, %v1548, 0.0
  %v1557 = vld [vmem:[%s9] sm:$0xff]
  %v1558 = vld [vmem:[%s9 + $0x8] sm:$0xff]
  %v1559 = vld [vmem:[%s9 + $0x10] sm:$0xff]
  %v1560 = vld [vmem:[%s9 + $0x18] sm:$0xff]
  %v1562 = vsel %vm909, %v1558, 0
  %v1565 = vsel %vm909, %v1560, 0
  %1567 = vmatprep.subr.mxu0 %v1326
  %1568 = vmatpush1.msra.mxu0 %v1325
  %1569 = vmatprep.subr.mxu0 %v1330
  %1570 = vmatpush1.msra.mxu0 %v1329
  %1571 = vmatprep.subr.mxu0 %v1358
  %1572 = vmatpush1.msra.mxu0 %v1357
  %1573 = vmatprep.subr.mxu0 %v1362
  %1574 = vmatpush1.msra.mxu0 %v1361
  %1575 = vmatprep.subr.mxu0 %v1390
  %1576 = vmatpush1.msra.mxu0 %v1389
  %1577 = vmatprep.subr.mxu0 %v1394
  %1578 = vmatpush1.msra.mxu0 %v1393
  %1579 = vmatprep.subr.mxu0 %v1422
  %1580 = vmatpush1.msra.mxu0 %v1421
  %1581 = vmatprep.subr.mxu0 %v1426
  %1582 = vmatpush1.msra.mxu0 %v1425
  %1583 = vmatprep.subr.mxu0 %v1294
  %1584 = vmatpush1.msra.mxu0 %v1293
  %1585 = vmatprep.subr.mxu0 %v1298
  %1586 = vmatpush1.msra.mxu0 %v1297
  %1587 = vmatprep.subr.mxu0 %v1454
  %1588 = vmatpush1.msra.mxu0 %v1453
  %1589 = vmatprep.subr.mxu0 %v1458
  %1590 = vmatpush1.msra.mxu0 %v1457
  %1591 = vmatprep.subr.mxu0 %v1486
  %1592 = vmatpush1.msra.mxu0 %v1485
  %1593 = vmatprep.subr.mxu0 %v1490
  %1594 = vmatpush1.msra.mxu0 %v1489
  %1595 = vmatprep.subr.mxu0 %v1518
  %1596 = vmatpush1.msra.mxu0 %v1517
  %1597 = vmatprep.subr.mxu0 %v1522
  %1598 = vmatpush1.msra.mxu0 %v1521
  %1599 = vmatprep.subr.mxu0 %v1550
  %1600 = vmatpush1.msra.mxu0 %v1549
  %1601 = vmatprep.subr.mxu0 %v1554
  %1602 = vmatpush1.msra.mxu0 %v1553
  %1603 = vmatprep.subr.mxu0 0.0
  %1604 = vmatpush1.msra.mxu0 0.0
  %1605 = vmatprep.subr.mxu0 0.0
  %1606 = vmatpush1.msra.mxu0 0.0
  %1607 = vmatprep.subr.mxu0 0.0
  %1608 = vmatpush1.msra.mxu0 0.0
  %1609 = vmatprep.subr.mxu0 0.0
  %1610 = vmatpush1.msra.mxu0 0.0
  %1611 = vmatprep.subr.mxu0 0.0
  %1612 = vmatpush1.msra.mxu0 0.0
  %1613 = vmatprep.subr.mxu0 0.0
  %1614 = vmatpush1.msra.mxu0 0.0
  %1615 = vmatprep.subr.mxu0 0.0
  %1616 = vmatpush1.msra.mxu0 0.0
  %1617 = vmatprep.subr.mxu0 0.0
  %1618 = vmatpush1.msra.mxu0 0.0
  %1619 = vmatprep.subr.mxu0 0.0
  %1620 = vmatpush1.msra.mxu0 0.0
  %1621 = vmatprep.subr.mxu0 0.0
  %1622 = vmatpush1.msra.mxu0 0.0
  %1623 = vmatprep.subr.mxu0 0.0
  %1624 = vmatpush1.msra.mxu0 0.0
  %1625 = vmatprep.subr.mxu0 0.0
  %1626 = vmatpush1.msra.mxu0 0.0
  %1627 = vmatprep.subr.mxu0 0.0
  %1628 = vmatpush1.msra.mxu0 0.0
  %1629 = vmatprep.subr.mxu0 0.0
  %1630 = vmatpush1.msra.mxu0 0.0
  %1631 = vmatprep.mubr.f32.mxu0 %v1562
  %1632 = vmatmul.mubr.f32.gmra.mrb[0].mxu0 %v1557
  %v1633 = vpop.f32.mrb[0].mxu0
  %v1634 = vadd.f32 0.0, %v1633
  %v1635 = vpop.f32.mrb[0].mxu0
  %v1636 = vadd.f32 0.0, %v1635
  %1637 = vmatprep.mubr.f32.mxu0 %v1565
  %1638 = vmatmul.mubr.f32.gmra.mrb[0].mxu0 %v1559
  %v1639 = vpop.f32.mrb[0].mxu0
  %v1640 = vadd.f32 0.0, %v1639
  %v1641 = vpop.f32.mrb[0].mxu0
  %v1642 = vadd.f32 0.0, %v1641
  %1643 = vdwg.mxu0
  %1644 = vmatprep.subr.mxu0 %v1328
  %1645 = vmatpush1.msra.mxu0 %v1327
  %1646 = vmatprep.subr.mxu0 %v1332
  %1647 = vmatpush1.msra.mxu0 %v1331
  %1648 = vmatprep.subr.mxu0 %v1360
  %1649 = vmatpush1.msra.mxu0 %v1359
  %1650 = vmatprep.subr.mxu0 %v1364
  %1651 = vmatpush1.msra.mxu0 %v1363
  %1652 = vmatprep.subr.mxu0 %v1392
  %1653 = vmatpush1.msra.mxu0 %v1391
  %1654 = vmatprep.subr.mxu0 %v1396
  %1655 = vmatpush1.msra.mxu0 %v1395
  %1656 = vmatprep.subr.mxu0 %v1424
  %1657 = vmatpush1.msra.mxu0 %v1423
  %1658 = vmatprep.subr.mxu0 %v1428
  %1659 = vmatpush1.msra.mxu0 %v1427
  %1660 = vmatprep.subr.mxu0 %v1296
  %1661 = vmatpush1.msra.mxu0 %v1295
  %1662 = vmatprep.subr.mxu0 %v1300
  %1663 = vmatpush1.msra.mxu0 %v1299
  %1664 = vmatprep.subr.mxu0 %v1456
  %1665 = vmatpush1.msra.mxu0 %v1455
  %1666 = vmatprep.subr.mxu0 %v1460
  %1667 = vmatpush1.msra.mxu0 %v1459
  %1668 = vmatprep.subr.mxu0 %v1488
  %1669 = vmatpush1.msra.mxu0 %v1487
  %1670 = vmatprep.subr.mxu0 %v1492
  %1671 = vmatpush1.msra.mxu0 %v1491
  %1672 = vmatprep.subr.mxu0 %v1520
  %1673 = vmatpush1.msra.mxu0 %v1519
  %1674 = vmatprep.subr.mxu0 %v1524
  %1675 = vmatpush1.msra.mxu0 %v1523
  %1676 = vmatprep.subr.mxu0 %v1552
  %1677 = vmatpush1.msra.mxu0 %v1551
  %1678 = vmatprep.subr.mxu0 %v1556
  %1679 = vmatpush1.msra.mxu0 %v1555
  %1680 = vmatprep.subr.mxu0 0.0
  %1681 = vmatpush1.msra.mxu0 0.0
  %1682 = vmatprep.subr.mxu0 0.0
  %1683 = vmatpush1.msra.mxu0 0.0
  %1684 = vmatprep.subr.mxu0 0.0
  %1685 = vmatpush1.msra.mxu0 0.0
  %1686 = vmatprep.subr.mxu0 0.0
  %1687 = vmatpush1.msra.mxu0 0.0
  %1688 = vmatprep.subr.mxu0 0.0
  %1689 = vmatpush1.msra.mxu0 0.0
  %1690 = vmatprep.subr.mxu0 0.0
  %1691 = vmatpush1.msra.mxu0 0.0
  %1692 = vmatprep.subr.mxu0 0.0
  %1693 = vmatpush1.msra.mxu0 0.0
  %1694 = vmatprep.subr.mxu0 0.0
  %1695 = vmatpush1.msra.mxu0 0.0
  %1696 = vmatprep.subr.mxu0 0.0
  %1697 = vmatpush1.msra.mxu0 0.0
  %1698 = vmatprep.subr.mxu0 0.0
  %1699 = vmatpush1.msra.mxu0 0.0
  %1700 = vmatprep.subr.mxu0 0.0
  %1701 = vmatpush1.msra.mxu0 0.0
  %1702 = vmatprep.subr.mxu0 0.0
  %1703 = vmatpush1.msra.mxu0 0.0
  %1704 = vmatprep.subr.mxu0 0.0
  %1705 = vmatpush1.msra.mxu0 0.0
  %1706 = vmatprep.subr.mxu0 0.0
  %1707 = vmatpush1.msra.mxu0 0.0
  %1708 = vmatprep.mubr.f32.mxu0 %v1562
  %1709 = vmatmul.mubr.f32.gmra.mrb[0].mxu0 %v1557
  %v1710 = vpop.f32.mrb[0].mxu0
  %v1711 = vadd.f32 0.0, %v1710
  %v1712 = vpop.f32.mrb[0].mxu0
  %v1713 = vadd.f32 0.0, %v1712
  %1714 = vmatprep.mubr.f32.mxu0 %v1565
  %1715 = vmatmul.mubr.f32.gmra.mrb[0].mxu0 %v1559
  %v1716 = vpop.f32.mrb[0].mxu0
  %v1717 = vadd.f32 0.0, %v1716
  %v1718 = vpop.f32.mrb[0].mxu0
  %v1719 = vadd.f32 0.0, %v1718
  %1720 = vdwg.mxu0
  %v1721 = vld [vmem:[%s10] sm:$0xff]
  %v1722 = vld [vmem:[%s10 + $0x8] sm:$0xff]
  %1724 = vset.pattern.permute.xlu0 0
  %1725 = vperm.xlu0 %1724, %v1721
  %v1726 = vpop.permute.xlu0 %1725
  %1729 = vset.pattern.permute.xlu0 0
  %1730 = vperm.xlu0 %1729, %v1722
  %v1731 = vpop.permute.xlu0 %1730
  %v1733 = vmul.f32 %v1634, %v1726
  %v1734 = vmul.f32 %v1636, %v1726
  %v1735 = vmul.f32 %v1711, %v1726
  %v1736 = vmul.f32 %v1713, %v1726
  %v1737 = vmul.f32 %v1640, %v1731
  %v1738 = vmul.f32 %v1642, %v1731
  %v1739 = vmul.f32 %v1717, %v1731
  %v1740 = vmul.f32 %v1719, %v1731
  %v1741 = vld [vmem:[%s11] sm:$0xff]
  %v1742 = vld [vmem:[%s11 + $0x8] sm:$0xff]
  %1744 = vset.pattern.permute.xlu0 0
  %1745 = vperm.xlu0 %1744, %v1741
  %v1746 = vpop.permute.xlu0 %1745
  %1749 = vset.pattern.permute.xlu0 0
  %1750 = vperm.xlu0 %1749, %v1742
  %v1751 = vpop.permute.xlu0 %1750
  %v1753 = vadd.f32 %v1733, %v1746
  %v1754 = vadd.f32 %v1734, %v1746
  %v1755 = vadd.f32 %v1735, %v1746
  %v1756 = vadd.f32 %v1736, %v1746
  %v1757 = vadd.f32 %v1737, %v1751
  %v1758 = vadd.f32 %v1738, %v1751
  %v1759 = vadd.f32 %v1739, %v1751
  %v1760 = vadd.f32 %v1740, %v1751
  %v1761 = vmax.f32 %v1753, 0.0
  %v1762 = vmax.f32 %v1754, 0.0
  %v1763 = vmax.f32 %v1755, 0.0
  %v1764 = vmax.f32 %v1756, 0.0
  %v1765 = vmax.f32 %v1757, 0.0
  %v1766 = vmax.f32 %v1758, 0.0
  %v1767 = vmax.f32 %v1759, 0.0
  %v1768 = vmax.f32 %v1760, 0.0
  %1769 = vrot.lane.b32.xlu0 %v1761, 17
  %v1770 = vpop.permute.xlu0 %1769
  %1771 = vrot.lane.b32.xlu0 %v1765, 17
  %v1772 = vpop.permute.xlu0 %1771
  %1773 = vrot.lane.b32.xlu0 %v1762, 17
  %v1774 = vpop.permute.xlu0 %1773
  %1775 = vrot.lane.b32.xlu0 %v1766, 17
  %v1776 = vpop.permute.xlu0 %1775
  %1777 = vrot.lane.b32.xlu0 %v1763, 17
  %v1778 = vpop.permute.xlu0 %1777
  %1779 = vrot.lane.b32.xlu0 %v1767, 17
  %v1780 = vpop.permute.xlu0 %1779
  %1781 = vrot.lane.b32.xlu0 %v1764, 17
  %v1782 = vpop.permute.xlu0 %1781
  %1783 = vrot.lane.b32.xlu0 %v1768, 17
  %v1784 = vpop.permute.xlu0 %1783
  %v1785 = vsel %vm246, %v1778, %v1782
  %v1786 = vsel %vm246, %v1780, %v1784
  %v1787 = vsel %vm246, %v1774, %v1778
  %v1788 = vsel %vm246, %v1776, %v1780
  %v1789 = vsel %vm246, %v1770, %v1774
  %v1790 = vsel %vm246, %v1772, %v1776
  %v1791 = vsel %vm246, %v1782, %v1770
  %v1792 = vsel %vm246, %v1784, %v1772
  %v1793 = vsel %vm255, %v1791, 0.0
  %v1794 = vsel %vm256, %v1789, 0.0
  %v1795 = vsel %vm257, %v1787, 0.0
  %v1796 = vsel %vm258, %v1785, 0.0
  %v1797 = vsel %vm255, %v1792, 0.0
  %v1798 = vsel %vm256, %v1790, 0.0
  %v1799 = vsel %vm257, %v1788, 0.0
  %v1800 = vsel %vm258, %v1786, 0.0
  %1801 = vrot.lane.b32.xlu0 %v1761, 16
  %v1802 = vpop.permute.xlu0 %1801
  %1803 = vrot.lane.b32.xlu0 %v1765, 16
  %v1804 = vpop.permute.xlu0 %1803
  %1805 = vrot.lane.b32.xlu0 %v1762, 16
  %v1806 = vpop.permute.xlu0 %1805
  %1807 = vrot.lane.b32.xlu0 %v1766, 16
  %v1808 = vpop.permute.xlu0 %1807
  %1809 = vrot.lane.b32.xlu0 %v1763, 16
  %v1810 = vpop.permute.xlu0 %1809
  %1811 = vrot.lane.b32.xlu0 %v1767, 16
  %v1812 = vpop.permute.xlu0 %1811
  %1813 = vrot.lane.b32.xlu0 %v1764, 16
  %v1814 = vpop.permute.xlu0 %1813
  %1815 = vrot.lane.b32.xlu0 %v1768, 16
  %v1816 = vpop.permute.xlu0 %1815
  %v1817 = vsel %vm271, %v1810, %v1814
  %v1818 = vsel %vm271, %v1812, %v1816
  %v1819 = vsel %vm271, %v1806, %v1810
  %v1820 = vsel %vm271, %v1808, %v1812
  %v1821 = vsel %vm271, %v1802, %v1806
  %v1822 = vsel %vm271, %v1804, %v1808
  %v1823 = vsel %vm271, %v1814, %v1802
  %v1824 = vsel %vm271, %v1816, %v1804
  %v1825 = vsel %vm280, %v1823, 0.0
  %v1826 = vsel %vm281, %v1821, 0.0
  %v1827 = vsel %vm282, %v1819, 0.0
  %v1828 = vsel %vm283, %v1817, 0.0
  %v1829 = vsel %vm280, %v1824, 0.0
  %v1830 = vsel %vm281, %v1822, 0.0
  %v1831 = vsel %vm282, %v1820, 0.0
  %v1832 = vsel %vm283, %v1818, 0.0
  %1833 = vrot.lane.b32.xlu0 %v1761, 15
  %v1834 = vpop.permute.xlu0 %1833
  %1835 = vrot.lane.b32.xlu0 %v1765, 15
  %v1836 = vpop.permute.xlu0 %1835
  %1837 = vrot.lane.b32.xlu0 %v1762, 15
  %v1838 = vpop.permute.xlu0 %1837
  %1839 = vrot.lane.b32.xlu0 %v1766, 15
  %v1840 = vpop.permute.xlu0 %1839
  %1841 = vrot.lane.b32.xlu0 %v1763, 15
  %v1842 = vpop.permute.xlu0 %1841
  %1843 = vrot.lane.b32.xlu0 %v1767, 15
  %v1844 = vpop.permute.xlu0 %1843
  %1845 = vrot.lane.b32.xlu0 %v1764, 15
  %v1846 = vpop.permute.xlu0 %1845
  %1847 = vrot.lane.b32.xlu0 %v1768, 15
  %v1848 = vpop.permute.xlu0 %1847
  %v1849 = vsel %vm296, %v1842, %v1846
  %v1850 = vsel %vm296, %v1844, %v1848
  %v1851 = vsel %vm296, %v1838, %v1842
  %v1852 = vsel %vm296, %v1840, %v1844
  %v1853 = vsel %vm296, %v1834, %v1838
  %v1854 = vsel %vm296, %v1836, %v1840
  %v1855 = vsel %vm296, %v1846, %v1834
  %v1856 = vsel %vm296, %v1848, %v1836
  %v1857 = vsel %vm305, %v1855, 0.0
  %v1858 = vsel %vm306, %v1853, 0.0
  %v1859 = vsel %vm307, %v1851, 0.0
  %v1860 = vsel %vm308, %v1849, 0.0
  %v1861 = vsel %vm305, %v1856, 0.0
  %v1862 = vsel %vm306, %v1854, 0.0
  %v1863 = vsel %vm307, %v1852, 0.0
  %v1864 = vsel %vm308, %v1850, 0.0
  %1865 = vrot.lane.b32.xlu0 %v1761, 1
  %v1866 = vpop.permute.xlu0 %1865
  %1867 = vrot.lane.b32.xlu0 %v1765, 1
  %v1868 = vpop.permute.xlu0 %1867
  %1869 = vrot.lane.b32.xlu0 %v1762, 1
  %v1870 = vpop.permute.xlu0 %1869
  %1871 = vrot.lane.b32.xlu0 %v1766, 1
  %v1872 = vpop.permute.xlu0 %1871
  %1873 = vrot.lane.b32.xlu0 %v1763, 1
  %v1874 = vpop.permute.xlu0 %1873
  %1875 = vrot.lane.b32.xlu0 %v1767, 1
  %v1876 = vpop.permute.xlu0 %1875
  %1877 = vrot.lane.b32.xlu0 %v1764, 1
  %v1878 = vpop.permute.xlu0 %1877
  %1879 = vrot.lane.b32.xlu0 %v1768, 1
  %v1880 = vpop.permute.xlu0 %1879
  %v1881 = vsel %vm321, %v1874, %v1878
  %v1882 = vsel %vm321, %v1876, %v1880
  %v1883 = vsel %vm321, %v1870, %v1874
  %v1884 = vsel %vm321, %v1872, %v1876
  %v1885 = vsel %vm321, %v1866, %v1870
  %v1886 = vsel %vm321, %v1868, %v1872
  %v1887 = vsel %vm321, %v1878, %v1866
  %v1888 = vsel %vm321, %v1880, %v1868
  %v1889 = vsel %vm330, %v1887, 0.0
  %v1890 = vsel %vm331, %v1885, 0.0
  %v1891 = vsel %vm332, %v1883, 0.0
  %v1892 = vsel %vm333, %v1881, 0.0
  %v1893 = vsel %vm330, %v1888, 0.0
  %v1894 = vsel %vm331, %v1886, 0.0
  %v1895 = vsel %vm332, %v1884, 0.0
  %v1896 = vsel %vm333, %v1882, 0.0
  %1897 = vrot.lane.b32.xlu0 %v1761, 127
  %v1898 = vpop.permute.xlu0 %1897
  %1899 = vrot.lane.b32.xlu0 %v1765, 127
  %v1900 = vpop.permute.xlu0 %1899
  %1901 = vrot.lane.b32.xlu0 %v1762, 127
  %v1902 = vpop.permute.xlu0 %1901
  %1903 = vrot.lane.b32.xlu0 %v1766, 127
  %v1904 = vpop.permute.xlu0 %1903
  %1905 = vrot.lane.b32.xlu0 %v1763, 127
  %v1906 = vpop.permute.xlu0 %1905
  %1907 = vrot.lane.b32.xlu0 %v1767, 127
  %v1908 = vpop.permute.xlu0 %1907
  %1909 = vrot.lane.b32.xlu0 %v1764, 127
  %v1910 = vpop.permute.xlu0 %1909
  %1911 = vrot.lane.b32.xlu0 %v1768, 127
  %v1912 = vpop.permute.xlu0 %1911
  %v1913 = vsel %vm346, %v1906, %v1910
  %v1914 = vsel %vm346, %v1908, %v1912
  %v1915 = vsel %vm346, %v1902, %v1906
  %v1916 = vsel %vm346, %v1904, %v1908
  %v1917 = vsel %vm346, %v1898, %v1902
  %v1918 = vsel %vm346, %v1900, %v1904
  %v1919 = vsel %vm346, %v1910, %v1898
  %v1920 = vsel %vm346, %v1912, %v1900
  %v1921 = vsel %vm355, %v1917, 0.0
  %v1922 = vsel %vm356, %v1915, 0.0
  %v1923 = vsel %vm357, %v1913, 0.0
  %v1924 = vsel %vm358, %v1919, 0.0
  %v1925 = vsel %vm355, %v1918, 0.0
  %v1926 = vsel %vm356, %v1916, 0.0
  %v1927 = vsel %vm357, %v1914, 0.0
  %v1928 = vsel %vm358, %v1920, 0.0
  %1929 = vrot.lane.b32.xlu0 %v1761, 113
  %v1930 = vpop.permute.xlu0 %1929
  %1931 = vrot.lane.b32.xlu0 %v1765, 113
  %v1932 = vpop.permute.xlu0 %1931
  %1933 = vrot.lane.b32.xlu0 %v1762, 113
  %v1934 = vpop.permute.xlu0 %1933
  %1935 = vrot.lane.b32.xlu0 %v1766, 113
  %v1936 = vpop.permute.xlu0 %1935
  %1937 = vrot.lane.b32.xlu0 %v1763, 113
  %v1938 = vpop.permute.xlu0 %1937
  %1939 = vrot.lane.b32.xlu0 %v1767, 113
  %v1940 = vpop.permute.xlu0 %1939
  %1941 = vrot.lane.b32.xlu0 %v1764, 113
  %v1942 = vpop.permute.xlu0 %1941
  %1943 = vrot.lane.b32.xlu0 %v1768, 113
  %v1944 = vpop.permute.xlu0 %1943
  %v1945 = vsel %vm371, %v1938, %v1942
  %v1946 = vsel %vm371, %v1940, %v1944
  %v1947 = vsel %vm371, %v1934, %v1938
  %v1948 = vsel %vm371, %v1936, %v1940
  %v1949 = vsel %vm371, %v1930, %v1934
  %v1950 = vsel %vm371, %v1932, %v1936
  %v1951 = vsel %vm371, %v1942, %v1930
  %v1952 = vsel %vm371, %v1944, %v1932
  %v1953 = vsel %vm380, %v1949, 0.0
  %v1954 = vsel %vm381, %v1947, 0.0
  %v1955 = vsel %vm382, %v1945, 0.0
  %v1956 = vsel %vm383, %v1951, 0.0
  %v1957 = vsel %vm380, %v1950, 0.0
  %v1958 = vsel %vm381, %v1948, 0.0
  %v1959 = vsel %vm382, %v1946, 0.0
  %v1960 = vsel %vm383, %v1952, 0.0
  %1961 = vrot.lane.b32.xlu0 %v1761, 112
  %v1962 = vpop.permute.xlu0 %1961
  %1963 = vrot.lane.b32.xlu0 %v1765, 112
  %v1964 = vpop.permute.xlu0 %1963
  %1965 = vrot.lane.b32.xlu0 %v1762, 112
  %v1966 = vpop.permute.xlu0 %1965
  %1967 = vrot.lane.b32.xlu0 %v1766, 112
  %v1968 = vpop.permute.xlu0 %1967
  %1969 = vrot.lane.b32.xlu0 %v1763, 112
  %v1970 = vpop.permute.xlu0 %1969
  %1971 = vrot.lane.b32.xlu0 %v1767, 112
  %v1972 = vpop.permute.xlu0 %1971
  %1973 = vrot.lane.b32.xlu0 %v1764, 112
  %v1974 = vpop.permute.xlu0 %1973
  %1975 = vrot.lane.b32.xlu0 %v1768, 112
  %v1976 = vpop.permute.xlu0 %1975
  %v1977 = vsel %vm396, %v1970, %v1974
  %v1978 = vsel %vm396, %v1972, %v1976
  %v1979 = vsel %vm396, %v1966, %v1970
  %v1980 = vsel %vm396, %v1968, %v1972
  %v1981 = vsel %vm396, %v1962, %v1966
  %v1982 = vsel %vm396, %v1964, %v1968
  %v1983 = vsel %vm396, %v1974, %v1962
  %v1984 = vsel %vm396, %v1976, %v1964
  %v1985 = vsel %vm405, %v1981, 0.0
  %v1986 = vsel %vm406, %v1979, 0.0
  %v1987 = vsel %vm407, %v1977, 0.0
  %v1988 = vsel %vm408, %v1983, 0.0
  %v1989 = vsel %vm405, %v1982, 0.0
  %v1990 = vsel %vm406, %v1980, 0.0
  %v1991 = vsel %vm407, %v1978, 0.0
  %v1992 = vsel %vm408, %v1984, 0.0
  %1993 = vrot.lane.b32.xlu0 %v1761, 111
  %v1994 = vpop.permute.xlu0 %1993
  %1995 = vrot.lane.b32.xlu0 %v1765, 111
  %v1996 = vpop.permute.xlu0 %1995
  %1997 = vrot.lane.b32.xlu0 %v1762, 111
  %v1998 = vpop.permute.xlu0 %1997
  %1999 = vrot.lane.b32.xlu0 %v1766, 111
  %v2000 = vpop.permute.xlu0 %1999
  %2001 = vrot.lane.b32.xlu0 %v1763, 111
  %v2002 = vpop.permute.xlu0 %2001
  %2003 = vrot.lane.b32.xlu0 %v1767, 111
  %v2004 = vpop.permute.xlu0 %2003
  %2005 = vrot.lane.b32.xlu0 %v1764, 111
  %v2006 = vpop.permute.xlu0 %2005
  %2007 = vrot.lane.b32.xlu0 %v1768, 111
  %v2008 = vpop.permute.xlu0 %2007
  %v2009 = vsel %vm421, %v2002, %v2006
  %v2010 = vsel %vm421, %v2004, %v2008
  %v2011 = vsel %vm421, %v1998, %v2002
  %v2012 = vsel %vm421, %v2000, %v2004
  %v2013 = vsel %vm421, %v1994, %v1998
  %v2014 = vsel %vm421, %v1996, %v2000
  %v2015 = vsel %vm421, %v2006, %v1994
  %v2016 = vsel %vm421, %v2008, %v1996
  %v2017 = vsel %vm430, %v2013, 0.0
  %v2018 = vsel %vm431, %v2011, 0.0
  %v2019 = vsel %vm432, %v2009, 0.0
  %v2020 = vsel %vm433, %v2015, 0.0
  %v2021 = vsel %vm430, %v2014, 0.0
  %v2022 = vsel %vm431, %v2012, 0.0
  %v2023 = vsel %vm432, %v2010, 0.0
  %v2024 = vsel %vm433, %v2016, 0.0
  %v2025 = vld [vmem:[%s12] sm:$0xff]
  %v2026 = vld [vmem:[%s12 + $0x8] sm:$0xff]
  %v2027 = vld [vmem:[%s12 + $0x10] sm:$0xff]
  %v2028 = vld [vmem:[%s12 + $0x18] sm:$0xff]
  %v2030 = vsel %vm909, %v2026, 0
  %v2033 = vsel %vm909, %v2028, 0
  %2035 = vmatprep.subr.mxu0 %v1794
  %2036 = vmatpush1.msra.mxu0 %v1793
  %2037 = vmatprep.subr.mxu0 %v1798
  %2038 = vmatpush1.msra.mxu0 %v1797
  %2039 = vmatprep.subr.mxu0 %v1826
  %2040 = vmatpush1.msra.mxu0 %v1825
  %2041 = vmatprep.subr.mxu0 %v1830
  %2042 = vmatpush1.msra.mxu0 %v1829
  %2043 = vmatprep.subr.mxu0 %v1858
  %2044 = vmatpush1.msra.mxu0 %v1857
  %2045 = vmatprep.subr.mxu0 %v1862
  %2046 = vmatpush1.msra.mxu0 %v1861
  %2047 = vmatprep.subr.mxu0 %v1890
  %2048 = vmatpush1.msra.mxu0 %v1889
  %2049 = vmatprep.subr.mxu0 %v1894
  %2050 = vmatpush1.msra.mxu0 %v1893
  %2051 = vmatprep.subr.mxu0 %v1762
  %2052 = vmatpush1.msra.mxu0 %v1761
  %2053 = vmatprep.subr.mxu0 %v1766
  %2054 = vmatpush1.msra.mxu0 %v1765
  %2055 = vmatprep.subr.mxu0 %v1922
  %2056 = vmatpush1.msra.mxu0 %v1921
  %2057 = vmatprep.subr.mxu0 %v1926
  %2058 = vmatpush1.msra.mxu0 %v1925
  %2059 = vmatprep.subr.mxu0 %v1954
  %2060 = vmatpush1.msra.mxu0 %v1953
  %2061 = vmatprep.subr.mxu0 %v1958
  %2062 = vmatpush1.msra.mxu0 %v1957
  %2063 = vmatprep.subr.mxu0 %v1986
  %2064 = vmatpush1.msra.mxu0 %v1985
  %2065 = vmatprep.subr.mxu0 %v1990
  %2066 = vmatpush1.msra.mxu0 %v1989
  %2067 = vmatprep.subr.mxu0 %v2018
  %2068 = vmatpush1.msra.mxu0 %v2017
  %2069 = vmatprep.subr.mxu0 %v2022
  %2070 = vmatpush1.msra.mxu0 %v2021
  %2071 = vmatprep.subr.mxu0 0.0
  %2072 = vmatpush1.msra.mxu0 0.0
  %2073 = vmatprep.subr.mxu0 0.0
  %2074 = vmatpush1.msra.mxu0 0.0
  %2075 = vmatprep.subr.mxu0 0.0
  %2076 = vmatpush1.msra.mxu0 0.0
  %2077 = vmatprep.subr.mxu0 0.0
  %2078 = vmatpush1.msra.mxu0 0.0
  %2079 = vmatprep.subr.mxu0 0.0
  %2080 = vmatpush1.msra.mxu0 0.0
  %2081 = vmatprep.subr.mxu0 0.0
  %2082 = vmatpush1.msra.mxu0 0.0
  %2083 = vmatprep.subr.mxu0 0.0
  %2084 = vmatpush1.msra.mxu0 0.0
  %2085 = vmatprep.subr.mxu0 0.0
  %2086 = vmatpush1.msra.mxu0 0.0
  %2087 = vmatprep.subr.mxu0 0.0
  %2088 = vmatpush1.msra.mxu0 0.0
  %2089 = vmatprep.subr.mxu0 0.0
  %2090 = vmatpush1.msra.mxu0 0.0
  %2091 = vmatprep.subr.mxu0 0.0
  %2092 = vmatpush1.msra.mxu0 0.0
  %2093 = vmatprep.subr.mxu0 0.0
  %2094 = vmatpush1.msra.mxu0 0.0
  %2095 = vmatprep.subr.mxu0 0.0
  %2096 = vmatpush1.msra.mxu0 0.0
  %2097 = vmatprep.subr.mxu0 0.0
  %2098 = vmatpush1.msra.mxu0 0.0
  %2099 = vmatprep.mubr.f32.mxu0 %v2030
  %2100 = vmatmul.mubr.f32.gmra.mrb[0].mxu0 %v2025
  %v2101 = vpop.f32.mrb[0].mxu0
  %v2102 = vadd.f32 0.0, %v2101
  %v2103 = vpop.f32.mrb[0].mxu0
  %v2104 = vadd.f32 0.0, %v2103
  %2105 = vmatprep.mubr.f32.mxu0 %v2033
  %2106 = vmatmul.mubr.f32.gmra.mrb[0].mxu0 %v2027
  %v2107 = vpop.f32.mrb[0].mxu0
  %v2108 = vadd.f32 0.0, %v2107
  %v2109 = vpop.f32.mrb[0].mxu0
  %v2110 = vadd.f32 0.0, %v2109
  %2111 = vdwg.mxu0
  %2112 = vmatprep.subr.mxu0 %v1796
  %2113 = vmatpush1.msra.mxu0 %v1795
  %2114 = vmatprep.subr.mxu0 %v1800
  %2115 = vmatpush1.msra.mxu0 %v1799
  %2116 = vmatprep.subr.mxu0 %v1828
  %2117 = vmatpush1.msra.mxu0 %v1827
  %2118 = vmatprep.subr.mxu0 %v1832
  %2119 = vmatpush1.msra.mxu0 %v1831
  %2120 = vmatprep.subr.mxu0 %v1860
  %2121 = vmatpush1.msra.mxu0 %v1859
  %2122 = vmatprep.subr.mxu0 %v1864
  %2123 = vmatpush1.msra.mxu0 %v1863
  %2124 = vmatprep.subr.mxu0 %v1892
  %2125 = vmatpush1.msra.mxu0 %v1891
  %2126 = vmatprep.subr.mxu0 %v1896
  %2127 = vmatpush1.msra.mxu0 %v1895
  %2128 = vmatprep.subr.mxu0 %v1764
  %2129 = vmatpush1.msra.mxu0 %v1763
  %2130 = vmatprep.subr.mxu0 %v1768
  %2131 = vmatpush1.msra.mxu0 %v1767
  %2132 = vmatprep.subr.mxu0 %v1924
  %2133 = vmatpush1.msra.mxu0 %v1923
  %2134 = vmatprep.subr.mxu0 %v1928
  %2135 = vmatpush1.msra.mxu0 %v1927
  %2136 = vmatprep.subr.mxu0 %v1956
  %2137 = vmatpush1.msra.mxu0 %v1955
  %2138 = vmatprep.subr.mxu0 %v1960
  %2139 = vmatpush1.msra.mxu0 %v1959
  %2140 = vmatprep.subr.mxu0 %v1988
  %2141 = vmatpush1.msra.mxu0 %v1987
  %2142 = vmatprep.subr.mxu0 %v1992
  %2143 = vmatpush1.msra.mxu0 %v1991
  %2144 = vmatprep.subr.mxu0 %v2020
  %2145 = vmatpush1.msra.mxu0 %v2019
  %2146 = vmatprep.subr.mxu0 %v2024
  %2147 = vmatpush1.msra.mxu0 %v2023
  %2148 = vmatprep.subr.mxu0 0.0
  %2149 = vmatpush1.msra.mxu0 0.0
  %2150 = vmatprep.subr.mxu0 0.0
  %2151 = vmatpush1.msra.mxu0 0.0
  %2152 = vmatprep.subr.mxu0 0.0
  %2153 = vmatpush1.msra.mxu0 0.0
  %2154 = vmatprep.subr.mxu0 0.0
  %2155 = vmatpush1.msra.mxu0 0.0
  %2156 = vmatprep.subr.mxu0 0.0
  %2157 = vmatpush1.msra.mxu0 0.0
  %2158 = vmatprep.subr.mxu0 0.0
  %2159 = vmatpush1.msra.mxu0 0.0
  %2160 = vmatprep.subr.mxu0 0.0
  %2161 = vmatpush1.msra.mxu0 0.0
  %2162 = vmatprep.subr.mxu0 0.0
  %2163 = vmatpush1.msra.mxu0 0.0
  %2164 = vmatprep.subr.mxu0 0.0
  %2165 = vmatpush1.msra.mxu0 0.0
  %2166 = vmatprep.subr.mxu0 0.0
  %2167 = vmatpush1.msra.mxu0 0.0
  %2168 = vmatprep.subr.mxu0 0.0
  %2169 = vmatpush1.msra.mxu0 0.0
  %2170 = vmatprep.subr.mxu0 0.0
  %2171 = vmatpush1.msra.mxu0 0.0
  %2172 = vmatprep.subr.mxu0 0.0
  %2173 = vmatpush1.msra.mxu0 0.0
  %2174 = vmatprep.subr.mxu0 0.0
  %2175 = vmatpush1.msra.mxu0 0.0
  %2176 = vmatprep.mubr.f32.mxu0 %v2030
  %2177 = vmatmul.mubr.f32.gmra.mrb[0].mxu0 %v2025
  %v2178 = vpop.f32.mrb[0].mxu0
  %v2179 = vadd.f32 0.0, %v2178
  %v2180 = vpop.f32.mrb[0].mxu0
  %v2181 = vadd.f32 0.0, %v2180
  %2182 = vmatprep.mubr.f32.mxu0 %v2033
  %2183 = vmatmul.mubr.f32.gmra.mrb[0].mxu0 %v2027
  %v2184 = vpop.f32.mrb[0].mxu0
  %v2185 = vadd.f32 0.0, %v2184
  %v2186 = vpop.f32.mrb[0].mxu0
  %v2187 = vadd.f32 0.0, %v2186
  %2188 = vdwg.mxu0
  %v2189 = vld [vmem:[%s13] sm:$0xff]
  %v2190 = vld [vmem:[%s13 + $0x8] sm:$0xff]
  %2192 = vset.pattern.permute.xlu0 0
  %2193 = vperm.xlu0 %2192, %v2189
  %v2194 = vpop.permute.xlu0 %2193
  %2197 = vset.pattern.permute.xlu0 0
  %2198 = vperm.xlu0 %2197, %v2190
  %v2199 = vpop.permute.xlu0 %2198
  %v2201 = vmul.f32 %v2102, %v2194
  %v2202 = vmul.f32 %v2104, %v2194
  %v2203 = vmul.f32 %v2179, %v2194
  %v2204 = vmul.f32 %v2181, %v2194
  %v2205 = vmul.f32 %v2108, %v2199
  %v2206 = vmul.f32 %v2110, %v2199
  %v2207 = vmul.f32 %v2185, %v2199
  %v2208 = vmul.f32 %v2187, %v2199
  %v2209 = vld [vmem:[%s14] sm:$0xff]
  %v2210 = vld [vmem:[%s14 + $0x8] sm:$0xff]
  %2212 = vset.pattern.permute.xlu0 0
  %2213 = vperm.xlu0 %2212, %v2209
  %v2214 = vpop.permute.xlu0 %2213
  %2217 = vset.pattern.permute.xlu0 0
  %2218 = vperm.xlu0 %2217, %v2210
  %v2219 = vpop.permute.xlu0 %2218
  %v2221 = vadd.f32 %v2201, %v2214
  %v2222 = vadd.f32 %v2202, %v2214
  %v2223 = vadd.f32 %v2203, %v2214
  %v2224 = vadd.f32 %v2204, %v2214
  %v2225 = vadd.f32 %v2205, %v2219
  %v2226 = vadd.f32 %v2206, %v2219
  %v2227 = vadd.f32 %v2207, %v2219
  %v2228 = vadd.f32 %v2208, %v2219
  %v2229 = vmax.f32 %v2221, 0.0
  %v2230 = vmax.f32 %v2222, 0.0
  %v2231 = vmax.f32 %v2223, 0.0
  %v2232 = vmax.f32 %v2224, 0.0
  %v2233 = vmax.f32 %v2225, 0.0
  %v2234 = vmax.f32 %v2226, 0.0
  %v2235 = vmax.f32 %v2227, 0.0
  %v2236 = vmax.f32 %v2228, 0.0
  %v2237 = vadd.f32 %v2229, %v1293
  %v2238 = vadd.f32 %v2230, %v1294
  %v2239 = vadd.f32 %v2231, %v1295
  %v2240 = vadd.f32 %v2232, %v1296
  %v2241 = vadd.f32 %v2233, %v1297
  %v2242 = vadd.f32 %v2234, %v1298
  %v2243 = vadd.f32 %v2235, %v1299
  %v2244 = vadd.f32 %v2236, %v1300
  %2245 = vrot.lane.b32.xlu0 %v2237, 17
  %v2246 = vpop.permute.xlu0 %2245
  %2247 = vrot.lane.b32.xlu0 %v2241, 17
  %v2248 = vpop.permute.xlu0 %2247
  %2249 = vrot.lane.b32.xlu0 %v2238, 17
  %v2250 = vpop.permute.xlu0 %2249
  %2251 = vrot.lane.b32.xlu0 %v2242, 17
  %v2252 = vpop.permute.xlu0 %2251
  %2253 = vrot.lane.b32.xlu0 %v2239, 17
  %v2254 = vpop.permute.xlu0 %2253
  %2255 = vrot.lane.b32.xlu0 %v2243, 17
  %v2256 = vpop.permute.xlu0 %2255
  %2257 = vrot.lane.b32.xlu0 %v2240, 17
  %v2258 = vpop.permute.xlu0 %2257
  %2259 = vrot.lane.b32.xlu0 %v2244, 17
  %v2260 = vpop.permute.xlu0 %2259
  %v2261 = vsel %vm246, %v2254, %v2258
  %v2262 = vsel %vm246, %v2256, %v2260
  %v2263 = vsel %vm246, %v2250, %v2254
  %v2264 = vsel %vm246, %v2252, %v2256
  %v2265 = vsel %vm246, %v2246, %v2250
  %v2266 = vsel %vm246, %v2248, %v2252
  %v2267 = vsel %vm246, %v2258, %v2246
  %v2268 = vsel %vm246, %v2260, %v2248
  %v2269 = vsel %vm255, %v2267, 0.0
  %v2270 = vsel %vm256, %v2265, 0.0
  %v2271 = vsel %vm257, %v2263, 0.0
  %v2272 = vsel %vm258, %v2261, 0.0
  %v2273 = vsel %vm255, %v2268, 0.0
  %v2274 = vsel %vm256, %v2266, 0.0
  %v2275 = vsel %vm257, %v2264, 0.0
  %v2276 = vsel %vm258, %v2262, 0.0
  %2277 = vrot.lane.b32.xlu0 %v2237, 16
  %v2278 = vpop.permute.xlu0 %2277
  %2279 = vrot.lane.b32.xlu0 %v2241, 16
  %v2280 = vpop.permute.xlu0 %2279
  %2281 = vrot.lane.b32.xlu0 %v2238, 16
  %v2282 = vpop.permute.xlu0 %2281
  %2283 = vrot.lane.b32.xlu0 %v2242, 16
  %v2284 = vpop.permute.xlu0 %2283
  %2285 = vrot.lane.b32.xlu0 %v2239, 16
  %v2286 = vpop.permute.xlu0 %2285
  %2287 = vrot.lane.b32.xlu0 %v2243, 16
  %v2288 = vpop.permute.xlu0 %2287
  %2289 = vrot.lane.b32.xlu0 %v2240, 16
  %v2290 = vpop.permute.xlu0 %2289
  %2291 = vrot.lane.b32.xlu0 %v2244, 16
  %v2292 = vpop.permute.xlu0 %2291
  %v2293 = vsel %vm271, %v2286, %v2290
  %v2294 = vsel %vm271, %v2288, %v2292
  %v2295 = vsel %vm271, %v2282, %v2286
  %v2296 = vsel %vm271, %v2284, %v2288
  %v2297 = vsel %vm271, %v2278, %v2282
  %v2298 = vsel %vm271, %v2280, %v2284
  %v2299 = vsel %vm271, %v2290, %v2278
  %v2300 = vsel %vm271, %v2292, %v2280
  %v2301 = vsel %vm280, %v2299, 0.0
  %v2302 = vsel %vm281, %v2297, 0.0
  %v2303 = vsel %vm282, %v2295, 0.0
  %v2304 = vsel %vm283, %v2293, 0.0
  %v2305 = vsel %vm280, %v2300, 0.0
  %v2306 = vsel %vm281, %v2298, 0.0
  %v2307 = vsel %vm282, %v2296, 0.0
  %v2308 = vsel %vm283, %v2294, 0.0
  %2309 = vrot.lane.b32.xlu0 %v2237, 15
  %v2310 = vpop.permute.xlu0 %2309
  %2311 = vrot.lane.b32.xlu0 %v2241, 15
  %v2312 = vpop.permute.xlu0 %2311
  %2313 = vrot.lane.b32.xlu0 %v2238, 15
  %v2314 = vpop.permute.xlu0 %2313
  %2315 = vrot.lane.b32.xlu0 %v2242, 15
  %v2316 = vpop.permute.xlu0 %2315
  %2317 = vrot.lane.b32.xlu0 %v2239, 15
  %v2318 = vpop.permute.xlu0 %2317
  %2319 = vrot.lane.b32.xlu0 %v2243, 15
  %v2320 = vpop.permute.xlu0 %2319
  %2321 = vrot.lane.b32.xlu0 %v2240, 15
  %v2322 = vpop.permute.xlu0 %2321
  %2323 = vrot.lane.b32.xlu0 %v2244, 15
  %v2324 = vpop.permute.xlu0 %2323
  %v2325 = vsel %vm296, %v2318, %v2322
  %v2326 = vsel %vm296, %v2320, %v2324
  %v2327 = vsel %vm296, %v2314, %v2318
  %v2328 = vsel %vm296, %v2316, %v2320
  %v2329 = vsel %vm296, %v2310, %v2314
  %v2330 = vsel %vm296, %v2312, %v2316
  %v2331 = vsel %vm296, %v2322, %v2310
  %v2332 = vsel %vm296, %v2324, %v2312
  %v2333 = vsel %vm305, %v2331, 0.0
  %v2334 = vsel %vm306, %v2329, 0.0
  %v2335 = vsel %vm307, %v2327, 0.0
  %v2336 = vsel %vm308, %v2325, 0.0
  %v2337 = vsel %vm305, %v2332, 0.0
  %v2338 = vsel %vm306, %v2330, 0.0
  %v2339 = vsel %vm307, %v2328, 0.0
  %v2340 = vsel %vm308, %v2326, 0.0
  %2341 = vrot.lane.b32.xlu0 %v2237, 1
  %v2342 = vpop.permute.xlu0 %2341
  %2343 = vrot.lane.b32.xlu0 %v2241, 1
  %v2344 = vpop.permute.xlu0 %2343
  %2345 = vrot.lane.b32.xlu0 %v2238, 1
  %v2346 = vpop.permute.xlu0 %2345
  %2347 = vrot.lane.b32.xlu0 %v2242, 1
  %v2348 = vpop.permute.xlu0 %2347
  %2349 = vrot.lane.b32.xlu0 %v2239, 1
  %v2350 = vpop.permute.xlu0 %2349
  %2351 = vrot.lane.b32.xlu0 %v2243, 1
  %v2352 = vpop.permute.xlu0 %2351
  %2353 = vrot.lane.b32.xlu0 %v2240, 1
  %v2354 = vpop.permute.xlu0 %2353
  %2355 = vrot.lane.b32.xlu0 %v2244, 1
  %v2356 = vpop.permute.xlu0 %2355
  %v2357 = vsel %vm321, %v2350, %v2354
  %v2358 = vsel %vm321, %v2352, %v2356
  %v2359 = vsel %vm321, %v2346, %v2350
  %v2360 = vsel %vm321, %v2348, %v2352
  %v2361 = vsel %vm321, %v2342, %v2346
  %v2362 = vsel %vm321, %v2344, %v2348
  %v2363 = vsel %vm321, %v2354, %v2342
  %v2364 = vsel %vm321, %v2356, %v2344
  %v2365 = vsel %vm330, %v2363, 0.0
  %v2366 = vsel %vm331, %v2361, 0.0
  %v2367 = vsel %vm332, %v2359, 0.0
  %v2368 = vsel %vm333, %v2357, 0.0
  %v2369 = vsel %vm330, %v2364, 0.0
  %v2370 = vsel %vm331, %v2362, 0.0
  %v2371 = vsel %vm332, %v2360, 0.0
  %v2372 = vsel %vm333, %v2358, 0.0
  %2373 = vrot.lane.b32.xlu0 %v2237, 127
  %v2374 = vpop.permute.xlu0 %2373
  %2375 = vrot.lane.b32.xlu0 %v2241, 127
  %v2376 = vpop.permute.xlu0 %2375
  %2377 = vrot.lane.b32.xlu0 %v2238, 127
  %v2378 = vpop.permute.xlu0 %2377
  %2379 = vrot.lane.b32.xlu0 %v2242, 127
  %v2380 = vpop.permute.xlu0 %2379
  %2381 = vrot.lane.b32.xlu0 %v2239, 127
  %v2382 = vpop.permute.xlu0 %2381
  %2383 = vrot.lane.b32.xlu0 %v2243, 127
  %v2384 = vpop.permute.xlu0 %2383
  %2385 = vrot.lane.b32.xlu0 %v2240, 127
  %v2386 = vpop.permute.xlu0 %2385
  %2387 = vrot.lane.b32.xlu0 %v2244, 127
  %v2388 = vpop.permute.xlu0 %2387
  %v2389 = vsel %vm346, %v2382, %v2386
  %v2390 = vsel %vm346, %v2384, %v2388
  %v2391 = vsel %vm346, %v2378, %v2382
  %v2392 = vsel %vm346, %v2380, %v2384
  %v2393 = vsel %vm346, %v2374, %v2378
  %v2394 = vsel %vm346, %v2376, %v2380
  %v2395 = vsel %vm346, %v2386, %v2374
  %v2396 = vsel %vm346, %v2388, %v2376
  %v2397 = vsel %vm355, %v2393, 0.0
  %v2398 = vsel %vm356, %v2391, 0.0
  %v2399 = vsel %vm357, %v2389, 0.0
  %v2400 = vsel %vm358, %v2395, 0.0
  %v2401 = vsel %vm355, %v2394, 0.0
  %v2402 = vsel %vm356, %v2392, 0.0
  %v2403 = vsel %vm357, %v2390, 0.0
  %v2404 = vsel %vm358, %v2396, 0.0
  %2405 = vrot.lane.b32.xlu0 %v2237, 113
  %v2406 = vpop.permute.xlu0 %2405
  %2407 = vrot.lane.b32.xlu0 %v2241, 113
  %v2408 = vpop.permute.xlu0 %2407
  %2409 = vrot.lane.b32.xlu0 %v2238, 113
  %v2410 = vpop.permute.xlu0 %2409
  %2411 = vrot.lane.b32.xlu0 %v2242, 113
  %v2412 = vpop.permute.xlu0 %2411
  %2413 = vrot.lane.b32.xlu0 %v2239, 113
  %v2414 = vpop.permute.xlu0 %2413
  %2415 = vrot.lane.b32.xlu0 %v2243, 113
  %v2416 = vpop.permute.xlu0 %2415
  %2417 = vrot.lane.b32.xlu0 %v2240, 113
  %v2418 = vpop.permute.xlu0 %2417
  %2419 = vrot.lane.b32.xlu0 %v2244, 113
  %v2420 = vpop.permute.xlu0 %2419
  %v2421 = vsel %vm371, %v2414, %v2418
  %v2422 = vsel %vm371, %v2416, %v2420
  %v2423 = vsel %vm371, %v2410, %v2414
  %v2424 = vsel %vm371, %v2412, %v2416
  %v2425 = vsel %vm371, %v2406, %v2410
  %v2426 = vsel %vm371, %v2408, %v2412
  %v2427 = vsel %vm371, %v2418, %v2406
  %v2428 = vsel %vm371, %v2420, %v2408
  %v2429 = vsel %vm380, %v2425, 0.0
  %v2430 = vsel %vm381, %v2423, 0.0
  %v2431 = vsel %vm382, %v2421, 0.0
  %v2432 = vsel %vm383, %v2427, 0.0
  %v2433 = vsel %vm380, %v2426, 0.0
  %v2434 = vsel %vm381, %v2424, 0.0
  %v2435 = vsel %vm382, %v2422, 0.0
  %v2436 = vsel %vm383, %v2428, 0.0
  %2437 = vrot.lane.b32.xlu0 %v2237, 112
  %v2438 = vpop.permute.xlu0 %2437
  %2439 = vrot.lane.b32.xlu0 %v2241, 112
  %v2440 = vpop.permute.xlu0 %2439
  %2441 = vrot.lane.b32.xlu0 %v2238, 112
  %v2442 = vpop.permute.xlu0 %2441
  %2443 = vrot.lane.b32.xlu0 %v2242, 112
  %v2444 = vpop.permute.xlu0 %2443
  %2445 = vrot.lane.b32.xlu0 %v2239, 112
  %v2446 = vpop.permute.xlu0 %2445
  %2447 = vrot.lane.b32.xlu0 %v2243, 112
  %v2448 = vpop.permute.xlu0 %2447
  %2449 = vrot.lane.b32.xlu0 %v2240, 112
  %v2450 = vpop.permute.xlu0 %2449
  %2451 = vrot.lane.b32.xlu0 %v2244, 112
  %v2452 = vpop.permute.xlu0 %2451
  %v2453 = vsel %vm396, %v2446, %v2450
  %v2454 = vsel %vm396, %v2448, %v2452
  %v2455 = vsel %vm396, %v2442, %v2446
  %v2456 = vsel %vm396, %v2444, %v2448
  %v2457 = vsel %vm396, %v2438, %v2442
  %v2458 = vsel %vm396, %v2440, %v2444
  %v2459 = vsel %vm396, %v2450, %v2438
  %v2460 = vsel %vm396, %v2452, %v2440
  %v2461 = vsel %vm405, %v2457, 0.0
  %v2462 = vsel %vm406, %v2455, 0.0
  %v2463 = vsel %vm407, %v2453, 0.0
  %v2464 = vsel %vm408, %v2459, 0.0
  %v2465 = vsel %vm405, %v2458, 0.0
  %v2466 = vsel %vm406, %v2456, 0.0
  %v2467 = vsel %vm407, %v2454, 0.0
  %v2468 = vsel %vm408, %v2460, 0.0
  %2469 = vrot.lane.b32.xlu0 %v2237, 111
  %v2470 = vpop.permute.xlu0 %2469
  %2471 = vrot.lane.b32.xlu0 %v2241, 111
  %v2472 = vpop.permute.xlu0 %2471
  %2473 = vrot.lane.b32.xlu0 %v2238, 111
  %v2474 = vpop.permute.xlu0 %2473
  %2475 = vrot.lane.b32.xlu0 %v2242, 111
  %v2476 = vpop.permute.xlu0 %2475
  %2477 = vrot.lane.b32.xlu0 %v2239, 111
  %v2478 = vpop.permute.xlu0 %2477
  %2479 = vrot.lane.b32.xlu0 %v2243, 111
  %v2480 = vpop.permute.xlu0 %2479
  %2481 = vrot.lane.b32.xlu0 %v2240, 111
  %v2482 = vpop.permute.xlu0 %2481
  %2483 = vrot.lane.b32.xlu0 %v2244, 111
  %v2484 = vpop.permute.xlu0 %2483
  %v2485 = vsel %vm421, %v2478, %v2482
  %v2486 = vsel %vm421, %v2480, %v2484
  %v2487 = vsel %vm421, %v2474, %v2478
  %v2488 = vsel %vm421, %v2476, %v2480
  %v2489 = vsel %vm421, %v2470, %v2474
  %v2490 = vsel %vm421, %v2472, %v2476
  %v2491 = vsel %vm421, %v2482, %v2470
  %v2492 = vsel %vm421, %v2484, %v2472
  %v2493 = vsel %vm430, %v2489, 0.0
  %v2494 = vsel %vm431, %v2487, 0.0
  %v2495 = vsel %vm432, %v2485, 0.0
  %v2496 = vsel %vm433, %v2491, 0.0
  %v2497 = vsel %vm430, %v2490, 0.0
  %v2498 = vsel %vm431, %v2488, 0.0
  %v2499 = vsel %vm432, %v2486, 0.0
  %v2500 = vsel %vm433, %v2492, 0.0
  %v2501 = vld [vmem:[%s15] sm:$0xff]
  %v2502 = vld [vmem:[%s15 + $0x8] sm:$0xff]
  %v2503 = vld [vmem:[%s15 + $0x10] sm:$0xff]
  %v2504 = vld [vmem:[%s15 + $0x18] sm:$0xff]
  %v2506 = vsel %vm909, %v2502, 0
  %v2509 = vsel %vm909, %v2504, 0
  %2511 = vmatprep.subr.mxu0 %v2270
  %2512 = vmatpush1.msra.mxu0 %v2269
  %2513 = vmatprep.subr.mxu0 %v2274
  %2514 = vmatpush1.msra.mxu0 %v2273
  %2515 = vmatprep.subr.mxu0 %v2302
  %2516 = vmatpush1.msra.mxu0 %v2301
  %2517 = vmatprep.subr.mxu0 %v2306
  %2518 = vmatpush1.msra.mxu0 %v2305
  %2519 = vmatprep.subr.mxu0 %v2334
  %2520 = vmatpush1.msra.mxu0 %v2333
  %2521 = vmatprep.subr.mxu0 %v2338
  %2522 = vmatpush1.msra.mxu0 %v2337
  %2523 = vmatprep.subr.mxu0 %v2366
  %2524 = vmatpush1.msra.mxu0 %v2365
  %2525 = vmatprep.subr.mxu0 %v2370
  %2526 = vmatpush1.msra.mxu0 %v2369
  %2527 = vmatprep.subr.mxu0 %v2238
  %2528 = vmatpush1.msra.mxu0 %v2237
  %2529 = vmatprep.subr.mxu0 %v2242
  %2530 = vmatpush1.msra.mxu0 %v2241
  %2531 = vmatprep.subr.mxu0 %v2398
  %2532 = vmatpush1.msra.mxu0 %v2397
  %2533 = vmatprep.subr.mxu0 %v2402
  %2534 = vmatpush1.msra.mxu0 %v2401
  %2535 = vmatprep.subr.mxu0 %v2430
  %2536 = vmatpush1.msra.mxu0 %v2429
  %2537 = vmatprep.subr.mxu0 %v2434
  %2538 = vmatpush1.msra.mxu0 %v2433
  %2539 = vmatprep.subr.mxu0 %v2462
  %2540 = vmatpush1.msra.mxu0 %v2461
  %2541 = vmatprep.subr.mxu0 %v2466
  %2542 = vmatpush1.msra.mxu0 %v2465
  %2543 = vmatprep.subr.mxu0 %v2494
  %2544 = vmatpush1.msra.mxu0 %v2493
  %2545 = vmatprep.subr.mxu0 %v2498
  %2546 = vmatpush1.msra.mxu0 %v2497
  %2547 = vmatprep.subr.mxu0 0.0
  %2548 = vmatpush1.msra.mxu0 0.0
  %2549 = vmatprep.subr.mxu0 0.0
  %2550 = vmatpush1.msra.mxu0 0.0
  %2551 = vmatprep.subr.mxu0 0.0
  %2552 = vmatpush1.msra.mxu0 0.0
  %2553 = vmatprep.subr.mxu0 0.0
  %2554 = vmatpush1.msra.mxu0 0.0
  %2555 = vmatprep.subr.mxu0 0.0
  %2556 = vmatpush1.msra.mxu0 0.0
  %2557 = vmatprep.subr.mxu0 0.0
  %2558 = vmatpush1.msra.mxu0 0.0
  %2559 = vmatprep.subr.mxu0 0.0
  %2560 = vmatpush1.msra.mxu0 0.0
  %2561 = vmatprep.subr.mxu0 0.0
  %2562 = vmatpush1.msra.mxu0 0.0
  %2563 = vmatprep.subr.mxu0 0.0
  %2564 = vmatpush1.msra.mxu0 0.0
  %2565 = vmatprep.subr.mxu0 0.0
  %2566 = vmatpush1.msra.mxu0 0.0
  %2567 = vmatprep.subr.mxu0 0.0
  %2568 = vmatpush1.msra.mxu0 0.0
  %2569 = vmatprep.subr.mxu0 0.0
  %2570 = vmatpush1.msra.mxu0 0.0
  %2571 = vmatprep.subr.mxu0 0.0
  %2572 = vmatpush1.msra.mxu0 0.0
  %2573 = vmatprep.subr.mxu0 0.0
  %2574 = vmatpush1.msra.mxu0 0.0
  %2575 = vmatprep.mubr.f32.mxu0 %v2506
  %2576 = vmatmul.mubr.f32.gmra.mrb[0].mxu0 %v2501
  %v2577 = vpop.f32.mrb[0].mxu0
  %v2578 = vadd.f32 0.0, %v2577
  %v2579 = vpop.f32.mrb[0].mxu0
  %v2580 = vadd.f32 0.0, %v2579
  %2581 = vmatprep.mubr.f32.mxu0 %v2509
  %2582 = vmatmul.mubr.f32.gmra.mrb[0].mxu0 %v2503
  %v2583 = vpop.f32.mrb[0].mxu0
  %v2584 = vadd.f32 0.0, %v2583
  %v2585 = vpop.f32.mrb[0].mxu0
  %v2586 = vadd.f32 0.0, %v2585
  %2587 = vdwg.mxu0
  %2588 = vmatprep.subr.mxu0 %v2272
  %2589 = vmatpush1.msra.mxu0 %v2271
  %2590 = vmatprep.subr.mxu0 %v2276
  %2591 = vmatpush1.msra.mxu0 %v2275
  %2592 = vmatprep.subr.mxu0 %v2304
  %2593 = vmatpush1.msra.mxu0 %v2303
  %2594 = vmatprep.subr.mxu0 %v2308
  %2595 = vmatpush1.msra.mxu0 %v2307
  %2596 = vmatprep.subr.mxu0 %v2336
  %2597 = vmatpush1.msra.mxu0 %v2335
  %2598 = vmatprep.subr.mxu0 %v2340
  %2599 = vmatpush1.msra.mxu0 %v2339
  %2600 = vmatprep.subr.mxu0 %v2368
  %2601 = vmatpush1.msra.mxu0 %v2367
  %2602 = vmatprep.subr.mxu0 %v2372
  %2603 = vmatpush1.msra.mxu0 %v2371
  %2604 = vmatprep.subr.mxu0 %v2240
  %2605 = vmatpush1.msra.mxu0 %v2239
  %2606 = vmatprep.subr.mxu0 %v2244
  %2607 = vmatpush1.msra.mxu0 %v2243
  %2608 = vmatprep.subr.mxu0 %v2400
  %2609 = vmatpush1.msra.mxu0 %v2399
  %2610 = vmatprep.subr.mxu0 %v2404
  %2611 = vmatpush1.msra.mxu0 %v2403
  %2612 = vmatprep.subr.mxu0 %v2432
  %2613 = vmatpush1.msra.mxu0 %v2431
  %2614 = vmatprep.subr.mxu0 %v2436
  %2615 = vmatpush1.msra.mxu0 %v2435
  %2616 = vmatprep.subr.mxu0 %v2464
  %2617 = vmatpush1.msra.mxu0 %v2463
  %2618 = vmatprep.subr.mxu0 %v2468
  %2619 = vmatpush1.msra.mxu0 %v2467
  %2620 = vmatprep.subr.mxu0 %v2496
  %2621 = vmatpush1.msra.mxu0 %v2495
  %2622 = vmatprep.subr.mxu0 %v2500
  %2623 = vmatpush1.msra.mxu0 %v2499
  %2624 = vmatprep.subr.mxu0 0.0
  %2625 = vmatpush1.msra.mxu0 0.0
  %2626 = vmatprep.subr.mxu0 0.0
  %2627 = vmatpush1.msra.mxu0 0.0
  %2628 = vmatprep.subr.mxu0 0.0
  %2629 = vmatpush1.msra.mxu0 0.0
  %2630 = vmatprep.subr.mxu0 0.0
  %2631 = vmatpush1.msra.mxu0 0.0
  %2632 = vmatprep.subr.mxu0 0.0
  %2633 = vmatpush1.msra.mxu0 0.0
  %2634 = vmatprep.subr.mxu0 0.0
  %2635 = vmatpush1.msra.mxu0 0.0
  %2636 = vmatprep.subr.mxu0 0.0
  %2637 = vmatpush1.msra.mxu0 0.0
  %2638 = vmatprep.subr.mxu0 0.0
  %2639 = vmatpush1.msra.mxu0 0.0
  %2640 = vmatprep.subr.mxu0 0.0
  %2641 = vmatpush1.msra.mxu0 0.0
  %2642 = vmatprep.subr.mxu0 0.0
  %2643 = vmatpush1.msra.mxu0 0.0
  %2644 = vmatprep.subr.mxu0 0.0
  %2645 = vmatpush1.msra.mxu0 0.0
  %2646 = vmatprep.subr.mxu0 0.0
  %2647 = vmatpush1.msra.mxu0 0.0
  %2648 = vmatprep.subr.mxu0 0.0
  %2649 = vmatpush1.msra.mxu0 0.0
  %2650 = vmatprep.subr.mxu0 0.0
  %2651 = vmatpush1.msra.mxu0 0.0
  %2652 = vmatprep.mubr.f32.mxu0 %v2506
  %2653 = vmatmul.mubr.f32.gmra.mrb[0].mxu0 %v2501
  %v2654 = vpop.f32.mrb[0].mxu0
  %v2655 = vadd.f32 0.0, %v2654
  %v2656 = vpop.f32.mrb[0].mxu0
  %v2657 = vadd.f32 0.0, %v2656
  %2658 = vmatprep.mubr.f32.mxu0 %v2509
  %2659 = vmatmul.mubr.f32.gmra.mrb[0].mxu0 %v2503
  %v2660 = vpop.f32.mrb[0].mxu0
  %v2661 = vadd.f32 0.0, %v2660
  %v2662 = vpop.f32.mrb[0].mxu0
  %v2663 = vadd.f32 0.0, %v2662
  %2664 = vdwg.mxu0
  %v2665 = vld [vmem:[%s16] sm:$0xff]
  %v2666 = vld [vmem:[%s16 + $0x8] sm:$0xff]
  %2668 = vset.pattern.permute.xlu0 0
  %2669 = vperm.xlu0 %2668, %v2665
  %v2670 = vpop.permute.xlu0 %2669
  %2673 = vset.pattern.permute.xlu0 0
  %2674 = vperm.xlu0 %2673, %v2666
  %v2675 = vpop.permute.xlu0 %2674
  %v2677 = vmul.f32 %v2578, %v2670
  %v2678 = vmul.f32 %v2580, %v2670
  %v2679 = vmul.f32 %v2655, %v2670
  %v2680 = vmul.f32 %v2657, %v2670
  %v2681 = vmul.f32 %v2584, %v2675
  %v2682 = vmul.f32 %v2586, %v2675
  %v2683 = vmul.f32 %v2661, %v2675
  %v2684 = vmul.f32 %v2663, %v2675
  %v2685 = vld [vmem:[%s17] sm:$0xff]
  %v2686 = vld [vmem:[%s17 + $0x8] sm:$0xff]
  %2688 = vset.pattern.permute.xlu0 0
  %2689 = vperm.xlu0 %2688, %v2685
  %v2690 = vpop.permute.xlu0 %2689
  %2693 = vset.pattern.permute.xlu0 0
  %2694 = vperm.xlu0 %2693, %v2686
  %v2695 = vpop.permute.xlu0 %2694
  %v2697 = vadd.f32 %v2677, %v2690
  %v2698 = vadd.f32 %v2678, %v2690
  %v2699 = vadd.f32 %v2679, %v2690
  %v2700 = vadd.f32 %v2680, %v2690
  %v2701 = vadd.f32 %v2681, %v2695
  %v2702 = vadd.f32 %v2682, %v2695
  %v2703 = vadd.f32 %v2683, %v2695
  %v2704 = vadd.f32 %v2684, %v2695
  %v2705 = vmax.f32 %v2697, 0.0
  %v2706 = vmax.f32 %v2698, 0.0
  %v2707 = vmax.f32 %v2699, 0.0
  %v2708 = vmax.f32 %v2700, 0.0
  %v2709 = vmax.f32 %v2701, 0.0
  %v2710 = vmax.f32 %v2702, 0.0
  %v2711 = vmax.f32 %v2703, 0.0
  %v2712 = vmax.f32 %v2704, 0.0
  %2713 = vrot.lane.b32.xlu0 %v2705, 17
  %v2714 = vpop.permute.xlu0 %2713
  %2715 = vrot.lane.b32.xlu0 %v2709, 17
  %v2716 = vpop.permute.xlu0 %2715
  %2717 = vrot.lane.b32.xlu0 %v2706, 17
  %v2718 = vpop.permute.xlu0 %2717
  %2719 = vrot.lane.b32.xlu0 %v2710, 17
  %v2720 = vpop.permute.xlu0 %2719
  %2721 = vrot.lane.b32.xlu0 %v2707, 17
  %v2722 = vpop.permute.xlu0 %2721
  %2723 = vrot.lane.b32.xlu0 %v2711, 17
  %v2724 = vpop.permute.xlu0 %2723
  %2725 = vrot.lane.b32.xlu0 %v2708, 17
  %v2726 = vpop.permute.xlu0 %2725
  %2727 = vrot.lane.b32.xlu0 %v2712, 17
  %v2728 = vpop.permute.xlu0 %2727
  %v2729 = vsel %vm246, %v2722, %v2726
  %v2730 = vsel %vm246, %v2724, %v2728
  %v2731 = vsel %vm246, %v2718, %v2722
  %v2732 = vsel %vm246, %v2720, %v2724
  %v2733 = vsel %vm246, %v2714, %v2718
  %v2734 = vsel %vm246, %v2716, %v2720
  %v2735 = vsel %vm246, %v2726, %v2714
  %v2736 = vsel %vm246, %v2728, %v2716
  %v2737 = vsel %vm255, %v2735, 0.0
  %v2738 = vsel %vm256, %v2733, 0.0
  %v2739 = vsel %vm257, %v2731, 0.0
  %v2740 = vsel %vm258, %v2729, 0.0
  %v2741 = vsel %vm255, %v2736, 0.0
  %v2742 = vsel %vm256, %v2734, 0.0
  %v2743 = vsel %vm257, %v2732, 0.0
  %v2744 = vsel %vm258, %v2730, 0.0
  %2745 = vrot.lane.b32.xlu0 %v2705, 16
  %v2746 = vpop.permute.xlu0 %2745
  %2747 = vrot.lane.b32.xlu0 %v2709, 16
  %v2748 = vpop.permute.xlu0 %2747
  %2749 = vrot.lane.b32.xlu0 %v2706, 16
  %v2750 = vpop.permute.xlu0 %2749
  %2751 = vrot.lane.b32.xlu0 %v2710, 16
  %v2752 = vpop.permute.xlu0 %2751
  %2753 = vrot.lane.b32.xlu0 %v2707, 16
  %v2754 = vpop.permute.xlu0 %2753
  %2755 = vrot.lane.b32.xlu0 %v2711, 16
  %v2756 = vpop.permute.xlu0 %2755
  %2757 = vrot.lane.b32.xlu0 %v2708, 16
  %v2758 = vpop.permute.xlu0 %2757
  %2759 = vrot.lane.b32.xlu0 %v2712, 16
  %v2760 = vpop.permute.xlu0 %2759
  %v2761 = vsel %vm271, %v2754, %v2758
  %v2762 = vsel %vm271, %v2756, %v2760
  %v2763 = vsel %vm271, %v2750, %v2754
  %v2764 = vsel %vm271, %v2752, %v2756
  %v2765 = vsel %vm271, %v2746, %v2750
  %v2766 = vsel %vm271, %v2748, %v2752
  %v2767 = vsel %vm271, %v2758, %v2746
  %v2768 = vsel %vm271, %v2760, %v2748
  %v2769 = vsel %vm280, %v2767, 0.0
  %v2770 = vsel %vm281, %v2765, 0.0
  %v2771 = vsel %vm282, %v2763, 0.0
  %v2772 = vsel %vm283, %v2761, 0.0
  %v2773 = vsel %vm280, %v2768, 0.0
  %v2774 = vsel %vm281, %v2766, 0.0
  %v2775 = vsel %vm282, %v2764, 0.0
  %v2776 = vsel %vm283, %v2762, 0.0
  %2777 = vrot.lane.b32.xlu0 %v2705, 15
  %v2778 = vpop.permute.xlu0 %2777
  %2779 = vrot.lane.b32.xlu0 %v2709, 15
  %v2780 = vpop.permute.xlu0 %2779
  %2781 = vrot.lane.b32.xlu0 %v2706, 15
  %v2782 = vpop.permute.xlu0 %2781
  %2783 = vrot.lane.b32.xlu0 %v2710, 15
  %v2784 = vpop.permute.xlu0 %2783
  %2785 = vrot.lane.b32.xlu0 %v2707, 15
  %v2786 = vpop.permute.xlu0 %2785
  %2787 = vrot.lane.b32.xlu0 %v2711, 15
  %v2788 = vpop.permute.xlu0 %2787
  %2789 = vrot.lane.b32.xlu0 %v2708, 15
  %v2790 = vpop.permute.xlu0 %2789
  %2791 = vrot.lane.b32.xlu0 %v2712, 15
  %v2792 = vpop.permute.xlu0 %2791
  %v2793 = vsel %vm296, %v2786, %v2790
  %v2794 = vsel %vm296, %v2788, %v2792
  %v2795 = vsel %vm296, %v2782, %v2786
  %v2796 = vsel %vm296, %v2784, %v2788
  %v2797 = vsel %vm296, %v2778, %v2782
  %v2798 = vsel %vm296, %v2780, %v2784
  %v2799 = vsel %vm296, %v2790, %v2778
  %v2800 = vsel %vm296, %v2792, %v2780
  %v2801 = vsel %vm305, %v2799, 0.0
  %v2802 = vsel %vm306, %v2797, 0.0
  %v2803 = vsel %vm307, %v2795, 0.0
  %v2804 = vsel %vm308, %v2793, 0.0
  %v2805 = vsel %vm305, %v2800, 0.0
  %v2806 = vsel %vm306, %v2798, 0.0
  %v2807 = vsel %vm307, %v2796, 0.0
  %v2808 = vsel %vm308, %v2794, 0.0
  %2809 = vrot.lane.b32.xlu0 %v2705, 1
  %v2810 = vpop.permute.xlu0 %2809
  %2811 = vrot.lane.b32.xlu0 %v2709, 1
  %v2812 = vpop.permute.xlu0 %2811
  %2813 = vrot.lane.b32.xlu0 %v2706, 1
  %v2814 = vpop.permute.xlu0 %2813
  %2815 = vrot.lane.b32.xlu0 %v2710, 1
  %v2816 = vpop.permute.xlu0 %2815
  %2817 = vrot.lane.b32.xlu0 %v2707, 1
  %v2818 = vpop.permute.xlu0 %2817
  %2819 = vrot.lane.b32.xlu0 %v2711, 1
  %v2820 = vpop.permute.xlu0 %2819
  %2821 = vrot.lane.b32.xlu0 %v2708, 1
  %v2822 = vpop.permute.xlu0 %2821
  %2823 = vrot.lane.b32.xlu0 %v2712, 1
  %v2824 = vpop.permute.xlu0 %2823
  %v2825 = vsel %vm321, %v2818, %v2822
  %v2826 = vsel %vm321, %v2820, %v2824
  %v2827 = vsel %vm321, %v2814, %v2818
  %v2828 = vsel %vm321, %v2816, %v2820
  %v2829 = vsel %vm321, %v2810, %v2814
  %v2830 = vsel %vm321, %v2812, %v2816
  %v2831 = vsel %vm321, %v2822, %v2810
  %v2832 = vsel %vm321, %v2824, %v2812
  %v2833 = vsel %vm330, %v2831, 0.0
  %v2834 = vsel %vm331, %v2829, 0.0
  %v2835 = vsel %vm332, %v2827, 0.0
  %v2836 = vsel %vm333, %v2825, 0.0
  %v2837 = vsel %vm330, %v2832, 0.0
  %v2838 = vsel %vm331, %v2830, 0.0
  %v2839 = vsel %vm332, %v2828, 0.0
  %v2840 = vsel %vm333, %v2826, 0.0
  %2841 = vrot.lane.b32.xlu0 %v2705, 127
  %v2842 = vpop.permute.xlu0 %2841
  %2843 = vrot.lane.b32.xlu0 %v2709, 127
  %v2844 = vpop.permute.xlu0 %2843
  %2845 = vrot.lane.b32.xlu0 %v2706, 127
  %v2846 = vpop.permute.xlu0 %2845
  %2847 = vrot.lane.b32.xlu0 %v2710, 127
  %v2848 = vpop.permute.xlu0 %2847
  %2849 = vrot.lane.b32.xlu0 %v2707, 127
  %v2850 = vpop.permute.xlu0 %2849
  %2851 = vrot.lane.b32.xlu0 %v2711, 127
  %v2852 = vpop.permute.xlu0 %2851
  %2853 = vrot.lane.b32.xlu0 %v2708, 127
  %v2854 = vpop.permute.xlu0 %2853
  %2855 = vrot.lane.b32.xlu0 %v2712, 127
  %v2856 = vpop.permute.xlu0 %2855
  %v2857 = vsel %vm346, %v2850, %v2854
  %v2858 = vsel %vm346, %v2852, %v2856
  %v2859 = vsel %vm346, %v2846, %v2850
  %v2860 = vsel %vm346, %v2848, %v2852
  %v2861 = vsel %vm346, %v2842, %v2846
  %v2862 = vsel %vm346, %v2844, %v2848
  %v2863 = vsel %vm346, %v2854, %v2842
  %v2864 = vsel %vm346, %v2856, %v2844
  %v2865 = vsel %vm355, %v2861, 0.0
  %v2866 = vsel %vm356, %v2859, 0.0
  %v2867 = vsel %vm357, %v2857, 0.0
  %v2868 = vsel %vm358, %v2863, 0.0
  %v2869 = vsel %vm355, %v2862, 0.0
  %v2870 = vsel %vm356, %v2860, 0.0
  %v2871 = vsel %vm357, %v2858, 0.0
  %v2872 = vsel %vm358, %v2864, 0.0
  %2873 = vrot.lane.b32.xlu0 %v2705, 113
  %v2874 = vpop.permute.xlu0 %2873
  %2875 = vrot.lane.b32.xlu0 %v2709, 113
  %v2876 = vpop.permute.xlu0 %2875
  %2877 = vrot.lane.b32.xlu0 %v2706, 113
  %v2878 = vpop.permute.xlu0 %2877
  %2879 = vrot.lane.b32.xlu0 %v2710, 113
  %v2880 = vpop.permute.xlu0 %2879
  %2881 = vrot.lane.b32.xlu0 %v2707, 113
  %v2882 = vpop.permute.xlu0 %2881
  %2883 = vrot.lane.b32.xlu0 %v2711, 113
  %v2884 = vpop.permute.xlu0 %2883
  %2885 = vrot.lane.b32.xlu0 %v2708, 113
  %v2886 = vpop.permute.xlu0 %2885
  %2887 = vrot.lane.b32.xlu0 %v2712, 113
  %v2888 = vpop.permute.xlu0 %2887
  %v2889 = vsel %vm371, %v2882, %v2886
  %v2890 = vsel %vm371, %v2884, %v2888
  %v2891 = vsel %vm371, %v2878, %v2882
  %v2892 = vsel %vm371, %v2880, %v2884
  %v2893 = vsel %vm371, %v2874, %v2878
  %v2894 = vsel %vm371, %v2876, %v2880
  %v2895 = vsel %vm371, %v2886, %v2874
  %v2896 = vsel %vm371, %v2888, %v2876
  %v2897 = vsel %vm380, %v2893, 0.0
  %v2898 = vsel %vm381, %v2891, 0.0
  %v2899 = vsel %vm382, %v2889, 0.0
  %v2900 = vsel %vm383, %v2895, 0.0
  %v2901 = vsel %vm380, %v2894, 0.0
  %v2902 = vsel %vm381, %v2892, 0.0
  %v2903 = vsel %vm382, %v2890, 0.0
  %v2904 = vsel %vm383, %v2896, 0.0
  %2905 = vrot.lane.b32.xlu0 %v2705, 112
  %v2906 = vpop.permute.xlu0 %2905
  %2907 = vrot.lane.b32.xlu0 %v2709, 112
  %v2908 = vpop.permute.xlu0 %2907
  %2909 = vrot.lane.b32.xlu0 %v2706, 112
  %v2910 = vpop.permute.xlu0 %2909
  %2911 = vrot.lane.b32.xlu0 %v2710, 112
  %v2912 = vpop.permute.xlu0 %2911
  %2913 = vrot.lane.b32.xlu0 %v2707, 112
  %v2914 = vpop.permute.xlu0 %2913
  %2915 = vrot.lane.b32.xlu0 %v2711, 112
  %v2916 = vpop.permute.xlu0 %2915
  %2917 = vrot.lane.b32.xlu0 %v2708, 112
  %v2918 = vpop.permute.xlu0 %2917
  %2919 = vrot.lane.b32.xlu0 %v2712, 112
  %v2920 = vpop.permute.xlu0 %2919
  %v2921 = vsel %vm396, %v2914, %v2918
  %v2922 = vsel %vm396, %v2916, %v2920
  %v2923 = vsel %vm396, %v2910, %v2914
  %v2924 = vsel %vm396, %v2912, %v2916
  %v2925 = vsel %vm396, %v2906, %v2910
  %v2926 = vsel %vm396, %v2908, %v2912
  %v2927 = vsel %vm396, %v2918, %v2906
  %v2928 = vsel %vm396, %v2920, %v2908
  %v2929 = vsel %vm405, %v2925, 0.0
  %v2930 = vsel %vm406, %v2923, 0.0
  %v2931 = vsel %vm407, %v2921, 0.0
  %v2932 = vsel %vm408, %v2927, 0.0
  %v2933 = vsel %vm405, %v2926, 0.0
  %v2934 = vsel %vm406, %v2924, 0.0
  %v2935 = vsel %vm407, %v2922, 0.0
  %v2936 = vsel %vm408, %v2928, 0.0
  %2937 = vrot.lane.b32.xlu0 %v2705, 111
  %v2938 = vpop.permute.xlu0 %2937
  %2939 = vrot.lane.b32.xlu0 %v2709, 111
  %v2940 = vpop.permute.xlu0 %2939
  %2941 = vrot.lane.b32.xlu0 %v2706, 111
  %v2942 = vpop.permute.xlu0 %2941
  %2943 = vrot.lane.b32.xlu0 %v2710, 111
  %v2944 = vpop.permute.xlu0 %2943
  %2945 = vrot.lane.b32.xlu0 %v2707, 111
  %v2946 = vpop.permute.xlu0 %2945
  %2947 = vrot.lane.b32.xlu0 %v2711, 111
  %v2948 = vpop.permute.xlu0 %2947
  %2949 = vrot.lane.b32.xlu0 %v2708, 111
  %v2950 = vpop.permute.xlu0 %2949
  %2951 = vrot.lane.b32.xlu0 %v2712, 111
  %v2952 = vpop.permute.xlu0 %2951
  %v2953 = vsel %vm421, %v2946, %v2950
  %v2954 = vsel %vm421, %v2948, %v2952
  %v2955 = vsel %vm421, %v2942, %v2946
  %v2956 = vsel %vm421, %v2944, %v2948
  %v2957 = vsel %vm421, %v2938, %v2942
  %v2958 = vsel %vm421, %v2940, %v2944
  %v2959 = vsel %vm421, %v2950, %v2938
  %v2960 = vsel %vm421, %v2952, %v2940
  %v2961 = vsel %vm430, %v2957, 0.0
  %v2962 = vsel %vm431, %v2955, 0.0
  %v2963 = vsel %vm432, %v2953, 0.0
  %v2964 = vsel %vm433, %v2959, 0.0
  %v2965 = vsel %vm430, %v2958, 0.0
  %v2966 = vsel %vm431, %v2956, 0.0
  %v2967 = vsel %vm432, %v2954, 0.0
  %v2968 = vsel %vm433, %v2960, 0.0
  %v2969 = vld [vmem:[%s18] sm:$0xff]
  %v2970 = vld [vmem:[%s18 + $0x8] sm:$0xff]
  %v2971 = vld [vmem:[%s18 + $0x10] sm:$0xff]
  %v2972 = vld [vmem:[%s18 + $0x18] sm:$0xff]
  %v2974 = vsel %vm909, %v2970, 0
  %v2977 = vsel %vm909, %v2972, 0
  %2979 = vmatprep.subr.mxu0 %v2738
  %2980 = vmatpush1.msra.mxu0 %v2737
  %2981 = vmatprep.subr.mxu0 %v2742
  %2982 = vmatpush1.msra.mxu0 %v2741
  %2983 = vmatprep.subr.mxu0 %v2770
  %2984 = vmatpush1.msra.mxu0 %v2769
  %2985 = vmatprep.subr.mxu0 %v2774
  %2986 = vmatpush1.msra.mxu0 %v2773
  %2987 = vmatprep.subr.mxu0 %v2802
  %2988 = vmatpush1.msra.mxu0 %v2801
  %2989 = vmatprep.subr.mxu0 %v2806
  %2990 = vmatpush1.msra.mxu0 %v2805
  %2991 = vmatprep.subr.mxu0 %v2834
  %2992 = vmatpush1.msra.mxu0 %v2833
  %2993 = vmatprep.subr.mxu0 %v2838
  %2994 = vmatpush1.msra.mxu0 %v2837
  %2995 = vmatprep.subr.mxu0 %v2706
  %2996 = vmatpush1.msra.mxu0 %v2705
  %2997 = vmatprep.subr.mxu0 %v2710
  %2998 = vmatpush1.msra.mxu0 %v2709
  %2999 = vmatprep.subr.mxu0 %v2866
  %3000 = vmatpush1.msra.mxu0 %v2865
  %3001 = vmatprep.subr.mxu0 %v2870
  %3002 = vmatpush1.msra.mxu0 %v2869
  %3003 = vmatprep.subr.mxu0 %v2898
  %3004 = vmatpush1.msra.mxu0 %v2897
  %3005 = vmatprep.subr.mxu0 %v2902
  %3006 = vmatpush1.msra.mxu0 %v2901
  %3007 = vmatprep.subr.mxu0 %v2930
  %3008 = vmatpush1.msra.mxu0 %v2929
  %3009 = vmatprep.subr.mxu0 %v2934
  %3010 = vmatpush1.msra.mxu0 %v2933
  %3011 = vmatprep.subr.mxu0 %v2962
  %3012 = vmatpush1.msra.mxu0 %v2961
  %3013 = vmatprep.subr.mxu0 %v2966
  %3014 = vmatpush1.msra.mxu0 %v2965
  %3015 = vmatprep.subr.mxu0 0.0
  %3016 = vmatpush1.msra.mxu0 0.0
  %3017 = vmatprep.subr.mxu0 0.0
  %3018 = vmatpush1.msra.mxu0 0.0
  %3019 = vmatprep.subr.mxu0 0.0
  %3020 = vmatpush1.msra.mxu0 0.0
  %3021 = vmatprep.subr.mxu0 0.0
  %3022 = vmatpush1.msra.mxu0 0.0
  %3023 = vmatprep.subr.mxu0 0.0
  %3024 = vmatpush1.msra.mxu0 0.0
  %3025 = vmatprep.subr.mxu0 0.0
  %3026 = vmatpush1.msra.mxu0 0.0
  %3027 = vmatprep.subr.mxu0 0.0
  %3028 = vmatpush1.msra.mxu0 0.0
  %3029 = vmatprep.subr.mxu0 0.0
  %3030 = vmatpush1.msra.mxu0 0.0
  %3031 = vmatprep.subr.mxu0 0.0
  %3032 = vmatpush1.msra.mxu0 0.0
  %3033 = vmatprep.subr.mxu0 0.0
  %3034 = vmatpush1.msra.mxu0 0.0
  %3035 = vmatprep.subr.mxu0 0.0
  %3036 = vmatpush1.msra.mxu0 0.0
  %3037 = vmatprep.subr.mxu0 0.0
  %3038 = vmatpush1.msra.mxu0 0.0
  %3039 = vmatprep.subr.mxu0 0.0
  %3040 = vmatpush1.msra.mxu0 0.0
  %3041 = vmatprep.subr.mxu0 0.0
  %3042 = vmatpush1.msra.mxu0 0.0
  %3043 = vmatprep.mubr.f32.mxu0 %v2974
  %3044 = vmatmul.mubr.f32.gmra.mrb[0].mxu0 %v2969
  %v3045 = vpop.f32.mrb[0].mxu0
  %v3046 = vadd.f32 0.0, %v3045
  %v3047 = vpop.f32.mrb[0].mxu0
  %v3048 = vadd.f32 0.0, %v3047
  %3049 = vmatprep.mubr.f32.mxu0 %v2977
  %3050 = vmatmul.mubr.f32.gmra.mrb[0].mxu0 %v2971
  %v3051 = vpop.f32.mrb[0].mxu0
  %v3052 = vadd.f32 0.0, %v3051
  %v3053 = vpop.f32.mrb[0].mxu0
  %v3054 = vadd.f32 0.0, %v3053
  %3055 = vdwg.mxu0
  %3056 = vmatprep.subr.mxu0 %v2740
  %3057 = vmatpush1.msra.mxu0 %v2739
  %3058 = vmatprep.subr.mxu0 %v2744
  %3059 = vmatpush1.msra.mxu0 %v2743
  %3060 = vmatprep.subr.mxu0 %v2772
  %3061 = vmatpush1.msra.mxu0 %v2771
  %3062 = vmatprep.subr.mxu0 %v2776
  %3063 = vmatpush1.msra.mxu0 %v2775
  %3064 = vmatprep.subr.mxu0 %v2804
  %3065 = vmatpush1.msra.mxu0 %v2803
  %3066 = vmatprep.subr.mxu0 %v2808
  %3067 = vmatpush1.msra.mxu0 %v2807
  %3068 = vmatprep.subr.mxu0 %v2836
  %3069 = vmatpush1.msra.mxu0 %v2835
  %3070 = vmatprep.subr.mxu0 %v2840
  %3071 = vmatpush1.msra.mxu0 %v2839
  %3072 = vmatprep.subr.mxu0 %v2708
  %3073 = vmatpush1.msra.mxu0 %v2707
  %3074 = vmatprep.subr.mxu0 %v2712
  %3075 = vmatpush1.msra.mxu0 %v2711
  %3076 = vmatprep.subr.mxu0 %v2868
  %3077 = vmatpush1.msra.mxu0 %v2867
  %3078 = vmatprep.subr.mxu0 %v2872
  %3079 = vmatpush1.msra.mxu0 %v2871
  %3080 = vmatprep.subr.mxu0 %v2900
  %3081 = vmatpush1.msra.mxu0 %v2899
  %3082 = vmatprep.subr.mxu0 %v2904
  %3083 = vmatpush1.msra.mxu0 %v2903
  %3084 = vmatprep.subr.mxu0 %v2932
  %3085 = vmatpush1.msra.mxu0 %v2931
  %3086 = vmatprep.subr.mxu0 %v2936
  %3087 = vmatpush1.msra.mxu0 %v2935
  %3088 = vmatprep.subr.mxu0 %v2964
  %3089 = vmatpush1.msra.mxu0 %v2963
  %3090 = vmatprep.subr.mxu0 %v2968
  %3091 = vmatpush1.msra.mxu0 %v2967
  %3092 = vmatprep.subr.mxu0 0.0
  %3093 = vmatpush1.msra.mxu0 0.0
  %3094 = vmatprep.subr.mxu0 0.0
  %3095 = vmatpush1.msra.mxu0 0.0
  %3096 = vmatprep.subr.mxu0 0.0
  %3097 = vmatpush1.msra.mxu0 0.0
  %3098 = vmatprep.subr.mxu0 0.0
  %3099 = vmatpush1.msra.mxu0 0.0
  %3100 = vmatprep.subr.mxu0 0.0
  %3101 = vmatpush1.msra.mxu0 0.0
  %3102 = vmatprep.subr.mxu0 0.0
  %3103 = vmatpush1.msra.mxu0 0.0
  %3104 = vmatprep.subr.mxu0 0.0
  %3105 = vmatpush1.msra.mxu0 0.0
  %3106 = vmatprep.subr.mxu0 0.0
  %3107 = vmatpush1.msra.mxu0 0.0
  %3108 = vmatprep.subr.mxu0 0.0
  %3109 = vmatpush1.msra.mxu0 0.0
  %3110 = vmatprep.subr.mxu0 0.0
  %3111 = vmatpush1.msra.mxu0 0.0
  %3112 = vmatprep.subr.mxu0 0.0
  %3113 = vmatpush1.msra.mxu0 0.0
  %3114 = vmatprep.subr.mxu0 0.0
  %3115 = vmatpush1.msra.mxu0 0.0
  %3116 = vmatprep.subr.mxu0 0.0
  %3117 = vmatpush1.msra.mxu0 0.0
  %3118 = vmatprep.subr.mxu0 0.0
  %3119 = vmatpush1.msra.mxu0 0.0
  %3120 = vmatprep.mubr.f32.mxu0 %v2974
  %3121 = vmatmul.mubr.f32.gmra.mrb[0].mxu0 %v2969
  %v3122 = vpop.f32.mrb[0].mxu0
  %v3123 = vadd.f32 0.0, %v3122
  %v3124 = vpop.f32.mrb[0].mxu0
  %v3125 = vadd.f32 0.0, %v3124
  %3126 = vmatprep.mubr.f32.mxu0 %v2977
  %3127 = vmatmul.mubr.f32.gmra.mrb[0].mxu0 %v2971
  %v3128 = vpop.f32.mrb[0].mxu0
  %v3129 = vadd.f32 0.0, %v3128
  %v3130 = vpop.f32.mrb[0].mxu0
  %v3131 = vadd.f32 0.0, %v3130
  %3132 = vdwg.mxu0
  %v3133 = vld [vmem:[%s19] sm:$0xff]
  %v3134 = vld [vmem:[%s19 + $0x8] sm:$0xff]
  %3136 = vset.pattern.permute.xlu0 0
  %3137 = vperm.xlu0 %3136, %v3133
  %v3138 = vpop.permute.xlu0 %3137
  %3141 = vset.pattern.permute.xlu0 0
  %3142 = vperm.xlu0 %3141, %v3134
  %v3143 = vpop.permute.xlu0 %3142
  %v3145 = vmul.f32 %v3046, %v3138
  %v3146 = vmul.f32 %v3048, %v3138
  %v3147 = vmul.f32 %v3123, %v3138
  %v3148 = vmul.f32 %v3125, %v3138
  %v3149 = vmul.f32 %v3052, %v3143
  %v3150 = vmul.f32 %v3054, %v3143
  %v3151 = vmul.f32 %v3129, %v3143
  %v3152 = vmul.f32 %v3131, %v3143
  %v3153 = vld [vmem:[%s20] sm:$0xff]
  %v3154 = vld [vmem:[%s20 + $0x8] sm:$0xff]
  %3156 = vset.pattern.permute.xlu0 0
  %3157 = vperm.xlu0 %3156, %v3153
  %v3158 = vpop.permute.xlu0 %3157
  %3161 = vset.pattern.permute.xlu0 0
  %3162 = vperm.xlu0 %3161, %v3154
  %v3163 = vpop.permute.xlu0 %3162
  %v3165 = vadd.f32 %v3145, %v3158
  %v3166 = vadd.f32 %v3146, %v3158
  %v3167 = vadd.f32 %v3147, %v3158
  %v3168 = vadd.f32 %v3148, %v3158
  %v3169 = vadd.f32 %v3149, %v3163
  %v3170 = vadd.f32 %v3150, %v3163
  %v3171 = vadd.f32 %v3151, %v3163
  %v3172 = vadd.f32 %v3152, %v3163
  %v3173 = vmax.f32 %v3165, 0.0
  %v3174 = vmax.f32 %v3166, 0.0
  %v3175 = vmax.f32 %v3167, 0.0
  %v3176 = vmax.f32 %v3168, 0.0
  %v3177 = vmax.f32 %v3169, 0.0
  %v3178 = vmax.f32 %v3170, 0.0
  %v3179 = vmax.f32 %v3171, 0.0
  %v3180 = vmax.f32 %v3172, 0.0
  %v3181 = vadd.f32 %v3173, %v2237
  %v3182 = vadd.f32 %v3174, %v2238
  %v3183 = vadd.f32 %v3175, %v2239
  %v3184 = vadd.f32 %v3176, %v2240
  %v3185 = vadd.f32 %v3177, %v2241
  %v3186 = vadd.f32 %v3178, %v2242
  %v3187 = vadd.f32 %v3179, %v2243
  %v3188 = vadd.f32 %v3180, %v2244
  %v3189 = vld [vmem:[%s21] sm:$0x1]
  %v3190 = vld [vmem:[#allocation2] sm:$0x1]
  %3192 = vset.pattern.permute.xlu0 0
  %3193 = vperm.xlu0 %3192, %v3190
  %v3194 = vpop.permute.xlu0 %3193
  %v3196 = vlaneseq
  %v3197 = vshrl.u32 %v3196, 7
  %v3198 = vsub.s32 0, %v3197
  %v3199 = vrot.slane %v3194, %v3198
  %v3201 = vsel %vm909, %v3189, 0
  %3203 = vmatprep.subr.mxu0 %v3182
  %3204 = vmatpush1.msra.mxu0 %v3181
  %3205 = vmatprep.subr.mxu0 %v3186
  %3206 = vmatpush1.msra.mxu0 %v3185
  %3207 = vmatprep.subr.mxu0 0.0
  %3208 = vmatpush1.msra.mxu0 0.0
  %3209 = vmatprep.subr.mxu0 0.0
  %3210 = vmatpush1.msra.mxu0 0.0
  %3211 = vmatprep.subr.mxu0 0.0
  %3212 = vmatpush1.msra.mxu0 0.0
  %3213 = vmatprep.subr.mxu0 0.0
  %3214 = vmatpush1.msra.mxu0 0.0
  %3215 = vmatprep.subr.mxu0 0.0
  %3216 = vmatpush1.msra.mxu0 0.0
  %3217 = vmatprep.subr.mxu0 0.0
  %3218 = vmatpush1.msra.mxu0 0.0
  %3219 = vmatprep.subr.mxu0 0.0
  %3220 = vmatpush1.msra.mxu0 0.0
  %3221 = vmatprep.subr.mxu0 0.0
  %3222 = vmatpush1.msra.mxu0 0.0
  %3223 = vmatprep.subr.mxu0 0.0
  %3224 = vmatpush1.msra.mxu0 0.0
  %3225 = vmatprep.subr.mxu0 0.0
  %3226 = vmatpush1.msra.mxu0 0.0
  %3227 = vmatprep.subr.mxu0 0.0
  %3228 = vmatpush1.msra.mxu0 0.0
  %3229 = vmatprep.subr.mxu0 0.0
  %3230 = vmatpush1.msra.mxu0 0.0
  %3231 = vmatprep.subr.mxu0 0.0
  %3232 = vmatpush1.msra.mxu0 0.0
  %3233 = vmatprep.subr.mxu0 0.0
  %3234 = vmatpush1.msra.mxu0 0.0
  %3235 = vmatprep.subr.mxu0 0.0
  %3236 = vmatpush1.msra.mxu0 0.0
  %3237 = vmatprep.subr.mxu0 0.0
  %3238 = vmatpush1.msra.mxu0 0.0
  %3239 = vmatprep.subr.mxu0 0.0
  %3240 = vmatpush1.msra.mxu0 0.0
  %3241 = vmatprep.subr.mxu0 0.0
  %3242 = vmatpush1.msra.mxu0 0.0
  %3243 = vmatprep.subr.mxu0 0.0
  %3244 = vmatpush1.msra.mxu0 0.0
  %3245 = vmatprep.subr.mxu0 0.0
  %3246 = vmatpush1.msra.mxu0 0.0
  %3247 = vmatprep.subr.mxu0 0.0
  %3248 = vmatpush1.msra.mxu0 0.0
  %3249 = vmatprep.subr.mxu0 0.0
  %3250 = vmatpush1.msra.mxu0 0.0
  %3251 = vmatprep.subr.mxu0 0.0
  %3252 = vmatpush1.msra.mxu0 0.0
  %3253 = vmatprep.subr.mxu0 0.0
  %3254 = vmatpush1.msra.mxu0 0.0
  %3255 = vmatprep.subr.mxu0 0.0
  %3256 = vmatpush1.msra.mxu0 0.0
  %3257 = vmatprep.subr.mxu0 0.0
  %3258 = vmatpush1.msra.mxu0 0.0
  %3259 = vmatprep.subr.mxu0 0.0
  %3260 = vmatpush1.msra.mxu0 0.0
  %3261 = vmatprep.subr.mxu0 0.0
  %3262 = vmatpush1.msra.mxu0 0.0
  %3263 = vmatprep.subr.mxu0 0.0
  %3264 = vmatpush1.msra.mxu0 0.0
  %3265 = vmatprep.subr.mxu0 0.0
  %3266 = vmatpush1.msra.mxu0 0.0
  %3267 = vmatprep.mubr.f32.mxu0 0.0
  %3268 = vmatmul.mubr.f32.gmra.mrb[0].mxu0 %v3201
  %v3269 = vpop.f32.mrb[0].mxu0
  %v3270 = vadd.f32 %v3199, %v3269
  %v3271 = vpop.f32.mrb[0].mxu0
  %v3272 = vadd.f32 %v3199, %v3271
  %3273 = vdwg.mxu0
  %3274 = vmatprep.subr.mxu0 %v3184
  %3275 = vmatpush1.msra.mxu0 %v3183
  %3276 = vmatprep.subr.mxu0 %v3188
  %3277 = vmatpush1.msra.mxu0 %v3187
  %3278 = vmatprep.subr.mxu0 0.0
  %3279 = vmatpush1.msra.mxu0 0.0
  %3280 = vmatprep.subr.mxu0 0.0
  %3281 = vmatpush1.msra.mxu0 0.0
  %3282 = vmatprep.subr.mxu0 0.0
  %3283 = vmatpush1.msra.mxu0 0.0
  %3284 = vmatprep.subr.mxu0 0.0
  %3285 = vmatpush1.msra.mxu0 0.0
  %3286 = vmatprep.subr.mxu0 0.0
  %3287 = vmatpush1.msra.mxu0 0.0
  %3288 = vmatprep.subr.mxu0 0.0
  %3289 = vmatpush1.msra.mxu0 0.0
  %3290 = vmatprep.subr.mxu0 0.0
  %3291 = vmatpush1.msra.mxu0 0.0
  %3292 = vmatprep.subr.mxu0 0.0
  %3293 = vmatpush1.msra.mxu0 0.0
  %3294 = vmatprep.subr.mxu0 0.0
  %3295 = vmatpush1.msra.mxu0 0.0
  %3296 = vmatprep.subr.mxu0 0.0
  %3297 = vmatpush1.msra.mxu0 0.0
  %3298 = vmatprep.subr.mxu0 0.0
  %3299 = vmatpush1.msra.mxu0 0.0
  %3300 = vmatprep.subr.mxu0 0.0
  %3301 = vmatpush1.msra.mxu0 0.0
  %3302 = vmatprep.subr.mxu0 0.0
  %3303 = vmatpush1.msra.mxu0 0.0
  %3304 = vmatprep.subr.mxu0 0.0
  %3305 = vmatpush1.msra.mxu0 0.0
  %3306 = vmatprep.subr.mxu0 0.0
  %3307 = vmatpush1.msra.mxu0 0.0
  %3308 = vmatprep.subr.mxu0 0.0
  %3309 = vmatpush1.msra.mxu0 0.0
  %3310 = vmatprep.subr.mxu0 0.0
  %3311 = vmatpush1.msra.mxu0 0.0
  %3312 = vmatprep.subr.mxu0 0.0
  %3313 = vmatpush1.msra.mxu0 0.0
  %3314 = vmatprep.subr.mxu0 0.0
  %3315 = vmatpush1.msra.mxu0 0.0
  %3316 = vmatprep.subr.mxu0 0.0
  %3317 = vmatpush1.msra.mxu0 0.0
  %3318 = vmatprep.subr.mxu0 0.0
  %3319 = vmatpush1.msra.mxu0 0.0
  %3320 = vmatprep.subr.mxu0 0.0
  %3321 = vmatpush1.msra.mxu0 0.0
  %3322 = vmatprep.subr.mxu0 0.0
  %3323 = vmatpush1.msra.mxu0 0.0
  %3324 = vmatprep.subr.mxu0 0.0
  %3325 = vmatpush1.msra.mxu0 0.0
  %3326 = vmatprep.subr.mxu0 0.0
  %3327 = vmatpush1.msra.mxu0 0.0
  %3328 = vmatprep.subr.mxu0 0.0
  %3329 = vmatpush1.msra.mxu0 0.0
  %3330 = vmatprep.subr.mxu0 0.0
  %3331 = vmatpush1.msra.mxu0 0.0
  %3332 = vmatprep.subr.mxu0 0.0
  %3333 = vmatpush1.msra.mxu0 0.0
  %3334 = vmatprep.subr.mxu0 0.0
  %3335 = vmatpush1.msra.mxu0 0.0
  %3336 = vmatprep.subr.mxu0 0.0
  %3337 = vmatpush1.msra.mxu0 0.0
  %3338 = vmatprep.mubr.f32.mxu0 0.0
  %3339 = vmatmul.mubr.f32.gmra.mrb[0].mxu0 %v3201
  %v3340 = vpop.f32.mrb[0].mxu0
  %v3341 = vadd.f32 %v3199, %v3340
  %v3342 = vpop.f32.mrb[0].mxu0
  %v3343 = vadd.f32 %v3199, %v3342
  %3344 = vdwg.mxu0
  %v3349 = vcombine.low %v3270, %v3272
  %v3350 = vcombine.low %v3341, %v3343
  %v3352 = vunpack.c.l.s4 1966171168
  %v3353 = vunpack.c.0.s8 %v3352
  %v3354 = vlaneseq
  %v3355 = vshrl.u32 %v3354, 7
  %v3356 = vsub.s32 %v3353, %v3355
  %v3357 = vrot.slane %v3349, %v3356
  %v3359 = vunpack.c.l.s4 1966171168
  %v3360 = vunpack.c.0.s8 %v3359
  %v3361 = vlaneseq
  %v3362 = vshrl.u32 %v3361, 7
  %v3363 = vsub.s32 %v3360, %v3362
  %v3364 = vrot.slane %v3350, %v3363
  %v3365 = vcombine.low %v3357, %v3364
  %v3367 = vunpack.c.l.s4 1966171168
  %v3368 = vunpack.c.0.s8 %v3367
  %v3369 = vlaneseq
  %v3370 = vshrl.u32 %v3369, 7
  %v3371 = vsub.s32 %v3368, %v3370
  %v3372 = vrot.slane %v3365, %v3371
  %v3374 = vlaneseq
  %vm3375 = vcmp.ge.s32.totalorder %v3374, 0
  %vm3376 = vcmp.lt.s32.totalorder %v3374, 512
  %vm3377 = vmand %vm3375, %vm3376
  %3378 = vst.msk [vmem:[%s23] sm:$0xf] %vm3377, %v3372
  // Predicated region
  $region94: #{resnet6_forward.1} parent=0 // pred_check
    _
  $region95: #{resnet6_forward.1} parent=0 // pred_check_branch
    %3380 = sbr.rel (0) target = $region97
  $region96: #{resnet6_forward.1} parent=0 // pred_region
    _
  $region97: #{resnet6_forward.1} parent=0 // pred_fallthru
    _
  // Predicated region
  $region98: #{resnet6_forward.1} parent=0 // pred_check
    _
  $region99: #{resnet6_forward.1} parent=0 // pred_check_branch
    %3382 = sbr.rel (0) target = $region101
  $region100: #{resnet6_forward.1} parent=0 // pred_region
    _
  $region101: #{resnet6_forward.1} parent=0 // pred_fallthru
    _

</llo_original>
